<compile_context>
chip_gen: v7x
topology: tpu7x:2x2x1
jax: 0.10.0
libtpu: 0.0.40
codegen_flags: <defaults>
</compile_context>

<pallas_src>
import math

import jax
import jax.numpy as jnp
from jax.experimental import pallas as pl
from jax.experimental.pallas import tpu as pltpu

FEATURES = 32
UNITS = (16, 32)
NLAYER = 2
MU = 0.1
NU = 10.0
BATCH = 8

MU_L = MU ** (1.0 / NLAYER)
NU_L = NU ** (1.0 / NLAYER)


def _round_up(a, m):
    return ((a + m - 1) // m) * m


def _cdiv(a, b):
    return -(-a // b)


# ------------- Cayley transform (parameter-setup glue, plain JAX) -----------
def cayley(W):
    cout, cin = W.shape
    if cin > cout:
        return cayley(W.T).T
    U = W[:cin, :]
    V = W[cin:, :]
    I = jnp.eye(cin, dtype=W.dtype)
    A = U - U.T + V.T @ V
    iIpA = jnp.linalg.inv(I + A)
    return jnp.concatenate([iIpA @ (I - A), -2.0 * V @ iIpA], axis=0)


def _rehu(x, d=1.0):
    # ReHU(d): 0 for x<=0 ; x^2/(2d) for 0<x<d ; x - d/2 for x>=d
    return jnp.where(x <= 0.0, 0.0, jnp.where(x < d, 0.5 * x * x / d, x - 0.5 * d))


# ------------- fused BiLipNet kernel -----------------------------------------
def make_fused_kernel(units, nlayer, mu_l, nu_l, use_bf16):
    """One kernel for the full forward (Cayley -> MonLip -> ... -> Cayley).

    All weights live in a single stacked (n_mats, S, S) VMEM ref; all biases
    in a single (n_bias, 1, S) ref.  Slabs are already block-diagonal per
    batch-pack group and constant-folded (sqrt_gam / sqrt2 / 0.5 factors), so
    the body is only MXU dots, the ReHU selects and residual adds."""
    c_res = 0.5 * (mu_l + nu_l)

    def kernel(x_ref, w_ref, b_ref, o_ref):
        x = x_ref[...].astype(jnp.float32)                 # (bt, S)
        state = {"wi": 0, "bi": 0}

        def dot(a, idx=None):
            if idx is None:
                idx = state["wi"]
                state["wi"] += 1
            w = w_ref[idx]                                  # static (S, S) slab
            if use_bf16:
                a = a.astype(jnp.bfloat16)
            return jnp.dot(a, w, preferred_element_type=jnp.float32)

        def bias():
            idx = state["bi"]
            state["bi"] += 1
            return b_ref[idx].astype(jnp.float32)           # (1, S)

        for _layer in range(nlayer):
            # --- CayleyLinear: y = x @ Q.T + b -------------------------------
            x = dot(x) + bias()

            # --- MonLipLayer (split-weight, block-diagonal form) -------------
            y = c_res * x                                   # residual term
            hk_1 = None
            qo_prev = None
            for k, _nz in enumerate(units):
                xk = dot(x)                                 # sqrt_gam*Q_k.T
                z = dot(xk)                                 # sqrt2*R_k[:, :nz].T
                if k > 0:
                    z = z + dot(hk_1)                       # sqrt2*R_k[:, nz:].T
                z = z + bias()                              # b_k
                a = _rehu(z)
                gh_l = dot(a)                               # sqrt2*R_k[:, :nz]
                if k > 0:
                    gh_r = dot(a)                           # sqrt2*R_k[:, nz:]
                    # yh block of width units[k-1], contracted with its Q block
                    y = y + dot(hk_1 - gh_r, qo_prev)
                hk_1 = gh_l - xk
                qo_prev = state["wi"]                       # 0.5*sqrt_gam*Q_k
                state["wi"] += 1                            # (consumed later)
            # final yh block: hk_1 with the last unit's Q block
            y = y + dot(hk_1, qo_prev)
            x = y + bias()                                  # by

        # --- final CayleyLinear ---------------------------------------------
        x = dot(x) + bias()

        # Guard against packing/consumption order drift (trace-time check).
        assert state["wi"] == w_ref.shape[0], (state["wi"], w_ref.shape)
        assert state["bi"] == b_ref.shape[0], (state["bi"], b_ref.shape)
        o_ref[...] = x.astype(o_ref.dtype)

    return kernel


def make_bilipnet(units, nlayer, mu_l, nu_l, P, use_bf16=False,
                  max_rows_per_tile=4096):
    kernel = make_fused_kernel(units, nlayer, mu_l, nu_l, use_bf16)
    max_bt = max(8, max_rows_per_tile // P)                 # packed-row cap

    @jax.jit
    def apply(x, w_stack, b_stack):
        B, F = x.shape
        S = F * P
        Bp = _cdiv(B, P)                                    # packed rows
        # Capped cdiv tile; aim for >=2 grid steps so v7x's 2nd TC has work.
        bt = max(8, min(max_bt, _round_up(_cdiv(Bp, 2), 8)))
        Bp_pad = _round_up(Bp, bt)
        rows_pad = Bp_pad * P
        xp = x
        if rows_pad != B:                                   # zero-pad the tail
            xp = jnp.pad(x, ((0, rows_pad - B), (0, 0)))
        xp = xp.reshape(Bp_pad, S)                          # free reshape
        grid = (Bp_pad // bt,)

        try:
            cost = pl.CostEstimate(
                flops=2 * Bp_pad * int(w_stack.shape[0]) * S * S,
                transcendentals=0,
                bytes_accessed=int(xp.size * 4 + Bp_pad * S * 4
                                   + w_stack.size * w_stack.dtype.itemsize
                                   + b_stack.size * 4))
        except Exception:                                   # advisory only
            cost = None

        out = pl.pallas_call(
            kernel,
            out_shape=jax.ShapeDtypeStruct((Bp_pad, S), jnp.float32),
            grid=grid,
            in_specs=[
                pl.BlockSpec((bt, S), lambda i: (i, 0)),
                # Constant block index -> weights/biases DMA'd once and stay
                # VMEM-resident across all batch tiles.
                pl.BlockSpec(w_stack.shape, lambda i: (0, 0, 0)),
                pl.BlockSpec(b_stack.shape, lambda i: (0, 0, 0)),
            ],
            out_specs=pl.BlockSpec((bt, S), lambda i: (i, 0)),
            compiler_params=pltpu.CompilerParams(
                dimension_semantics=("parallel",)),
            cost_estimate=cost,
        )(xp, w_stack, b_stack)
        return out.reshape(rows_pad, F)[:B]

    return apply


# ------------- deterministic parameter init (mirrors module __init__) --------
def init_params(key, features, units, nlayer):
    params = {"orth": [], "mon": []}

    # CayleyLinear layers (nlayer + 1 of them)
    std = 1.0 / math.sqrt(features)
    for _ in range(nlayer + 1):
        key, k1, k2 = jax.random.split(key, 3)
        W = jax.random.uniform(k1, (features, features), jnp.float32, -std, std)
        b = jax.random.uniform(k2, (features,), jnp.float32, -std, std)
        alpha = jnp.linalg.norm(W)                          # alpha init = ||W||
        Q = cayley(alpha * W / jnp.linalg.norm(W))
        params["orth"].append({"Qt": Q.T, "b": b.reshape(1, features)})

    # MonLipLayers (nlayer of them)
    usum = sum(units)
    for _ in range(nlayer):
        key, kq = jax.random.split(key)
        std_q = math.sqrt(2.0 / (usum + features))          # xavier_normal
        Fq = std_q * jax.random.normal(kq, (usum, features), jnp.float32)
        fq = jnp.linalg.norm(Fq)                            # fq init = ||Fq||
        Q = cayley(fq * Fq / jnp.linalg.norm(Fq))
        Rs, bs = [], []
        nz_1 = 0
        for nz in units:
            key, kr = jax.random.split(key)
            std_r = math.sqrt(2.0 / (nz + nz + nz_1))       # xavier_normal
            Fr = std_r * jax.random.normal(kr, (nz, nz + nz_1), jnp.float32)
            fr = jnp.linalg.norm(Fr)
            Rs.append(cayley(fr * Fr / jnp.linalg.norm(Fr)))
            bs.append(jnp.zeros((1, nz), jnp.float32))
            nz_1 = nz
        params["mon"].append(
            {"Q": Q, "R": Rs, "b": bs, "by": jnp.zeros((1, features), jnp.float32)}
        )
    return params


def pack_weights(params, units, nlayer, mu_l, nu_l, features, P,
                 weight_dtype=jnp.float32):
    """One-time packing (outside the hot path):
      * split / transpose / constant-fold every weight,
      * replicate it P-fold along a block diagonal (kron(I_P, W)),
      * zero-pad to a uniform (S, S) slab with S = features*P,
      * stack all slabs into ONE (n_mats, S, S) array and all biases into
        ONE (n_bias, 1, S) array, in exactly the order the kernel consumes."""
    assert max(units) <= features, "block-diag packing assumes nz <= features"
    sqrt_gam = math.sqrt(nu_l - mu_l)
    sqrt2 = math.sqrt(2.0)
    S = features * P
    eyeP = jnp.eye(P, dtype=jnp.float32)

    def slab(W):
        A, C = W.shape
        bd = jnp.kron(eyeP, W.astype(jnp.float32))          # (A*P, C*P) blockdiag
        return jnp.zeros((S, S), jnp.float32).at[:A * P, :C * P].set(bd)

    def brow(b):
        b = b.reshape(-1).astype(jnp.float32)
        t = jnp.tile(b, P)                                  # (len*P,)
        return jnp.zeros((S,), jnp.float32).at[: t.shape[0]].set(t)

    mats, biases = [], []
    for layer in range(nlayer):
        o = params["orth"][layer]
        mats.append(slab(o["Qt"]))                          # Qt   (F, F)
        biases.append(brow(o["b"]))                         # b    (F,)
        m = params["mon"][layer]
        Q = m["Q"]                                          # (sum(units), F)
        off = 0
        for k, nz in enumerate(units):
            Qk = Q[off:off + nz, :]                         # (nz, F)
            R = m["R"][k]                                   # (nz, nz + nz_1)
            mats.append(slab(sqrt_gam * Qk.T))              # QtG_k (F, nz)
            mats.append(slab(sqrt2 * R[:, :nz].T))          # RtX_k (nz, nz)
            if k > 0:
                mats.append(slab(sqrt2 * R[:, nz:].T))      # RtH_k (nz_1, nz)
            biases.append(brow(m["b"][k]))                  # b_k   (nz,)
            mats.append(slab(sqrt2 * R[:, :nz]))            # RL_k  (nz, nz)
            if k > 0:
                mats.append(slab(sqrt2 * R[:, nz:]))        # RR_k  (nz, nz_1)
            mats.append(slab(0.5 * sqrt_gam * Qk))          # Qo_k  (nz, F)
            off += nz
        biases.append(brow(m["by"]))                        # by    (F,)
    o = params["orth"][nlayer]
    mats.append(slab(o["Qt"]))
    biases.append(brow(o["b"]))

    w_stack = jnp.stack(mats).astype(weight_dtype)          # (n_mats, S, S)
    b_stack = jnp.stack(biases).reshape(len(biases), 1, S)  # (n_bias, 1, S) f32
    return w_stack, b_stack


# ------------- pure-JAX reference (mirrors the PyTorch forward exactly) ------
def bilipnet_reference(x, params, units, nlayer, mu_l, nu_l):
    sqrt_gam = math.sqrt(nu_l - mu_l)
    sqrt2 = math.sqrt(2.0)

    def monlip(x, layer):
        Q = layer["Q"]
        xh = sqrt_gam * x @ Q.T
        yh_parts = []
        hk_1 = x[:, :0]
        idx = 0
        for k, nz in enumerate(units):
            R = layer["R"][k]
            xk = xh[:, idx:idx + nz]
            inp = jnp.concatenate([xk, hk_1], axis=-1)
            gh = sqrt2 * _rehu(sqrt2 * inp @ R.T + layer["b"][k]) @ R
            hk = gh[:, :nz] - xk
            yh_parts.append(hk_1 - gh[:, nz:])
            idx += nz
            hk_1 = hk
        yh_parts.append(hk_1)
        yh = jnp.concatenate(yh_parts, axis=-1)
        return 0.5 * ((mu_l + nu_l) * x + sqrt_gam * yh @ Q) + layer["by"]

    for k in range(nlayer):
        o = params["orth"][k]
        x = x @ o["Qt"] + o["b"]
        x = monlip(x, params["mon"][k])
    o = params["orth"][nlayer]
    return x @ o["Qt"] + o["b"]


if __name__ == "__main__":
    key = jax.random.PRNGKey(0)
    key, kx = jax.random.split(key)
    params = init_params(key, FEATURES, UNITS, NLAYER)

    # Packing factor: dot widths <=128 on v5e (128x128 MXU), 256 on v6e/v7x.
    try:
        kind = jax.devices()[0].device_kind.lower()
    except Exception:
        kind = ""
    P = 4 if ("v5 lite" in kind or "v5e" in kind or "v5litepod" in kind) else 8

    x = jax.random.normal(kx, (BATCH, FEATURES), jnp.float32)
    y_ref = bilipnet_reference(x, params, UNITS, NLAYER, MU_L, NU_L)

    # --- f32 path (strict correctness check at the small test batch) ---------
    w32, b32 = pack_weights(params, UNITS, NLAYER, MU_L, NU_L, FEATURES, P,
                            weight_dtype=jnp.float32)
    apply_f32 = make_bilipnet(UNITS, NLAYER, MU_L, NU_L, P, use_bf16=False)
    y = jax.block_until_ready(apply_f32(x, w32, b32))
    assert y.shape == (BATCH, FEATURES)
    assert jnp.allclose(y, y_ref, rtol=2e-3, atol=2e-3), float(
        jnp.max(jnp.abs(y - y_ref)))

    # --- larger batch: exercises capped cdiv tiling, >=2 grid steps, tail pad -
    key, kx2 = jax.random.split(key)
    xb = jax.random.normal(kx2, (5000, FEATURES), jnp.float32)
    yb = jax.block_until_ready(apply_f32(xb, w32, b32))
    yb_ref = bilipnet_reference(xb, params, UNITS, NLAYER, MU_L, NU_L)
    assert jnp.allclose(yb, yb_ref, rtol=2e-2, atol=2e-2), float(
        jnp.max(jnp.abs(yb - yb_ref)))

    # --- bf16 weights / activations, f32 accumulation (throughput path) ------
    # Loose sanity check only: bf16 operand rounding accumulates over ~14 dots.
    wbf, bbf = pack_weights(params, UNITS, NLAYER, MU_L, NU_L, FEATURES, P,
                            weight_dtype=jnp.bfloat16)
    apply_bf16 = make_bilipnet(UNITS, NLAYER, MU_L, NU_L, P, use_bf16=True)
    ybf = jax.block_until_ready(apply_bf16(x, wbf, bbf))
    scale = float(jnp.max(jnp.abs(y_ref)))
    err = float(jnp.max(jnp.abs(ybf - y_ref)))
    assert err <= 0.1 * scale + 0.1, (err, scale)

    print("KERNEL_OK")
</pallas_src>

<mosaic_0001>
module attributes {stable_mosaic.version = 11 : i64} {
  func.func @kernel(%arg0: i32, %arg1: memref<8x256xf32, #tpu.memory_space<vmem>>, %arg2: memref<23x256x256xf32, #tpu.memory_space<vmem>>, %arg3: memref<9x1x256xf32, #tpu.memory_space<vmem>>, %arg4: memref<8x256xf32, #tpu.memory_space<vmem>>) attributes {dimension_semantics = [#tpu.dimension_semantics<parallel>], iteration_bounds = array<i64: 1>, scalar_prefetch = 0 : i64, scratch_operands = 0 : i64, tpu.core_type = #tpu.core_type<tc>, window_params = [{transform_indices = @transform_0, window_bounds = array<i64: 8, 256>}, {pipeline_mode = #tpu.pipeline_mode<synchronous>, transform_indices = @transform_1, window_bounds = array<i64: 23, 256, 256>}, {pipeline_mode = #tpu.pipeline_mode<synchronous>, transform_indices = @transform_2, window_bounds = array<i64: 9, 1, 256>}, {transform_indices = @transform_3, window_bounds = array<i64: 8, 256>}]} {
    %c0 = arith.constant 0 : index
    %c0_0 = arith.constant 0 : index
    %0 = vector.load %arg1[%c0, %c0_0] : memref<8x256xf32, #tpu.memory_space<vmem>>, vector<8x256xf32>
    %c0_1 = arith.constant 0 : index
    %c0_2 = arith.constant 0 : index
    %c0_3 = arith.constant 0 : index
    %1 = vector.load %arg2[%c0_1, %c0_2, %c0_3] : memref<23x256x256xf32, #tpu.memory_space<vmem>>, vector<1x256x256xf32>
    %2 = vector.shape_cast %1 : vector<1x256x256xf32> to vector<256x256xf32>
    %cst = arith.constant dense<0.000000e+00> : vector<8x256xf32>
    %3 = tpu.matmul %0, %2, %cst {dimension_numbers = #tpu.dot_dimension_numbers<[1], [0], [0], [1], [0, 0, 1, 1], [], []>} : vector<8x256xf32>, vector<256x256xf32>, vector<8x256xf32> -> vector<8x256xf32>
    %c0_4 = arith.constant 0 : index
    %c0_5 = arith.constant 0 : index
    %c0_6 = arith.constant 0 : index
    %4 = vector.load %arg3[%c0_4, %c0_5, %c0_6] : memref<9x1x256xf32, #tpu.memory_space<vmem>>, vector<1x1x256xf32>
    %5 = vector.shape_cast %4 : vector<1x1x256xf32> to vector<1x256xf32>
    %6 = vector.broadcast %5 : vector<1x256xf32> to vector<8x256xf32>
    %7 = arith.addf %3, %6 : vector<8x256xf32>
    %cst_7 = arith.constant 1.73925269 : f32
    %8 = vector.broadcast %cst_7 : f32 to vector<8x256xf32>
    %9 = arith.mulf %8, %7 : vector<8x256xf32>
    %c1 = arith.constant 1 : index
    %c0_8 = arith.constant 0 : index
    %c0_9 = arith.constant 0 : index
    %10 = vector.load %arg2[%c1, %c0_8, %c0_9] : memref<23x256x256xf32, #tpu.memory_space<vmem>>, vector<1x256x256xf32>
    %11 = vector.shape_cast %10 : vector<1x256x256xf32> to vector<256x256xf32>
    %cst_10 = arith.constant dense<0.000000e+00> : vector<8x256xf32>
    %12 = tpu.matmul %7, %11, %cst_10 {dimension_numbers = #tpu.dot_dimension_numbers<[1], [0], [0], [1], [0, 0, 1, 1], [], []>} : vector<8x256xf32>, vector<256x256xf32>, vector<8x256xf32> -> vector<8x256xf32>
    %c2 = arith.constant 2 : index
    %c0_11 = arith.constant 0 : index
    %c0_12 = arith.constant 0 : index
    %13 = vector.load %arg2[%c2, %c0_11, %c0_12] : memref<23x256x256xf32, #tpu.memory_space<vmem>>, vector<1x256x256xf32>
    %14 = vector.shape_cast %13 : vector<1x256x256xf32> to vector<256x256xf32>
    %cst_13 = arith.constant dense<0.000000e+00> : vector<8x256xf32>
    %15 = tpu.matmul %12, %14, %cst_13 {dimension_numbers = #tpu.dot_dimension_numbers<[1], [0], [0], [1], [0, 0, 1, 1], [], []>} : vector<8x256xf32>, vector<256x256xf32>, vector<8x256xf32> -> vector<8x256xf32>
    %c1_14 = arith.constant 1 : index
    %c0_15 = arith.constant 0 : index
    %c0_16 = arith.constant 0 : index
    %16 = vector.load %arg3[%c1_14, %c0_15, %c0_16] : memref<9x1x256xf32, #tpu.memory_space<vmem>>, vector<1x1x256xf32>
    %17 = vector.shape_cast %16 : vector<1x1x256xf32> to vector<1x256xf32>
    %18 = vector.broadcast %17 : vector<1x256xf32> to vector<8x256xf32>
    %19 = arith.addf %15, %18 : vector<8x256xf32>
    %cst_17 = arith.constant 0.000000e+00 : f32
    %20 = vector.broadcast %cst_17 : f32 to vector<8x256xf32>
    %21 = arith.cmpf ole, %19, %20 : vector<8x256xf32>
    %cst_18 = arith.constant 1.000000e+00 : f32
    %22 = vector.broadcast %cst_18 : f32 to vector<8x256xf32>
    %23 = arith.cmpf olt, %19, %22 : vector<8x256xf32>
    %cst_19 = arith.constant 5.000000e-01 : f32
    %24 = vector.broadcast %cst_19 : f32 to vector<8x256xf32>
    %25 = arith.mulf %24, %19 : vector<8x256xf32>
    %26 = arith.mulf %25, %19 : vector<8x256xf32>
    %cst_20 = arith.constant 1.000000e+00 : f32
    %27 = vector.broadcast %cst_20 : f32 to vector<8x256xf32>
    %28 = arith.divf %26, %27 : vector<8x256xf32>
    %cst_21 = arith.constant 5.000000e-01 : f32
    %29 = vector.broadcast %cst_21 : f32 to vector<8x256xf32>
    %30 = arith.subf %19, %29 : vector<8x256xf32>
    %31 = arith.select %23, %28, %30 : vector<8x256xi1>, vector<8x256xf32>
    %cst_22 = arith.constant 0.000000e+00 : f32
    %32 = vector.broadcast %cst_22 : f32 to vector<8x256xf32>
    %33 = arith.select %21, %32, %31 : vector<8x256xi1>, vector<8x256xf32>
    %c3 = arith.constant 3 : index
    %c0_23 = arith.constant 0 : index
    %c0_24 = arith.constant 0 : index
    %34 = vector.load %arg2[%c3, %c0_23, %c0_24] : memref<23x256x256xf32, #tpu.memory_space<vmem>>, vector<1x256x256xf32>
    %35 = vector.shape_cast %34 : vector<1x256x256xf32> to vector<256x256xf32>
    %cst_25 = arith.constant dense<0.000000e+00> : vector<8x256xf32>
    %36 = tpu.matmul %33, %35, %cst_25 {dimension_numbers = #tpu.dot_dimension_numbers<[1], [0], [0], [1], [0, 0, 1, 1], [], []>} : vector<8x256xf32>, vector<256x256xf32>, vector<8x256xf32> -> vector<8x256xf32>
    %37 = arith.subf %36, %12 : vector<8x256xf32>
    %c5 = arith.constant 5 : index
    %c0_26 = arith.constant 0 : index
    %c0_27 = arith.constant 0 : index
    %38 = vector.load %arg2[%c5, %c0_26, %c0_27] : memref<23x256x256xf32, #tpu.memory_space<vmem>>, vector<1x256x256xf32>
    %39 = vector.shape_cast %38 : vector<1x256x256xf32> to vector<256x256xf32>
    %cst_28 = arith.constant dense<0.000000e+00> : vector<8x256xf32>
    %40 = tpu.matmul %7, %39, %cst_28 {dimension_numbers = #tpu.dot_dimension_numbers<[1], [0], [0], [1], [0, 0, 1, 1], [], []>} : vector<8x256xf32>, vector<256x256xf32>, vector<8x256xf32> -> vector<8x256xf32>
    %c6 = arith.constant 6 : index
    %c0_29 = arith.constant 0 : index
    %c0_30 = arith.constant 0 : index
    %41 = vector.load %arg2[%c6, %c0_29, %c0_30] : memref<23x256x256xf32, #tpu.memory_space<vmem>>, vector<1x256x256xf32>
    %42 = vector.shape_cast %41 : vector<1x256x256xf32> to vector<256x256xf32>
    %cst_31 = arith.constant dense<0.000000e+00> : vector<8x256xf32>
    %43 = tpu.matmul %40, %42, %cst_31 {dimension_numbers = #tpu.dot_dimension_numbers<[1], [0], [0], [1], [0, 0, 1, 1], [], []>} : vector<8x256xf32>, vector<256x256xf32>, vector<8x256xf32> -> vector<8x256xf32>
    %c7 = arith.constant 7 : index
    %c0_32 = arith.constant 0 : index
    %c0_33 = arith.constant 0 : index
    %44 = vector.load %arg2[%c7, %c0_32, %c0_33] : memref<23x256x256xf32, #tpu.memory_space<vmem>>, vector<1x256x256xf32>
    %45 = vector.shape_cast %44 : vector<1x256x256xf32> to vector<256x256xf32>
    %cst_34 = arith.constant dense<0.000000e+00> : vector<8x256xf32>
    %46 = tpu.matmul %37, %45, %cst_34 {dimension_numbers = #tpu.dot_dimension_numbers<[1], [0], [0], [1], [0, 0, 1, 1], [], []>} : vector<8x256xf32>, vector<256x256xf32>, vector<8x256xf32> -> vector<8x256xf32>
    %47 = arith.addf %43, %46 : vector<8x256xf32>
    %c2_35 = arith.constant 2 : index
    %c0_36 = arith.constant 0 : index
    %c0_37 = arith.constant 0 : index
    %48 = vector.load %arg3[%c2_35, %c0_36, %c0_37] : memref<9x1x256xf32, #tpu.memory_space<vmem>>, vector<1x1x256xf32>
    %49 = vector.shape_cast %48 : vector<1x1x256xf32> to vector<1x256xf32>
    %50 = vector.broadcast %49 : vector<1x256xf32> to vector<8x256xf32>
    %51 = arith.addf %47, %50 : vector<8x256xf32>
    %cst_38 = arith.constant 0.000000e+00 : f32
    %52 = vector.broadcast %cst_38 : f32 to vector<8x256xf32>
    %53 = arith.cmpf ole, %51, %52 : vector<8x256xf32>
    %cst_39 = arith.constant 1.000000e+00 : f32
    %54 = vector.broadcast %cst_39 : f32 to vector<8x256xf32>
    %55 = arith.cmpf olt, %51, %54 : vector<8x256xf32>
    %cst_40 = arith.constant 5.000000e-01 : f32
    %56 = vector.broadcast %cst_40 : f32 to vector<8x256xf32>
    %57 = arith.mulf %56, %51 : vector<8x256xf32>
    %58 = arith.mulf %57, %51 : vector<8x256xf32>
    %cst_41 = arith.constant 1.000000e+00 : f32
    %59 = vector.broadcast %cst_41 : f32 to vector<8x256xf32>
    %60 = arith.divf %58, %59 : vector<8x256xf32>
    %cst_42 = arith.constant 5.000000e-01 : f32
    %61 = vector.broadcast %cst_42 : f32 to vector<8x256xf32>
    %62 = arith.subf %51, %61 : vector<8x256xf32>
    %63 = arith.select %55, %60, %62 : vector<8x256xi1>, vector<8x256xf32>
    %cst_43 = arith.constant 0.000000e+00 : f32
    %64 = vector.broadcast %cst_43 : f32 to vector<8x256xf32>
    %65 = arith.select %53, %64, %63 : vector<8x256xi1>, vector<8x256xf32>
    %c8 = arith.constant 8 : index
    %c0_44 = arith.constant 0 : index
    %c0_45 = arith.constant 0 : index
    %66 = vector.load %arg2[%c8, %c0_44, %c0_45] : memref<23x256x256xf32, #tpu.memory_space<vmem>>, vector<1x256x256xf32>
    %67 = vector.shape_cast %66 : vector<1x256x256xf32> to vector<256x256xf32>
    %cst_46 = arith.constant dense<0.000000e+00> : vector<8x256xf32>
    %68 = tpu.matmul %65, %67, %cst_46 {dimension_numbers = #tpu.dot_dimension_numbers<[1], [0], [0], [1], [0, 0, 1, 1], [], []>} : vector<8x256xf32>, vector<256x256xf32>, vector<8x256xf32> -> vector<8x256xf32>
    %c9 = arith.constant 9 : index
    %c0_47 = arith.constant 0 : index
    %c0_48 = arith.constant 0 : index
    %69 = vector.load %arg2[%c9, %c0_47, %c0_48] : memref<23x256x256xf32, #tpu.memory_space<vmem>>, vector<1x256x256xf32>
    %70 = vector.shape_cast %69 : vector<1x256x256xf32> to vector<256x256xf32>
    %cst_49 = arith.constant dense<0.000000e+00> : vector<8x256xf32>
    %71 = tpu.matmul %65, %70, %cst_49 {dimension_numbers = #tpu.dot_dimension_numbers<[1], [0], [0], [1], [0, 0, 1, 1], [], []>} : vector<8x256xf32>, vector<256x256xf32>, vector<8x256xf32> -> vector<8x256xf32>
    %72 = arith.subf %37, %71 : vector<8x256xf32>
    %c4 = arith.constant 4 : index
    %c0_50 = arith.constant 0 : index
    %c0_51 = arith.constant 0 : index
    %73 = vector.load %arg2[%c4, %c0_50, %c0_51] : memref<23x256x256xf32, #tpu.memory_space<vmem>>, vector<1x256x256xf32>
    %74 = vector.shape_cast %73 : vector<1x256x256xf32> to vector<256x256xf32>
    %cst_52 = arith.constant dense<0.000000e+00> : vector<8x256xf32>
    %75 = tpu.matmul %72, %74, %cst_52 {dimension_numbers = #tpu.dot_dimension_numbers<[1], [0], [0], [1], [0, 0, 1, 1], [], []>} : vector<8x256xf32>, vector<256x256xf32>, vector<8x256xf32> -> vector<8x256xf32>
    %76 = arith.addf %9, %75 : vector<8x256xf32>
    %77 = arith.subf %68, %40 : vector<8x256xf32>
    %c10 = arith.constant 10 : index
    %c0_53 = arith.constant 0 : index
    %c0_54 = arith.constant 0 : index
    %78 = vector.load %arg2[%c10, %c0_53, %c0_54] : memref<23x256x256xf32, #tpu.memory_space<vmem>>, vector<1x256x256xf32>
    %79 = vector.shape_cast %78 : vector<1x256x256xf32> to vector<256x256xf32>
    %cst_55 = arith.constant dense<0.000000e+00> : vector<8x256xf32>
    %80 = tpu.matmul %77, %79, %cst_55 {dimension_numbers = #tpu.dot_dimension_numbers<[1], [0], [0], [1], [0, 0, 1, 1], [], []>} : vector<8x256xf32>, vector<256x256xf32>, vector<8x256xf32> -> vector<8x256xf32>
    %81 = arith.addf %76, %80 : vector<8x256xf32>
    %c3_56 = arith.constant 3 : index
    %c0_57 = arith.constant 0 : index
    %c0_58 = arith.constant 0 : index
    %82 = vector.load %arg3[%c3_56, %c0_57, %c0_58] : memref<9x1x256xf32, #tpu.memory_space<vmem>>, vector<1x1x256xf32>
    %83 = vector.shape_cast %82 : vector<1x1x256xf32> to vector<1x256xf32>
    %84 = vector.broadcast %83 : vector<1x256xf32> to vector<8x256xf32>
    %85 = arith.addf %81, %84 : vector<8x256xf32>
    %c11 = arith.constant 11 : index
    %c0_59 = arith.constant 0 : index
    %c0_60 = arith.constant 0 : index
    %86 = vector.load %arg2[%c11, %c0_59, %c0_60] : memref<23x256x256xf32, #tpu.memory_space<vmem>>, vector<1x256x256xf32>
    %87 = vector.shape_cast %86 : vector<1x256x256xf32> to vector<256x256xf32>
    %cst_61 = arith.constant dense<0.000000e+00> : vector<8x256xf32>
    %88 = tpu.matmul %85, %87, %cst_61 {dimension_numbers = #tpu.dot_dimension_numbers<[1], [0], [0], [1], [0, 0, 1, 1], [], []>} : vector<8x256xf32>, vector<256x256xf32>, vector<8x256xf32> -> vector<8x256xf32>
    %c4_62 = arith.constant 4 : index
    %c0_63 = arith.constant 0 : index
    %c0_64 = arith.constant 0 : index
    %89 = vector.load %arg3[%c4_62, %c0_63, %c0_64] : memref<9x1x256xf32, #tpu.memory_space<vmem>>, vector<1x1x256xf32>
    %90 = vector.shape_cast %89 : vector<1x1x256xf32> to vector<1x256xf32>
    %91 = vector.broadcast %90 : vector<1x256xf32> to vector<8x256xf32>
    %92 = arith.addf %88, %91 : vector<8x256xf32>
    %cst_65 = arith.constant 1.73925269 : f32
    %93 = vector.broadcast %cst_65 : f32 to vector<8x256xf32>
    %94 = arith.mulf %93, %92 : vector<8x256xf32>
    %c12 = arith.constant 12 : index
    %c0_66 = arith.constant 0 : index
    %c0_67 = arith.constant 0 : index
    %95 = vector.load %arg2[%c12, %c0_66, %c0_67] : memref<23x256x256xf32, #tpu.memory_space<vmem>>, vector<1x256x256xf32>
    %96 = vector.shape_cast %95 : vector<1x256x256xf32> to vector<256x256xf32>
    %cst_68 = arith.constant dense<0.000000e+00> : vector<8x256xf32>
    %97 = tpu.matmul %92, %96, %cst_68 {dimension_numbers = #tpu.dot_dimension_numbers<[1], [0], [0], [1], [0, 0, 1, 1], [], []>} : vector<8x256xf32>, vector<256x256xf32>, vector<8x256xf32> -> vector<8x256xf32>
    %c13 = arith.constant 13 : index
    %c0_69 = arith.constant 0 : index
    %c0_70 = arith.constant 0 : index
    %98 = vector.load %arg2[%c13, %c0_69, %c0_70] : memref<23x256x256xf32, #tpu.memory_space<vmem>>, vector<1x256x256xf32>
    %99 = vector.shape_cast %98 : vector<1x256x256xf32> to vector<256x256xf32>
    %cst_71 = arith.constant dense<0.000000e+00> : vector<8x256xf32>
    %100 = tpu.matmul %97, %99, %cst_71 {dimension_numbers = #tpu.dot_dimension_numbers<[1], [0], [0], [1], [0, 0, 1, 1], [], []>} : vector<8x256xf32>, vector<256x256xf32>, vector<8x256xf32> -> vector<8x256xf32>
    %c5_72 = arith.constant 5 : index
    %c0_73 = arith.constant 0 : index
    %c0_74 = arith.constant 0 : index
    %101 = vector.load %arg3[%c5_72, %c0_73, %c0_74] : memref<9x1x256xf32, #tpu.memory_space<vmem>>, vector<1x1x256xf32>
    %102 = vector.shape_cast %101 : vector<1x1x256xf32> to vector<1x256xf32>
    %103 = vector.broadcast %102 : vector<1x256xf32> to vector<8x256xf32>
    %104 = arith.addf %100, %103 : vector<8x256xf32>
    %cst_75 = arith.constant 0.000000e+00 : f32
    %105 = vector.broadcast %cst_75 : f32 to vector<8x256xf32>
    %106 = arith.cmpf ole, %104, %105 : vector<8x256xf32>
    %cst_76 = arith.constant 1.000000e+00 : f32
    %107 = vector.broadcast %cst_76 : f32 to vector<8x256xf32>
    %108 = arith.cmpf olt, %104, %107 : vector<8x256xf32>
    %cst_77 = arith.constant 5.000000e-01 : f32
    %109 = vector.broadcast %cst_77 : f32 to vector<8x256xf32>
    %110 = arith.mulf %109, %104 : vector<8x256xf32>
    %111 = arith.mulf %110, %104 : vector<8x256xf32>
    %cst_78 = arith.constant 1.000000e+00 : f32
    %112 = vector.broadcast %cst_78 : f32 to vector<8x256xf32>
    %113 = arith.divf %111, %112 : vector<8x256xf32>
    %cst_79 = arith.constant 5.000000e-01 : f32
    %114 = vector.broadcast %cst_79 : f32 to vector<8x256xf32>
    %115 = arith.subf %104, %114 : vector<8x256xf32>
    %116 = arith.select %108, %113, %115 : vector<8x256xi1>, vector<8x256xf32>
    %cst_80 = arith.constant 0.000000e+00 : f32
    %117 = vector.broadcast %cst_80 : f32 to vector<8x256xf32>
    %118 = arith.select %106, %117, %116 : vector<8x256xi1>, vector<8x256xf32>
    %c14 = arith.constant 14 : index
    %c0_81 = arith.constant 0 : index
    %c0_82 = arith.constant 0 : index
    %119 = vector.load %arg2[%c14, %c0_81, %c0_82] : memref<23x256x256xf32, #tpu.memory_space<vmem>>, vector<1x256x256xf32>
    %120 = vector.shape_cast %119 : vector<1x256x256xf32> to vector<256x256xf32>
    %cst_83 = arith.constant dense<0.000000e+00> : vector<8x256xf32>
    %121 = tpu.matmul %118, %120, %cst_83 {dimension_numbers = #tpu.dot_dimension_numbers<[1], [0], [0], [1], [0, 0, 1, 1], [], []>} : vector<8x256xf32>, vector<256x256xf32>, vector<8x256xf32> -> vector<8x256xf32>
    %122 = arith.subf %121, %97 : vector<8x256xf32>
    %c16 = arith.constant 16 : index
    %c0_84 = arith.constant 0 : index
    %c0_85 = arith.constant 0 : index
    %123 = vector.load %arg2[%c16, %c0_84, %c0_85] : memref<23x256x256xf32, #tpu.memory_space<vmem>>, vector<1x256x256xf32>
    %124 = vector.shape_cast %123 : vector<1x256x256xf32> to vector<256x256xf32>
    %cst_86 = arith.constant dense<0.000000e+00> : vector<8x256xf32>
    %125 = tpu.matmul %92, %124, %cst_86 {dimension_numbers = #tpu.dot_dimension_numbers<[1], [0], [0], [1], [0, 0, 1, 1], [], []>} : vector<8x256xf32>, vector<256x256xf32>, vector<8x256xf32> -> vector<8x256xf32>
    %c17 = arith.constant 17 : index
    %c0_87 = arith.constant 0 : index
    %c0_88 = arith.constant 0 : index
    %126 = vector.load %arg2[%c17, %c0_87, %c0_88] : memref<23x256x256xf32, #tpu.memory_space<vmem>>, vector<1x256x256xf32>
    %127 = vector.shape_cast %126 : vector<1x256x256xf32> to vector<256x256xf32>
    %cst_89 = arith.constant dense<0.000000e+00> : vector<8x256xf32>
    %128 = tpu.matmul %125, %127, %cst_89 {dimension_numbers = #tpu.dot_dimension_numbers<[1], [0], [0], [1], [0, 0, 1, 1], [], []>} : vector<8x256xf32>, vector<256x256xf32>, vector<8x256xf32> -> vector<8x256xf32>
    %c18 = arith.constant 18 : index
    %c0_90 = arith.constant 0 : index
    %c0_91 = arith.constant 0 : index
    %129 = vector.load %arg2[%c18, %c0_90, %c0_91] : memref<23x256x256xf32, #tpu.memory_space<vmem>>, vector<1x256x256xf32>
    %130 = vector.shape_cast %129 : vector<1x256x256xf32> to vector<256x256xf32>
    %cst_92 = arith.constant dense<0.000000e+00> : vector<8x256xf32>
    %131 = tpu.matmul %122, %130, %cst_92 {dimension_numbers = #tpu.dot_dimension_numbers<[1], [0], [0], [1], [0, 0, 1, 1], [], []>} : vector<8x256xf32>, vector<256x256xf32>, vector<8x256xf32> -> vector<8x256xf32>
    %132 = arith.addf %128, %131 : vector<8x256xf32>
    %c6_93 = arith.constant 6 : index
    %c0_94 = arith.constant 0 : index
    %c0_95 = arith.constant 0 : index
    %133 = vector.load %arg3[%c6_93, %c0_94, %c0_95] : memref<9x1x256xf32, #tpu.memory_space<vmem>>, vector<1x1x256xf32>
    %134 = vector.shape_cast %133 : vector<1x1x256xf32> to vector<1x256xf32>
    %135 = vector.broadcast %134 : vector<1x256xf32> to vector<8x256xf32>
    %136 = arith.addf %132, %135 : vector<8x256xf32>
    %cst_96 = arith.constant 0.000000e+00 : f32
    %137 = vector.broadcast %cst_96 : f32 to vector<8x256xf32>
    %138 = arith.cmpf ole, %136, %137 : vector<8x256xf32>
    %cst_97 = arith.constant 1.000000e+00 : f32
    %139 = vector.broadcast %cst_97 : f32 to vector<8x256xf32>
    %140 = arith.cmpf olt, %136, %139 : vector<8x256xf32>
    %cst_98 = arith.constant 5.000000e-01 : f32
    %141 = vector.broadcast %cst_98 : f32 to vector<8x256xf32>
    %142 = arith.mulf %141, %136 : vector<8x256xf32>
    %143 = arith.mulf %142, %136 : vector<8x256xf32>
    %cst_99 = arith.constant 1.000000e+00 : f32
    %144 = vector.broadcast %cst_99 : f32 to vector<8x256xf32>
    %145 = arith.divf %143, %144 : vector<8x256xf32>
    %cst_100 = arith.constant 5.000000e-01 : f32
    %146 = vector.broadcast %cst_100 : f32 to vector<8x256xf32>
    %147 = arith.subf %136, %146 : vector<8x256xf32>
    %148 = arith.select %140, %145, %147 : vector<8x256xi1>, vector<8x256xf32>
    %cst_101 = arith.constant 0.000000e+00 : f32
    %149 = vector.broadcast %cst_101 : f32 to vector<8x256xf32>
    %150 = arith.select %138, %149, %148 : vector<8x256xi1>, vector<8x256xf32>
    %c19 = arith.constant 19 : index
    %c0_102 = arith.constant 0 : index
    %c0_103 = arith.constant 0 : index
    %151 = vector.load %arg2[%c19, %c0_102, %c0_103] : memref<23x256x256xf32, #tpu.memory_space<vmem>>, vector<1x256x256xf32>
    %152 = vector.shape_cast %151 : vector<1x256x256xf32> to vector<256x256xf32>
    %cst_104 = arith.constant dense<0.000000e+00> : vector<8x256xf32>
    %153 = tpu.matmul %150, %152, %cst_104 {dimension_numbers = #tpu.dot_dimension_numbers<[1], [0], [0], [1], [0, 0, 1, 1], [], []>} : vector<8x256xf32>, vector<256x256xf32>, vector<8x256xf32> -> vector<8x256xf32>
    %c20 = arith.constant 20 : index
    %c0_105 = arith.constant 0 : index
    %c0_106 = arith.constant 0 : index
    %154 = vector.load %arg2[%c20, %c0_105, %c0_106] : memref<23x256x256xf32, #tpu.memory_space<vmem>>, vector<1x256x256xf32>
    %155 = vector.shape_cast %154 : vector<1x256x256xf32> to vector<256x256xf32>
    %cst_107 = arith.constant dense<0.000000e+00> : vector<8x256xf32>
    %156 = tpu.matmul %150, %155, %cst_107 {dimension_numbers = #tpu.dot_dimension_numbers<[1], [0], [0], [1], [0, 0, 1, 1], [], []>} : vector<8x256xf32>, vector<256x256xf32>, vector<8x256xf32> -> vector<8x256xf32>
    %157 = arith.subf %122, %156 : vector<8x256xf32>
    %c15 = arith.constant 15 : index
    %c0_108 = arith.constant 0 : index
    %c0_109 = arith.constant 0 : index
    %158 = vector.load %arg2[%c15, %c0_108, %c0_109] : memref<23x256x256xf32, #tpu.memory_space<vmem>>, vector<1x256x256xf32>
    %159 = vector.shape_cast %158 : vector<1x256x256xf32> to vector<256x256xf32>
    %cst_110 = arith.constant dense<0.000000e+00> : vector<8x256xf32>
    %160 = tpu.matmul %157, %159, %cst_110 {dimension_numbers = #tpu.dot_dimension_numbers<[1], [0], [0], [1], [0, 0, 1, 1], [], []>} : vector<8x256xf32>, vector<256x256xf32>, vector<8x256xf32> -> vector<8x256xf32>
    %161 = arith.addf %94, %160 : vector<8x256xf32>
    %162 = arith.subf %153, %125 : vector<8x256xf32>
    %c21 = arith.constant 21 : index
    %c0_111 = arith.constant 0 : index
    %c0_112 = arith.constant 0 : index
    %163 = vector.load %arg2[%c21, %c0_111, %c0_112] : memref<23x256x256xf32, #tpu.memory_space<vmem>>, vector<1x256x256xf32>
    %164 = vector.shape_cast %163 : vector<1x256x256xf32> to vector<256x256xf32>
    %cst_113 = arith.constant dense<0.000000e+00> : vector<8x256xf32>
    %165 = tpu.matmul %162, %164, %cst_113 {dimension_numbers = #tpu.dot_dimension_numbers<[1], [0], [0], [1], [0, 0, 1, 1], [], []>} : vector<8x256xf32>, vector<256x256xf32>, vector<8x256xf32> -> vector<8x256xf32>
    %166 = arith.addf %161, %165 : vector<8x256xf32>
    %c7_114 = arith.constant 7 : index
    %c0_115 = arith.constant 0 : index
    %c0_116 = arith.constant 0 : index
    %167 = vector.load %arg3[%c7_114, %c0_115, %c0_116] : memref<9x1x256xf32, #tpu.memory_space<vmem>>, vector<1x1x256xf32>
    %168 = vector.shape_cast %167 : vector<1x1x256xf32> to vector<1x256xf32>
    %169 = vector.broadcast %168 : vector<1x256xf32> to vector<8x256xf32>
    %170 = arith.addf %166, %169 : vector<8x256xf32>
    %c22 = arith.constant 22 : index
    %c0_117 = arith.constant 0 : index
    %c0_118 = arith.constant 0 : index
    %171 = vector.load %arg2[%c22, %c0_117, %c0_118] : memref<23x256x256xf32, #tpu.memory_space<vmem>>, vector<1x256x256xf32>
    %172 = vector.shape_cast %171 : vector<1x256x256xf32> to vector<256x256xf32>
    %cst_119 = arith.constant dense<0.000000e+00> : vector<8x256xf32>
    %173 = tpu.matmul %170, %172, %cst_119 {dimension_numbers = #tpu.dot_dimension_numbers<[1], [0], [0], [1], [0, 0, 1, 1], [], []>} : vector<8x256xf32>, vector<256x256xf32>, vector<8x256xf32> -> vector<8x256xf32>
    %c8_120 = arith.constant 8 : index
    %c0_121 = arith.constant 0 : index
    %c0_122 = arith.constant 0 : index
    %174 = vector.load %arg3[%c8_120, %c0_121, %c0_122] : memref<9x1x256xf32, #tpu.memory_space<vmem>>, vector<1x1x256xf32>
    %175 = vector.shape_cast %174 : vector<1x1x256xf32> to vector<1x256xf32>
    %176 = vector.broadcast %175 : vector<1x256xf32> to vector<8x256xf32>
    %177 = arith.addf %173, %176 : vector<8x256xf32>
    %c0_123 = arith.constant 0 : index
    %c0_124 = arith.constant 0 : index
    %178 = vector.load %arg4[%c0_123, %c0_124] : memref<8x256xf32, #tpu.memory_space<vmem>>, vector<8x256xf32>
    tpu.vector_store %arg4[%c0_123, %c0_124], %177 {strides = array<i32>} : memref<8x256xf32, #tpu.memory_space<vmem>>, vector<8x256xf32>,
    return
  }
  func.func @transform_0(%arg0: i32) -> (i32, i32) {
    %c0_i32 = arith.constant 0 : i32
    %c0_i32_0 = arith.constant 0 : i32
    return %arg0, %c0_i32 : i32, i32
  }
  func.func @transform_1(%arg0: i32) -> (i32, i32, i32) {
    %c0_i32 = arith.constant 0 : i32
    %c0_i32_0 = arith.constant 0 : i32
    %c0_i32_1 = arith.constant 0 : i32
    %c0_i32_2 = arith.constant 0 : i32
    return %c0_i32, %c0_i32_0, %c0_i32_1 : i32, i32, i32
  }
  func.func @transform_2(%arg0: i32) -> (i32, i32, i32) {
    %c0_i32 = arith.constant 0 : i32
    %c0_i32_0 = arith.constant 0 : i32
    %c0_i32_1 = arith.constant 0 : i32
    %c0_i32_2 = arith.constant 0 : i32
    return %c0_i32, %c0_i32_0, %c0_i32_1 : i32, i32, i32
  }
  func.func @transform_3(%arg0: i32) -> (i32, i32) {
    %c0_i32 = arith.constant 0 : i32
    %c0_i32_0 = arith.constant 0 : i32
    return %arg0, %c0_i32 : i32, i32
  }
}

</mosaic_0001>

<llo_original>
// kernel: apply.1
$region0: #{apply.1}
  #allocation0 [shape = 'u32[]', space=smem, size = 0x4, offset = 0x4, fixed_abs, tag = 'smem constant byte address 0x4 - core index']
  #allocation1 [shape = 'u32[144,128]{1,0:T(1,128)}', space=vmem, size = 0x12000, scoped, tag = 'internal scratch']
  %s0 = inlined_call_operand.vmem [shape: f32[8,256], index: 0, kind: input, shape index: {}]
  %s1 = inlined_call_operand.hbm [shape: f32[23,256,256], index: 1, kind: input, shape index: {}]
  %s2 = inlined_call_operand.hbm [shape: f32[9,1,256], index: 2, kind: input, shape index: {}]
  %s3 = inlined_call_operand.vmem [shape: f32[8,256], index: 3, kind: output, shape index: {}]
  %s4 = sld [smem:[#allocation0]]
  $region30: #{apply.1} parent=0
    _
  %s6 = ssub.s32 1, %s4
  %s7 = scalar_select 0, %s6, %s4
  $region1: #{apply.1} parent=0
    #allocation2 [shape = 'u8[6029312]{0}', space=vmem, size = 0x5c0000, scoped, tag = 'input window, operand 1, single buffered']
    #allocation3 [shape = 's32[1]{0}', space=sflag, size = 0x4, scoped, tag = 'scoped memory for apply.1']
    #allocation4 [shape = 'u8[9216]{0}', space=vmem, size = 0x2400, scoped, tag = 'input window, operand 2, single buffered']
    #allocation5 [shape = 's32[1]{0}', space=sflag, size = 0x4, scoped, tag = 'scoped memory for apply.1']
    %8 = vsyncpa [#allocation3], 0
    %9 = vsyncpa [#allocation5], 0
    // Predicated region
    $region2: #{apply.1} parent=1 // pred_check
      _
    $region3: #{apply.1} parent=1 // pred_check_branch
      %11 = sbr.rel (0) target = $region5
    $region4: #{apply.1} parent=1 // pred_region
      _
    $region5: #{apply.1} parent=1 // pred_fallthru
      _
    // Predicated region
    $region6: #{apply.1} parent=1 // pred_check
      _
    $region7: #{apply.1} parent=1 // pred_check_branch
      %13 = sbr.rel (0) target = $region9
    $region8: #{apply.1} parent=1 // pred_region
      %s15 = ssub.s32 188416, 188416
      %16 = vsyncadd [#allocation3], %s15
      %s17 = sshll.u32 [#allocation2], 4
      %s18 = int_to_ptr.vmem [resolvable:$true] %s17
      %23 = dma.hbm_to_vmem [thread:$0]  %s1, 188416, %s18, [#allocation3], 256, 256, 16
    $region9: #{apply.1} parent=1 // pred_fallthru
      _
    // Predicated region
    $region10: #{apply.1} parent=1 // pred_check
      _
    $region11: #{apply.1} parent=1 // pred_check_branch
      %25 = sbr.rel (0) target = $region13
    $region12: #{apply.1} parent=1 // pred_region
      %s27 = ssub.s32 288, 288
      %28 = vsyncadd [#allocation5], %s27
      %s29 = sshll.u32 [#allocation4], 4
      %s30 = int_to_ptr.vmem [resolvable:$true] %s29
      %35 = dma.hbm_to_vmem [thread:$0]  %s2, 288, %s30, [#allocation5], 32, 32, 2
    $region13: #{apply.1} parent=1 // pred_fallthru
      _
    // Predicated region
    $region14: #{apply.1} parent=1 // pred_check
      _
    $region15: #{apply.1} parent=1 // pred_check_branch
      %37 = sbr.rel (0) target = $region17
    $region16: #{apply.1} parent=1 // pred_region
      %38 = dma.done [#allocation3], 188416
    $region17: #{apply.1} parent=1 // pred_fallthru
      _
    // Predicated region
    $region18: #{apply.1} parent=1 // pred_check
      _
    $region19: #{apply.1} parent=1 // pred_check_branch
      %40 = sbr.rel (0) target = $region21
    $region20: #{apply.1} parent=1 // pred_region
      %41 = dma.done [#allocation5], 288
    $region21: #{apply.1} parent=1 // pred_fallthru
      _
    %v42 = vld [vmem:[%s0] sm:$0xff]
    %v43 = vld [vmem:[%s0 + $0x8] sm:$0xff]
    %v44 = vld [vmem:[#allocation2] sm:$0xff]
    %v45 = vld [vmem:[#allocation2 + $0x8] sm:$0xff]
    %v46 = vld [vmem:[#allocation2 + $0x10] sm:$0xff]
    %v47 = vld [vmem:[#allocation2 + $0x18] sm:$0xff]
    %v48 = vld [vmem:[#allocation2 + $0x20] sm:$0xff]
    %v49 = vld [vmem:[#allocation2 + $0x28] sm:$0xff]
    %v50 = vld [vmem:[#allocation2 + $0x30] sm:$0xff]
    %v51 = vld [vmem:[#allocation2 + $0x38] sm:$0xff]
    %v52 = vld [vmem:[#allocation2 + $0x40] sm:$0xff]
    %v53 = vld [vmem:[#allocation2 + $0x48] sm:$0xff]
    %v54 = vld [vmem:[#allocation2 + $0x50] sm:$0xff]
    %v55 = vld [vmem:[#allocation2 + $0x58] sm:$0xff]
    %v56 = vld [vmem:[#allocation2 + $0x60] sm:$0xff]
    %v57 = vld [vmem:[#allocation2 + $0x68] sm:$0xff]
    %v58 = vld [vmem:[#allocation2 + $0x70] sm:$0xff]
    %v59 = vld [vmem:[#allocation2 + $0x78] sm:$0xff]
    %v60 = vld [vmem:[#allocation2 + $0x80] sm:$0xff]
    %v61 = vld [vmem:[#allocation2 + $0x88] sm:$0xff]
    %v62 = vld [vmem:[#allocation2 + $0x90] sm:$0xff]
    %v63 = vld [vmem:[#allocation2 + $0x98] sm:$0xff]
    %v64 = vld [vmem:[#allocation2 + $0xa0] sm:$0xff]
    %v65 = vld [vmem:[#allocation2 + $0xa8] sm:$0xff]
    %v66 = vld [vmem:[#allocation2 + $0xb0] sm:$0xff]
    %v67 = vld [vmem:[#allocation2 + $0xb8] sm:$0xff]
    %v68 = vld [vmem:[#allocation2 + $0xc0] sm:$0xff]
    %v69 = vld [vmem:[#allocation2 + $0xc8] sm:$0xff]
    %v70 = vld [vmem:[#allocation2 + $0xd0] sm:$0xff]
    %v71 = vld [vmem:[#allocation2 + $0xd8] sm:$0xff]
    %v72 = vld [vmem:[#allocation2 + $0xe0] sm:$0xff]
    %v73 = vld [vmem:[#allocation2 + $0xe8] sm:$0xff]
    %v74 = vld [vmem:[#allocation2 + $0xf0] sm:$0xff]
    %v75 = vld [vmem:[#allocation2 + $0xf8] sm:$0xff]
    %v76 = vld [vmem:[#allocation2 + $0x100] sm:$0xff]
    %v77 = vld [vmem:[#allocation2 + $0x108] sm:$0xff]
    %v78 = vld [vmem:[#allocation2 + $0x110] sm:$0xff]
    %v79 = vld [vmem:[#allocation2 + $0x118] sm:$0xff]
    %v80 = vld [vmem:[#allocation2 + $0x120] sm:$0xff]
    %v81 = vld [vmem:[#allocation2 + $0x128] sm:$0xff]
    %v82 = vld [vmem:[#allocation2 + $0x130] sm:$0xff]
    %v83 = vld [vmem:[#allocation2 + $0x138] sm:$0xff]
    %v84 = vld [vmem:[#allocation2 + $0x140] sm:$0xff]
    %v85 = vld [vmem:[#allocation2 + $0x148] sm:$0xff]
    %v86 = vld [vmem:[#allocation2 + $0x150] sm:$0xff]
    %v87 = vld [vmem:[#allocation2 + $0x158] sm:$0xff]
    %v88 = vld [vmem:[#allocation2 + $0x160] sm:$0xff]
    %v89 = vld [vmem:[#allocation2 + $0x168] sm:$0xff]
    %v90 = vld [vmem:[#allocation2 + $0x170] sm:$0xff]
    %v91 = vld [vmem:[#allocation2 + $0x178] sm:$0xff]
    %v92 = vld [vmem:[#allocation2 + $0x180] sm:$0xff]
    %v93 = vld [vmem:[#allocation2 + $0x188] sm:$0xff]
    %v94 = vld [vmem:[#allocation2 + $0x190] sm:$0xff]
    %v95 = vld [vmem:[#allocation2 + $0x198] sm:$0xff]
    %v96 = vld [vmem:[#allocation2 + $0x1a0] sm:$0xff]
    %v97 = vld [vmem:[#allocation2 + $0x1a8] sm:$0xff]
    %v98 = vld [vmem:[#allocation2 + $0x1b0] sm:$0xff]
    %v99 = vld [vmem:[#allocation2 + $0x1b8] sm:$0xff]
    %v100 = vld [vmem:[#allocation2 + $0x1c0] sm:$0xff]
    %v101 = vld [vmem:[#allocation2 + $0x1c8] sm:$0xff]
    %v102 = vld [vmem:[#allocation2 + $0x1d0] sm:$0xff]
    %v103 = vld [vmem:[#allocation2 + $0x1d8] sm:$0xff]
    %v104 = vld [vmem:[#allocation2 + $0x1e0] sm:$0xff]
    %v105 = vld [vmem:[#allocation2 + $0x1e8] sm:$0xff]
    %v106 = vld [vmem:[#allocation2 + $0x1f0] sm:$0xff]
    %v107 = vld [vmem:[#allocation2 + $0x1f8] sm:$0xff]
    %v108 = vld [vmem:[#allocation4] sm:$0x3]
    %v110 = vlaneseq
    %v111 = vshrl.u32 %v110, 7
    %v112 = vsub.s32 0, %v111
    %v113 = vrot.slane %v108, %v112
    %v114 = vlaneseq
    %v115 = vshrl.u32 %v114, 7
    %v116 = vsub.s32 1, %v115
    %v117 = vrot.slane %v108, %v116
    %120 = vmatprep.subr.mxu0 %v45
    %121 = vmatpush1.msra.mxu0 %v44
    %122 = vmatprep.subr.mxu0 %v47
    %123 = vmatpush1.msra.mxu0 %v46
    %124 = vmatprep.subr.mxu0 %v49
    %125 = vmatpush1.msra.mxu0 %v48
    %126 = vmatprep.subr.mxu0 %v51
    %127 = vmatpush1.msra.mxu0 %v50
    %128 = vmatprep.subr.mxu0 %v53
    %129 = vmatpush1.msra.mxu0 %v52
    %130 = vmatprep.subr.mxu0 %v55
    %131 = vmatpush1.msra.mxu0 %v54
    %132 = vmatprep.subr.mxu0 %v57
    %133 = vmatpush1.msra.mxu0 %v56
    %134 = vmatprep.subr.mxu0 %v59
    %135 = vmatpush1.msra.mxu0 %v58
    %136 = vmatprep.subr.mxu0 %v61
    %137 = vmatpush1.msra.mxu0 %v60
    %138 = vmatprep.subr.mxu0 %v63
    %139 = vmatpush1.msra.mxu0 %v62
    %140 = vmatprep.subr.mxu0 %v65
    %141 = vmatpush1.msra.mxu0 %v64
    %142 = vmatprep.subr.mxu0 %v67
    %143 = vmatpush1.msra.mxu0 %v66
    %144 = vmatprep.subr.mxu0 %v69
    %145 = vmatpush1.msra.mxu0 %v68
    %146 = vmatprep.subr.mxu0 %v71
    %147 = vmatpush1.msra.mxu0 %v70
    %148 = vmatprep.subr.mxu0 %v73
    %149 = vmatpush1.msra.mxu0 %v72
    %150 = vmatprep.subr.mxu0 %v75
    %151 = vmatpush1.msra.mxu0 %v74
    %152 = vmatprep.subr.mxu0 %v77
    %153 = vmatpush1.msra.mxu0 %v76
    %154 = vmatprep.subr.mxu0 %v79
    %155 = vmatpush1.msra.mxu0 %v78
    %156 = vmatprep.subr.mxu0 %v81
    %157 = vmatpush1.msra.mxu0 %v80
    %158 = vmatprep.subr.mxu0 %v83
    %159 = vmatpush1.msra.mxu0 %v82
    %160 = vmatprep.subr.mxu0 %v85
    %161 = vmatpush1.msra.mxu0 %v84
    %162 = vmatprep.subr.mxu0 %v87
    %163 = vmatpush1.msra.mxu0 %v86
    %164 = vmatprep.subr.mxu0 %v89
    %165 = vmatpush1.msra.mxu0 %v88
    %166 = vmatprep.subr.mxu0 %v91
    %167 = vmatpush1.msra.mxu0 %v90
    %168 = vmatprep.subr.mxu0 %v93
    %169 = vmatpush1.msra.mxu0 %v92
    %170 = vmatprep.subr.mxu0 %v95
    %171 = vmatpush1.msra.mxu0 %v94
    %172 = vmatprep.subr.mxu0 %v97
    %173 = vmatpush1.msra.mxu0 %v96
    %174 = vmatprep.subr.mxu0 %v99
    %175 = vmatpush1.msra.mxu0 %v98
    %176 = vmatprep.subr.mxu0 %v101
    %177 = vmatpush1.msra.mxu0 %v100
    %178 = vmatprep.subr.mxu0 %v103
    %179 = vmatpush1.msra.mxu0 %v102
    %180 = vmatprep.subr.mxu0 %v105
    %181 = vmatpush1.msra.mxu0 %v104
    %182 = vmatprep.subr.mxu0 %v107
    %183 = vmatpush1.msra.mxu0 %v106
    %184 = vmatprep.mubr.f32.mxu0 %v43
    %185 = vmatmul.mubr.f32.gmra.mrb[0].mxu0 %v42
    %v186 = vpop.f32.mrb[0].mxu0
    %v187 = vadd.f32 %v113, %v186
    %v188 = vpop.f32.mrb[0].mxu0
    %v189 = vadd.f32 %v117, %v188
    %190 = vdwg.mxu0
    %v191 = vmul.f32 %v187, 1.7392527
    %v192 = vmul.f32 %v189, 1.7392527
    %s193 = scalar_lea.vmem [#allocation2], 512
    %v194 = vld [vmem:[%s193] sm:$0xff]
    %v195 = vld [vmem:[%s193 + $0x8] sm:$0xff]
    %v196 = vld [vmem:[%s193 + $0x10] sm:$0xff]
    %v197 = vld [vmem:[%s193 + $0x18] sm:$0xff]
    %v198 = vld [vmem:[%s193 + $0x20] sm:$0xff]
    %v199 = vld [vmem:[%s193 + $0x28] sm:$0xff]
    %v200 = vld [vmem:[%s193 + $0x30] sm:$0xff]
    %v201 = vld [vmem:[%s193 + $0x38] sm:$0xff]
    %v202 = vld [vmem:[%s193 + $0x40] sm:$0xff]
    %v203 = vld [vmem:[%s193 + $0x48] sm:$0xff]
    %v204 = vld [vmem:[%s193 + $0x50] sm:$0xff]
    %v205 = vld [vmem:[%s193 + $0x58] sm:$0xff]
    %v206 = vld [vmem:[%s193 + $0x60] sm:$0xff]
    %v207 = vld [vmem:[%s193 + $0x68] sm:$0xff]
    %v208 = vld [vmem:[%s193 + $0x70] sm:$0xff]
    %v209 = vld [vmem:[%s193 + $0x78] sm:$0xff]
    %v210 = vld [vmem:[%s193 + $0x80] sm:$0xff]
    %v211 = vld [vmem:[%s193 + $0x88] sm:$0xff]
    %v212 = vld [vmem:[%s193 + $0x90] sm:$0xff]
    %v213 = vld [vmem:[%s193 + $0x98] sm:$0xff]
    %v214 = vld [vmem:[%s193 + $0xa0] sm:$0xff]
    %v215 = vld [vmem:[%s193 + $0xa8] sm:$0xff]
    %v216 = vld [vmem:[%s193 + $0xb0] sm:$0xff]
    %v217 = vld [vmem:[%s193 + $0xb8] sm:$0xff]
    %v218 = vld [vmem:[%s193 + $0xc0] sm:$0xff]
    %v219 = vld [vmem:[%s193 + $0xc8] sm:$0xff]
    %v220 = vld [vmem:[%s193 + $0xd0] sm:$0xff]
    %v221 = vld [vmem:[%s193 + $0xd8] sm:$0xff]
    %v222 = vld [vmem:[%s193 + $0xe0] sm:$0xff]
    %v223 = vld [vmem:[%s193 + $0xe8] sm:$0xff]
    %v224 = vld [vmem:[%s193 + $0xf0] sm:$0xff]
    %v225 = vld [vmem:[%s193 + $0xf8] sm:$0xff]
    %v226 = vld [vmem:[%s193 + $0x100] sm:$0xff]
    %v227 = vld [vmem:[%s193 + $0x108] sm:$0xff]
    %v228 = vld [vmem:[%s193 + $0x110] sm:$0xff]
    %v229 = vld [vmem:[%s193 + $0x118] sm:$0xff]
    %v230 = vld [vmem:[%s193 + $0x120] sm:$0xff]
    %v231 = vld [vmem:[%s193 + $0x128] sm:$0xff]
    %v232 = vld [vmem:[%s193 + $0x130] sm:$0xff]
    %v233 = vld [vmem:[%s193 + $0x138] sm:$0xff]
    %v234 = vld [vmem:[%s193 + $0x140] sm:$0xff]
    %v235 = vld [vmem:[%s193 + $0x148] sm:$0xff]
    %v236 = vld [vmem:[%s193 + $0x150] sm:$0xff]
    %v237 = vld [vmem:[%s193 + $0x158] sm:$0xff]
    %v238 = vld [vmem:[%s193 + $0x160] sm:$0xff]
    %v239 = vld [vmem:[%s193 + $0x168] sm:$0xff]
    %v240 = vld [vmem:[%s193 + $0x170] sm:$0xff]
    %v241 = vld [vmem:[%s193 + $0x178] sm:$0xff]
    %v242 = vld [vmem:[%s193 + $0x180] sm:$0xff]
    %v243 = vld [vmem:[%s193 + $0x188] sm:$0xff]
    %v244 = vld [vmem:[%s193 + $0x190] sm:$0xff]
    %v245 = vld [vmem:[%s193 + $0x198] sm:$0xff]
    %v246 = vld [vmem:[%s193 + $0x1a0] sm:$0xff]
    %v247 = vld [vmem:[%s193 + $0x1a8] sm:$0xff]
    %v248 = vld [vmem:[%s193 + $0x1b0] sm:$0xff]
    %v249 = vld [vmem:[%s193 + $0x1b8] sm:$0xff]
    %v250 = vld [vmem:[%s193 + $0x1c0] sm:$0xff]
    %v251 = vld [vmem:[%s193 + $0x1c8] sm:$0xff]
    %v252 = vld [vmem:[%s193 + $0x1d0] sm:$0xff]
    %v253 = vld [vmem:[%s193 + $0x1d8] sm:$0xff]
    %v254 = vld [vmem:[%s193 + $0x1e0] sm:$0xff]
    %v255 = vld [vmem:[%s193 + $0x1e8] sm:$0xff]
    %v256 = vld [vmem:[%s193 + $0x1f0] sm:$0xff]
    %v257 = vld [vmem:[%s193 + $0x1f8] sm:$0xff]
    %258 = vmatprep.subr.mxu0 %v195
    %259 = vmatpush1.msra.mxu0 %v194
    %260 = vmatprep.subr.mxu0 %v197
    %261 = vmatpush1.msra.mxu0 %v196
    %262 = vmatprep.subr.mxu0 %v199
    %263 = vmatpush1.msra.mxu0 %v198
    %264 = vmatprep.subr.mxu0 %v201
    %265 = vmatpush1.msra.mxu0 %v200
    %266 = vmatprep.subr.mxu0 %v203
    %267 = vmatpush1.msra.mxu0 %v202
    %268 = vmatprep.subr.mxu0 %v205
    %269 = vmatpush1.msra.mxu0 %v204
    %270 = vmatprep.subr.mxu0 %v207
    %271 = vmatpush1.msra.mxu0 %v206
    %272 = vmatprep.subr.mxu0 %v209
    %273 = vmatpush1.msra.mxu0 %v208
    %274 = vmatprep.subr.mxu0 %v211
    %275 = vmatpush1.msra.mxu0 %v210
    %276 = vmatprep.subr.mxu0 %v213
    %277 = vmatpush1.msra.mxu0 %v212
    %278 = vmatprep.subr.mxu0 %v215
    %279 = vmatpush1.msra.mxu0 %v214
    %280 = vmatprep.subr.mxu0 %v217
    %281 = vmatpush1.msra.mxu0 %v216
    %282 = vmatprep.subr.mxu0 %v219
    %283 = vmatpush1.msra.mxu0 %v218
    %284 = vmatprep.subr.mxu0 %v221
    %285 = vmatpush1.msra.mxu0 %v220
    %286 = vmatprep.subr.mxu0 %v223
    %287 = vmatpush1.msra.mxu0 %v222
    %288 = vmatprep.subr.mxu0 %v225
    %289 = vmatpush1.msra.mxu0 %v224
    %290 = vmatprep.subr.mxu0 %v227
    %291 = vmatpush1.msra.mxu0 %v226
    %292 = vmatprep.subr.mxu0 %v229
    %293 = vmatpush1.msra.mxu0 %v228
    %294 = vmatprep.subr.mxu0 %v231
    %295 = vmatpush1.msra.mxu0 %v230
    %296 = vmatprep.subr.mxu0 %v233
    %297 = vmatpush1.msra.mxu0 %v232
    %298 = vmatprep.subr.mxu0 %v235
    %299 = vmatpush1.msra.mxu0 %v234
    %300 = vmatprep.subr.mxu0 %v237
    %301 = vmatpush1.msra.mxu0 %v236
    %302 = vmatprep.subr.mxu0 %v239
    %303 = vmatpush1.msra.mxu0 %v238
    %304 = vmatprep.subr.mxu0 %v241
    %305 = vmatpush1.msra.mxu0 %v240
    %306 = vmatprep.subr.mxu0 %v243
    %307 = vmatpush1.msra.mxu0 %v242
    %308 = vmatprep.subr.mxu0 %v245
    %309 = vmatpush1.msra.mxu0 %v244
    %310 = vmatprep.subr.mxu0 %v247
    %311 = vmatpush1.msra.mxu0 %v246
    %312 = vmatprep.subr.mxu0 %v249
    %313 = vmatpush1.msra.mxu0 %v248
    %314 = vmatprep.subr.mxu0 %v251
    %315 = vmatpush1.msra.mxu0 %v250
    %316 = vmatprep.subr.mxu0 %v253
    %317 = vmatpush1.msra.mxu0 %v252
    %318 = vmatprep.subr.mxu0 %v255
    %319 = vmatpush1.msra.mxu0 %v254
    %320 = vmatprep.subr.mxu0 %v257
    %321 = vmatpush1.msra.mxu0 %v256
    %322 = vmatprep.mubr.f32.mxu0 %v189
    %323 = vmatmul.mubr.f32.gmra.mrb[0].mxu0 %v187
    %v324 = vpop.f32.mrb[0].mxu0
    %v325 = vadd.f32 0.0, %v324
    %v326 = vpop.f32.mrb[0].mxu0
    %v327 = vadd.f32 0.0, %v326
    %328 = vdwg.mxu0
    %s329 = scalar_lea.vmem [#allocation2], 1024
    %v330 = vld [vmem:[%s329] sm:$0xff]
    %v331 = vld [vmem:[%s329 + $0x8] sm:$0xff]
    %v332 = vld [vmem:[%s329 + $0x10] sm:$0xff]
    %v333 = vld [vmem:[%s329 + $0x18] sm:$0xff]
    %v334 = vld [vmem:[%s329 + $0x20] sm:$0xff]
    %v335 = vld [vmem:[%s329 + $0x28] sm:$0xff]
    %v336 = vld [vmem:[%s329 + $0x30] sm:$0xff]
    %v337 = vld [vmem:[%s329 + $0x38] sm:$0xff]
    %v338 = vld [vmem:[%s329 + $0x40] sm:$0xff]
    %v339 = vld [vmem:[%s329 + $0x48] sm:$0xff]
    %v340 = vld [vmem:[%s329 + $0x50] sm:$0xff]
    %v341 = vld [vmem:[%s329 + $0x58] sm:$0xff]
    %v342 = vld [vmem:[%s329 + $0x60] sm:$0xff]
    %v343 = vld [vmem:[%s329 + $0x68] sm:$0xff]
    %v344 = vld [vmem:[%s329 + $0x70] sm:$0xff]
    %v345 = vld [vmem:[%s329 + $0x78] sm:$0xff]
    %v346 = vld [vmem:[%s329 + $0x80] sm:$0xff]
    %v347 = vld [vmem:[%s329 + $0x88] sm:$0xff]
    %v348 = vld [vmem:[%s329 + $0x90] sm:$0xff]
    %v349 = vld [vmem:[%s329 + $0x98] sm:$0xff]
    %v350 = vld [vmem:[%s329 + $0xa0] sm:$0xff]
    %v351 = vld [vmem:[%s329 + $0xa8] sm:$0xff]
    %v352 = vld [vmem:[%s329 + $0xb0] sm:$0xff]
    %v353 = vld [vmem:[%s329 + $0xb8] sm:$0xff]
    %v354 = vld [vmem:[%s329 + $0xc0] sm:$0xff]
    %v355 = vld [vmem:[%s329 + $0xc8] sm:$0xff]
    %v356 = vld [vmem:[%s329 + $0xd0] sm:$0xff]
    %v357 = vld [vmem:[%s329 + $0xd8] sm:$0xff]
    %v358 = vld [vmem:[%s329 + $0xe0] sm:$0xff]
    %v359 = vld [vmem:[%s329 + $0xe8] sm:$0xff]
    %v360 = vld [vmem:[%s329 + $0xf0] sm:$0xff]
    %v361 = vld [vmem:[%s329 + $0xf8] sm:$0xff]
    %v362 = vld [vmem:[%s329 + $0x100] sm:$0xff]
    %v363 = vld [vmem:[%s329 + $0x108] sm:$0xff]
    %v364 = vld [vmem:[%s329 + $0x110] sm:$0xff]
    %v365 = vld [vmem:[%s329 + $0x118] sm:$0xff]
    %v366 = vld [vmem:[%s329 + $0x120] sm:$0xff]
    %v367 = vld [vmem:[%s329 + $0x128] sm:$0xff]
    %v368 = vld [vmem:[%s329 + $0x130] sm:$0xff]
    %v369 = vld [vmem:[%s329 + $0x138] sm:$0xff]
    %v370 = vld [vmem:[%s329 + $0x140] sm:$0xff]
    %v371 = vld [vmem:[%s329 + $0x148] sm:$0xff]
    %v372 = vld [vmem:[%s329 + $0x150] sm:$0xff]
    %v373 = vld [vmem:[%s329 + $0x158] sm:$0xff]
    %v374 = vld [vmem:[%s329 + $0x160] sm:$0xff]
    %v375 = vld [vmem:[%s329 + $0x168] sm:$0xff]
    %v376 = vld [vmem:[%s329 + $0x170] sm:$0xff]
    %v377 = vld [vmem:[%s329 + $0x178] sm:$0xff]
    %v378 = vld [vmem:[%s329 + $0x180] sm:$0xff]
    %v379 = vld [vmem:[%s329 + $0x188] sm:$0xff]
    %v380 = vld [vmem:[%s329 + $0x190] sm:$0xff]
    %v381 = vld [vmem:[%s329 + $0x198] sm:$0xff]
    %v382 = vld [vmem:[%s329 + $0x1a0] sm:$0xff]
    %v383 = vld [vmem:[%s329 + $0x1a8] sm:$0xff]
    %v384 = vld [vmem:[%s329 + $0x1b0] sm:$0xff]
    %v385 = vld [vmem:[%s329 + $0x1b8] sm:$0xff]
    %v386 = vld [vmem:[%s329 + $0x1c0] sm:$0xff]
    %v387 = vld [vmem:[%s329 + $0x1c8] sm:$0xff]
    %v388 = vld [vmem:[%s329 + $0x1d0] sm:$0xff]
    %v389 = vld [vmem:[%s329 + $0x1d8] sm:$0xff]
    %v390 = vld [vmem:[%s329 + $0x1e0] sm:$0xff]
    %v391 = vld [vmem:[%s329 + $0x1e8] sm:$0xff]
    %v392 = vld [vmem:[%s329 + $0x1f0] sm:$0xff]
    %v393 = vld [vmem:[%s329 + $0x1f8] sm:$0xff]
    %s394 = scalar_lea.vmem [#allocation4], 2
    %v395 = vld [vmem:[%s394] sm:$0x3]
    %v397 = vlaneseq
    %v398 = vshrl.u32 %v397, 7
    %v399 = vsub.s32 0, %v398
    %v400 = vrot.slane %v395, %v399
    %v401 = vlaneseq
    %v402 = vshrl.u32 %v401, 7
    %v403 = vsub.s32 1, %v402
    %v404 = vrot.slane %v395, %v403
    %407 = vmatprep.subr.mxu0 %v331
    %408 = vmatpush1.msra.mxu0 %v330
    %409 = vmatprep.subr.mxu0 %v333
    %410 = vmatpush1.msra.mxu0 %v332
    %411 = vmatprep.subr.mxu0 %v335
    %412 = vmatpush1.msra.mxu0 %v334
    %413 = vmatprep.subr.mxu0 %v337
    %414 = vmatpush1.msra.mxu0 %v336
    %415 = vmatprep.subr.mxu0 %v339
    %416 = vmatpush1.msra.mxu0 %v338
    %417 = vmatprep.subr.mxu0 %v341
    %418 = vmatpush1.msra.mxu0 %v340
    %419 = vmatprep.subr.mxu0 %v343
    %420 = vmatpush1.msra.mxu0 %v342
    %421 = vmatprep.subr.mxu0 %v345
    %422 = vmatpush1.msra.mxu0 %v344
    %423 = vmatprep.subr.mxu0 %v347
    %424 = vmatpush1.msra.mxu0 %v346
    %425 = vmatprep.subr.mxu0 %v349
    %426 = vmatpush1.msra.mxu0 %v348
    %427 = vmatprep.subr.mxu0 %v351
    %428 = vmatpush1.msra.mxu0 %v350
    %429 = vmatprep.subr.mxu0 %v353
    %430 = vmatpush1.msra.mxu0 %v352
    %431 = vmatprep.subr.mxu0 %v355
    %432 = vmatpush1.msra.mxu0 %v354
    %433 = vmatprep.subr.mxu0 %v357
    %434 = vmatpush1.msra.mxu0 %v356
    %435 = vmatprep.subr.mxu0 %v359
    %436 = vmatpush1.msra.mxu0 %v358
    %437 = vmatprep.subr.mxu0 %v361
    %438 = vmatpush1.msra.mxu0 %v360
    %439 = vmatprep.subr.mxu0 %v363
    %440 = vmatpush1.msra.mxu0 %v362
    %441 = vmatprep.subr.mxu0 %v365
    %442 = vmatpush1.msra.mxu0 %v364
    %443 = vmatprep.subr.mxu0 %v367
    %444 = vmatpush1.msra.mxu0 %v366
    %445 = vmatprep.subr.mxu0 %v369
    %446 = vmatpush1.msra.mxu0 %v368
    %447 = vmatprep.subr.mxu0 %v371
    %448 = vmatpush1.msra.mxu0 %v370
    %449 = vmatprep.subr.mxu0 %v373
    %450 = vmatpush1.msra.mxu0 %v372
    %451 = vmatprep.subr.mxu0 %v375
    %452 = vmatpush1.msra.mxu0 %v374
    %453 = vmatprep.subr.mxu0 %v377
    %454 = vmatpush1.msra.mxu0 %v376
    %455 = vmatprep.subr.mxu0 %v379
    %456 = vmatpush1.msra.mxu0 %v378
    %457 = vmatprep.subr.mxu0 %v381
    %458 = vmatpush1.msra.mxu0 %v380
    %459 = vmatprep.subr.mxu0 %v383
    %460 = vmatpush1.msra.mxu0 %v382
    %461 = vmatprep.subr.mxu0 %v385
    %462 = vmatpush1.msra.mxu0 %v384
    %463 = vmatprep.subr.mxu0 %v387
    %464 = vmatpush1.msra.mxu0 %v386
    %465 = vmatprep.subr.mxu0 %v389
    %466 = vmatpush1.msra.mxu0 %v388
    %467 = vmatprep.subr.mxu0 %v391
    %468 = vmatpush1.msra.mxu0 %v390
    %469 = vmatprep.subr.mxu0 %v393
    %470 = vmatpush1.msra.mxu0 %v392
    %471 = vmatprep.mubr.f32.mxu0 %v327
    %472 = vmatmul.mubr.f32.gmra.mrb[0].mxu0 %v325
    %v473 = vpop.f32.mrb[0].mxu0
    %v474 = vadd.f32 %v400, %v473
    %v475 = vpop.f32.mrb[0].mxu0
    %v476 = vadd.f32 %v404, %v475
    %477 = vdwg.mxu0
    %vm478 = vcmp.le.f32.partialorder %v474, 0.0
    %vm479 = vcmp.le.f32.partialorder %v476, 0.0
    %vm480 = vcmp.lt.f32.partialorder %v474, 1.0
    %vm481 = vcmp.lt.f32.partialorder %v476, 1.0
    %v482 = vmul.f32 %v474, 0.5
    %v483 = vmul.f32 %v476, 0.5
    %v484 = vmul.f32 %v482, %v474
    %v485 = vmul.f32 %v483, %v476
    %v486 = vsub.f32 %v474, 0.5
    %v487 = vsub.f32 %v476, 0.5
    %v488 = vsel %vm480, %v484, %v486
    %v489 = vsel %vm481, %v485, %v487
    %v490 = vsel %vm478, 0.0, %v488
    %v491 = vsel %vm479, 0.0, %v489
    %s492 = scalar_lea.vmem [#allocation2], 1536
    %v493 = vld [vmem:[%s492] sm:$0xff]
    %v494 = vld [vmem:[%s492 + $0x8] sm:$0xff]
    %v495 = vld [vmem:[%s492 + $0x10] sm:$0xff]
    %v496 = vld [vmem:[%s492 + $0x18] sm:$0xff]
    %v497 = vld [vmem:[%s492 + $0x20] sm:$0xff]
    %v498 = vld [vmem:[%s492 + $0x28] sm:$0xff]
    %v499 = vld [vmem:[%s492 + $0x30] sm:$0xff]
    %v500 = vld [vmem:[%s492 + $0x38] sm:$0xff]
    %v501 = vld [vmem:[%s492 + $0x40] sm:$0xff]
    %v502 = vld [vmem:[%s492 + $0x48] sm:$0xff]
    %v503 = vld [vmem:[%s492 + $0x50] sm:$0xff]
    %v504 = vld [vmem:[%s492 + $0x58] sm:$0xff]
    %v505 = vld [vmem:[%s492 + $0x60] sm:$0xff]
    %v506 = vld [vmem:[%s492 + $0x68] sm:$0xff]
    %v507 = vld [vmem:[%s492 + $0x70] sm:$0xff]
    %v508 = vld [vmem:[%s492 + $0x78] sm:$0xff]
    %v509 = vld [vmem:[%s492 + $0x80] sm:$0xff]
    %v510 = vld [vmem:[%s492 + $0x88] sm:$0xff]
    %v511 = vld [vmem:[%s492 + $0x90] sm:$0xff]
    %v512 = vld [vmem:[%s492 + $0x98] sm:$0xff]
    %v513 = vld [vmem:[%s492 + $0xa0] sm:$0xff]
    %v514 = vld [vmem:[%s492 + $0xa8] sm:$0xff]
    %v515 = vld [vmem:[%s492 + $0xb0] sm:$0xff]
    %v516 = vld [vmem:[%s492 + $0xb8] sm:$0xff]
    %v517 = vld [vmem:[%s492 + $0xc0] sm:$0xff]
    %v518 = vld [vmem:[%s492 + $0xc8] sm:$0xff]
    %v519 = vld [vmem:[%s492 + $0xd0] sm:$0xff]
    %v520 = vld [vmem:[%s492 + $0xd8] sm:$0xff]
    %v521 = vld [vmem:[%s492 + $0xe0] sm:$0xff]
    %v522 = vld [vmem:[%s492 + $0xe8] sm:$0xff]
    %v523 = vld [vmem:[%s492 + $0xf0] sm:$0xff]
    %v524 = vld [vmem:[%s492 + $0xf8] sm:$0xff]
    %v525 = vld [vmem:[%s492 + $0x100] sm:$0xff]
    %v526 = vld [vmem:[%s492 + $0x108] sm:$0xff]
    %v527 = vld [vmem:[%s492 + $0x110] sm:$0xff]
    %v528 = vld [vmem:[%s492 + $0x118] sm:$0xff]
    %v529 = vld [vmem:[%s492 + $0x120] sm:$0xff]
    %v530 = vld [vmem:[%s492 + $0x128] sm:$0xff]
    %v531 = vld [vmem:[%s492 + $0x130] sm:$0xff]
    %v532 = vld [vmem:[%s492 + $0x138] sm:$0xff]
    %v533 = vld [vmem:[%s492 + $0x140] sm:$0xff]
    %v534 = vld [vmem:[%s492 + $0x148] sm:$0xff]
    %v535 = vld [vmem:[%s492 + $0x150] sm:$0xff]
    %v536 = vld [vmem:[%s492 + $0x158] sm:$0xff]
    %v537 = vld [vmem:[%s492 + $0x160] sm:$0xff]
    %v538 = vld [vmem:[%s492 + $0x168] sm:$0xff]
    %v539 = vld [vmem:[%s492 + $0x170] sm:$0xff]
    %v540 = vld [vmem:[%s492 + $0x178] sm:$0xff]
    %v541 = vld [vmem:[%s492 + $0x180] sm:$0xff]
    %v542 = vld [vmem:[%s492 + $0x188] sm:$0xff]
    %v543 = vld [vmem:[%s492 + $0x190] sm:$0xff]
    %v544 = vld [vmem:[%s492 + $0x198] sm:$0xff]
    %v545 = vld [vmem:[%s492 + $0x1a0] sm:$0xff]
    %v546 = vld [vmem:[%s492 + $0x1a8] sm:$0xff]
    %v547 = vld [vmem:[%s492 + $0x1b0] sm:$0xff]
    %v548 = vld [vmem:[%s492 + $0x1b8] sm:$0xff]
    %v549 = vld [vmem:[%s492 + $0x1c0] sm:$0xff]
    %v550 = vld [vmem:[%s492 + $0x1c8] sm:$0xff]
    %v551 = vld [vmem:[%s492 + $0x1d0] sm:$0xff]
    %v552 = vld [vmem:[%s492 + $0x1d8] sm:$0xff]
    %v553 = vld [vmem:[%s492 + $0x1e0] sm:$0xff]
    %v554 = vld [vmem:[%s492 + $0x1e8] sm:$0xff]
    %v555 = vld [vmem:[%s492 + $0x1f0] sm:$0xff]
    %v556 = vld [vmem:[%s492 + $0x1f8] sm:$0xff]
    %557 = vmatprep.subr.mxu0 %v494
    %558 = vmatpush1.msra.mxu0 %v493
    %559 = vmatprep.subr.mxu0 %v496
    %560 = vmatpush1.msra.mxu0 %v495
    %561 = vmatprep.subr.mxu0 %v498
    %562 = vmatpush1.msra.mxu0 %v497
    %563 = vmatprep.subr.mxu0 %v500
    %564 = vmatpush1.msra.mxu0 %v499
    %565 = vmatprep.subr.mxu0 %v502
    %566 = vmatpush1.msra.mxu0 %v501
    %567 = vmatprep.subr.mxu0 %v504
    %568 = vmatpush1.msra.mxu0 %v503
    %569 = vmatprep.subr.mxu0 %v506
    %570 = vmatpush1.msra.mxu0 %v505
    %571 = vmatprep.subr.mxu0 %v508
    %572 = vmatpush1.msra.mxu0 %v507
    %573 = vmatprep.subr.mxu0 %v510
    %574 = vmatpush1.msra.mxu0 %v509
    %575 = vmatprep.subr.mxu0 %v512
    %576 = vmatpush1.msra.mxu0 %v511
    %577 = vmatprep.subr.mxu0 %v514
    %578 = vmatpush1.msra.mxu0 %v513
    %579 = vmatprep.subr.mxu0 %v516
    %580 = vmatpush1.msra.mxu0 %v515
    %581 = vmatprep.subr.mxu0 %v518
    %582 = vmatpush1.msra.mxu0 %v517
    %583 = vmatprep.subr.mxu0 %v520
    %584 = vmatpush1.msra.mxu0 %v519
    %585 = vmatprep.subr.mxu0 %v522
    %586 = vmatpush1.msra.mxu0 %v521
    %587 = vmatprep.subr.mxu0 %v524
    %588 = vmatpush1.msra.mxu0 %v523
    %589 = vmatprep.subr.mxu0 %v526
    %590 = vmatpush1.msra.mxu0 %v525
    %591 = vmatprep.subr.mxu0 %v528
    %592 = vmatpush1.msra.mxu0 %v527
    %593 = vmatprep.subr.mxu0 %v530
    %594 = vmatpush1.msra.mxu0 %v529
    %595 = vmatprep.subr.mxu0 %v532
    %596 = vmatpush1.msra.mxu0 %v531
    %597 = vmatprep.subr.mxu0 %v534
    %598 = vmatpush1.msra.mxu0 %v533
    %599 = vmatprep.subr.mxu0 %v536
    %600 = vmatpush1.msra.mxu0 %v535
    %601 = vmatprep.subr.mxu0 %v538
    %602 = vmatpush1.msra.mxu0 %v537
    %603 = vmatprep.subr.mxu0 %v540
    %604 = vmatpush1.msra.mxu0 %v539
    %605 = vmatprep.subr.mxu0 %v542
    %606 = vmatpush1.msra.mxu0 %v541
    %607 = vmatprep.subr.mxu0 %v544
    %608 = vmatpush1.msra.mxu0 %v543
    %609 = vmatprep.subr.mxu0 %v546
    %610 = vmatpush1.msra.mxu0 %v545
    %611 = vmatprep.subr.mxu0 %v548
    %612 = vmatpush1.msra.mxu0 %v547
    %613 = vmatprep.subr.mxu0 %v550
    %614 = vmatpush1.msra.mxu0 %v549
    %615 = vmatprep.subr.mxu0 %v552
    %616 = vmatpush1.msra.mxu0 %v551
    %617 = vmatprep.subr.mxu0 %v554
    %618 = vmatpush1.msra.mxu0 %v553
    %619 = vmatprep.subr.mxu0 %v556
    %620 = vmatpush1.msra.mxu0 %v555
    %621 = vmatprep.mubr.f32.mxu0 %v491
    %622 = vmatmul.mubr.f32.gmra.mrb[0].mxu0 %v490
    %v623 = vpop.f32.mrb[0].mxu0
    %v624 = vadd.f32 0.0, %v623
    %v625 = vpop.f32.mrb[0].mxu0
    %v626 = vadd.f32 0.0, %v625
    %627 = vdwg.mxu0
    %v628 = vsub.f32 %v624, %v325
    %v629 = vsub.f32 %v626, %v327
    %s630 = scalar_lea.vmem [#allocation2], 2560
    %v631 = vld [vmem:[%s630] sm:$0xff]
    %v632 = vld [vmem:[%s630 + $0x8] sm:$0xff]
    %v633 = vld [vmem:[%s630 + $0x10] sm:$0xff]
    %v634 = vld [vmem:[%s630 + $0x18] sm:$0xff]
    %v635 = vld [vmem:[%s630 + $0x20] sm:$0xff]
    %v636 = vld [vmem:[%s630 + $0x28] sm:$0xff]
    %v637 = vld [vmem:[%s630 + $0x30] sm:$0xff]
    %v638 = vld [vmem:[%s630 + $0x38] sm:$0xff]
    %v639 = vld [vmem:[%s630 + $0x40] sm:$0xff]
    %v640 = vld [vmem:[%s630 + $0x48] sm:$0xff]
    %v641 = vld [vmem:[%s630 + $0x50] sm:$0xff]
    %v642 = vld [vmem:[%s630 + $0x58] sm:$0xff]
    %v643 = vld [vmem:[%s630 + $0x60] sm:$0xff]
    %v644 = vld [vmem:[%s630 + $0x68] sm:$0xff]
    %v645 = vld [vmem:[%s630 + $0x70] sm:$0xff]
    %v646 = vld [vmem:[%s630 + $0x78] sm:$0xff]
    %v647 = vld [vmem:[%s630 + $0x80] sm:$0xff]
    %v648 = vld [vmem:[%s630 + $0x88] sm:$0xff]
    %v649 = vld [vmem:[%s630 + $0x90] sm:$0xff]
    %v650 = vld [vmem:[%s630 + $0x98] sm:$0xff]
    %v651 = vld [vmem:[%s630 + $0xa0] sm:$0xff]
    %v652 = vld [vmem:[%s630 + $0xa8] sm:$0xff]
    %v653 = vld [vmem:[%s630 + $0xb0] sm:$0xff]
    %v654 = vld [vmem:[%s630 + $0xb8] sm:$0xff]
    %v655 = vld [vmem:[%s630 + $0xc0] sm:$0xff]
    %v656 = vld [vmem:[%s630 + $0xc8] sm:$0xff]
    %v657 = vld [vmem:[%s630 + $0xd0] sm:$0xff]
    %v658 = vld [vmem:[%s630 + $0xd8] sm:$0xff]
    %v659 = vld [vmem:[%s630 + $0xe0] sm:$0xff]
    %v660 = vld [vmem:[%s630 + $0xe8] sm:$0xff]
    %v661 = vld [vmem:[%s630 + $0xf0] sm:$0xff]
    %v662 = vld [vmem:[%s630 + $0xf8] sm:$0xff]
    %v663 = vld [vmem:[%s630 + $0x100] sm:$0xff]
    %v664 = vld [vmem:[%s630 + $0x108] sm:$0xff]
    %v665 = vld [vmem:[%s630 + $0x110] sm:$0xff]
    %v666 = vld [vmem:[%s630 + $0x118] sm:$0xff]
    %v667 = vld [vmem:[%s630 + $0x120] sm:$0xff]
    %v668 = vld [vmem:[%s630 + $0x128] sm:$0xff]
    %v669 = vld [vmem:[%s630 + $0x130] sm:$0xff]
    %v670 = vld [vmem:[%s630 + $0x138] sm:$0xff]
    %v671 = vld [vmem:[%s630 + $0x140] sm:$0xff]
    %v672 = vld [vmem:[%s630 + $0x148] sm:$0xff]
    %v673 = vld [vmem:[%s630 + $0x150] sm:$0xff]
    %v674 = vld [vmem:[%s630 + $0x158] sm:$0xff]
    %v675 = vld [vmem:[%s630 + $0x160] sm:$0xff]
    %v676 = vld [vmem:[%s630 + $0x168] sm:$0xff]
    %v677 = vld [vmem:[%s630 + $0x170] sm:$0xff]
    %v678 = vld [vmem:[%s630 + $0x178] sm:$0xff]
    %v679 = vld [vmem:[%s630 + $0x180] sm:$0xff]
    %v680 = vld [vmem:[%s630 + $0x188] sm:$0xff]
    %v681 = vld [vmem:[%s630 + $0x190] sm:$0xff]
    %v682 = vld [vmem:[%s630 + $0x198] sm:$0xff]
    %v683 = vld [vmem:[%s630 + $0x1a0] sm:$0xff]
    %v684 = vld [vmem:[%s630 + $0x1a8] sm:$0xff]
    %v685 = vld [vmem:[%s630 + $0x1b0] sm:$0xff]
    %v686 = vld [vmem:[%s630 + $0x1b8] sm:$0xff]
    %v687 = vld [vmem:[%s630 + $0x1c0] sm:$0xff]
    %v688 = vld [vmem:[%s630 + $0x1c8] sm:$0xff]
    %v689 = vld [vmem:[%s630 + $0x1d0] sm:$0xff]
    %v690 = vld [vmem:[%s630 + $0x1d8] sm:$0xff]
    %v691 = vld [vmem:[%s630 + $0x1e0] sm:$0xff]
    %v692 = vld [vmem:[%s630 + $0x1e8] sm:$0xff]
    %v693 = vld [vmem:[%s630 + $0x1f0] sm:$0xff]
    %v694 = vld [vmem:[%s630 + $0x1f8] sm:$0xff]
    %695 = vmatprep.subr.mxu0 %v632
    %696 = vmatpush1.msra.mxu0 %v631
    %697 = vmatprep.subr.mxu0 %v634
    %698 = vmatpush1.msra.mxu0 %v633
    %699 = vmatprep.subr.mxu0 %v636
    %700 = vmatpush1.msra.mxu0 %v635
    %701 = vmatprep.subr.mxu0 %v638
    %702 = vmatpush1.msra.mxu0 %v637
    %703 = vmatprep.subr.mxu0 %v640
    %704 = vmatpush1.msra.mxu0 %v639
    %705 = vmatprep.subr.mxu0 %v642
    %706 = vmatpush1.msra.mxu0 %v641
    %707 = vmatprep.subr.mxu0 %v644
    %708 = vmatpush1.msra.mxu0 %v643
    %709 = vmatprep.subr.mxu0 %v646
    %710 = vmatpush1.msra.mxu0 %v645
    %711 = vmatprep.subr.mxu0 %v648
    %712 = vmatpush1.msra.mxu0 %v647
    %713 = vmatprep.subr.mxu0 %v650
    %714 = vmatpush1.msra.mxu0 %v649
    %715 = vmatprep.subr.mxu0 %v652
    %716 = vmatpush1.msra.mxu0 %v651
    %717 = vmatprep.subr.mxu0 %v654
    %718 = vmatpush1.msra.mxu0 %v653
    %719 = vmatprep.subr.mxu0 %v656
    %720 = vmatpush1.msra.mxu0 %v655
    %721 = vmatprep.subr.mxu0 %v658
    %722 = vmatpush1.msra.mxu0 %v657
    %723 = vmatprep.subr.mxu0 %v660
    %724 = vmatpush1.msra.mxu0 %v659
    %725 = vmatprep.subr.mxu0 %v662
    %726 = vmatpush1.msra.mxu0 %v661
    %727 = vmatprep.subr.mxu0 %v664
    %728 = vmatpush1.msra.mxu0 %v663
    %729 = vmatprep.subr.mxu0 %v666
    %730 = vmatpush1.msra.mxu0 %v665
    %731 = vmatprep.subr.mxu0 %v668
    %732 = vmatpush1.msra.mxu0 %v667
    %733 = vmatprep.subr.mxu0 %v670
    %734 = vmatpush1.msra.mxu0 %v669
    %735 = vmatprep.subr.mxu0 %v672
    %736 = vmatpush1.msra.mxu0 %v671
    %737 = vmatprep.subr.mxu0 %v674
    %738 = vmatpush1.msra.mxu0 %v673
    %739 = vmatprep.subr.mxu0 %v676
    %740 = vmatpush1.msra.mxu0 %v675
    %741 = vmatprep.subr.mxu0 %v678
    %742 = vmatpush1.msra.mxu0 %v677
    %743 = vmatprep.subr.mxu0 %v680
    %744 = vmatpush1.msra.mxu0 %v679
    %745 = vmatprep.subr.mxu0 %v682
    %746 = vmatpush1.msra.mxu0 %v681
    %747 = vmatprep.subr.mxu0 %v684
    %748 = vmatpush1.msra.mxu0 %v683
    %749 = vmatprep.subr.mxu0 %v686
    %750 = vmatpush1.msra.mxu0 %v685
    %751 = vmatprep.subr.mxu0 %v688
    %752 = vmatpush1.msra.mxu0 %v687
    %753 = vmatprep.subr.mxu0 %v690
    %754 = vmatpush1.msra.mxu0 %v689
    %755 = vmatprep.subr.mxu0 %v692
    %756 = vmatpush1.msra.mxu0 %v691
    %757 = vmatprep.subr.mxu0 %v694
    %758 = vmatpush1.msra.mxu0 %v693
    %759 = vmatprep.mubr.f32.mxu0 %v189
    %760 = vmatmul.mubr.f32.gmra.mrb[0].mxu0 %v187
    %v761 = vpop.f32.mrb[0].mxu0
    %v762 = vadd.f32 0.0, %v761
    %v763 = vpop.f32.mrb[0].mxu0
    %v764 = vadd.f32 0.0, %v763
    %765 = vdwg.mxu0
    %s766 = scalar_lea.vmem [#allocation2], 3072
    %v767 = vld [vmem:[%s766] sm:$0xff]
    %v768 = vld [vmem:[%s766 + $0x8] sm:$0xff]
    %v769 = vld [vmem:[%s766 + $0x10] sm:$0xff]
    %v770 = vld [vmem:[%s766 + $0x18] sm:$0xff]
    %v771 = vld [vmem:[%s766 + $0x20] sm:$0xff]
    %v772 = vld [vmem:[%s766 + $0x28] sm:$0xff]
    %v773 = vld [vmem:[%s766 + $0x30] sm:$0xff]
    %v774 = vld [vmem:[%s766 + $0x38] sm:$0xff]
    %v775 = vld [vmem:[%s766 + $0x40] sm:$0xff]
    %v776 = vld [vmem:[%s766 + $0x48] sm:$0xff]
    %v777 = vld [vmem:[%s766 + $0x50] sm:$0xff]
    %v778 = vld [vmem:[%s766 + $0x58] sm:$0xff]
    %v779 = vld [vmem:[%s766 + $0x60] sm:$0xff]
    %v780 = vld [vmem:[%s766 + $0x68] sm:$0xff]
    %v781 = vld [vmem:[%s766 + $0x70] sm:$0xff]
    %v782 = vld [vmem:[%s766 + $0x78] sm:$0xff]
    %v783 = vld [vmem:[%s766 + $0x80] sm:$0xff]
    %v784 = vld [vmem:[%s766 + $0x88] sm:$0xff]
    %v785 = vld [vmem:[%s766 + $0x90] sm:$0xff]
    %v786 = vld [vmem:[%s766 + $0x98] sm:$0xff]
    %v787 = vld [vmem:[%s766 + $0xa0] sm:$0xff]
    %v788 = vld [vmem:[%s766 + $0xa8] sm:$0xff]
    %v789 = vld [vmem:[%s766 + $0xb0] sm:$0xff]
    %v790 = vld [vmem:[%s766 + $0xb8] sm:$0xff]
    %v791 = vld [vmem:[%s766 + $0xc0] sm:$0xff]
    %v792 = vld [vmem:[%s766 + $0xc8] sm:$0xff]
    %v793 = vld [vmem:[%s766 + $0xd0] sm:$0xff]
    %v794 = vld [vmem:[%s766 + $0xd8] sm:$0xff]
    %v795 = vld [vmem:[%s766 + $0xe0] sm:$0xff]
    %v796 = vld [vmem:[%s766 + $0xe8] sm:$0xff]
    %v797 = vld [vmem:[%s766 + $0xf0] sm:$0xff]
    %v798 = vld [vmem:[%s766 + $0xf8] sm:$0xff]
    %v799 = vld [vmem:[%s766 + $0x100] sm:$0xff]
    %v800 = vld [vmem:[%s766 + $0x108] sm:$0xff]
    %v801 = vld [vmem:[%s766 + $0x110] sm:$0xff]
    %v802 = vld [vmem:[%s766 + $0x118] sm:$0xff]
    %v803 = vld [vmem:[%s766 + $0x120] sm:$0xff]
    %v804 = vld [vmem:[%s766 + $0x128] sm:$0xff]
    %v805 = vld [vmem:[%s766 + $0x130] sm:$0xff]
    %v806 = vld [vmem:[%s766 + $0x138] sm:$0xff]
    %v807 = vld [vmem:[%s766 + $0x140] sm:$0xff]
    %v808 = vld [vmem:[%s766 + $0x148] sm:$0xff]
    %v809 = vld [vmem:[%s766 + $0x150] sm:$0xff]
    %v810 = vld [vmem:[%s766 + $0x158] sm:$0xff]
    %v811 = vld [vmem:[%s766 + $0x160] sm:$0xff]
    %v812 = vld [vmem:[%s766 + $0x168] sm:$0xff]
    %v813 = vld [vmem:[%s766 + $0x170] sm:$0xff]
    %v814 = vld [vmem:[%s766 + $0x178] sm:$0xff]
    %v815 = vld [vmem:[%s766 + $0x180] sm:$0xff]
    %v816 = vld [vmem:[%s766 + $0x188] sm:$0xff]
    %v817 = vld [vmem:[%s766 + $0x190] sm:$0xff]
    %v818 = vld [vmem:[%s766 + $0x198] sm:$0xff]
    %v819 = vld [vmem:[%s766 + $0x1a0] sm:$0xff]
    %v820 = vld [vmem:[%s766 + $0x1a8] sm:$0xff]
    %v821 = vld [vmem:[%s766 + $0x1b0] sm:$0xff]
    %v822 = vld [vmem:[%s766 + $0x1b8] sm:$0xff]
    %v823 = vld [vmem:[%s766 + $0x1c0] sm:$0xff]
    %v824 = vld [vmem:[%s766 + $0x1c8] sm:$0xff]
    %v825 = vld [vmem:[%s766 + $0x1d0] sm:$0xff]
    %v826 = vld [vmem:[%s766 + $0x1d8] sm:$0xff]
    %v827 = vld [vmem:[%s766 + $0x1e0] sm:$0xff]
    %v828 = vld [vmem:[%s766 + $0x1e8] sm:$0xff]
    %v829 = vld [vmem:[%s766 + $0x1f0] sm:$0xff]
    %v830 = vld [vmem:[%s766 + $0x1f8] sm:$0xff]
    %s831 = scalar_lea.vmem [#allocation2], 3584
    %v832 = vld [vmem:[%s831] sm:$0xff]
    %v833 = vld [vmem:[%s831 + $0x8] sm:$0xff]
    %v834 = vld [vmem:[%s831 + $0x10] sm:$0xff]
    %v835 = vld [vmem:[%s831 + $0x18] sm:$0xff]
    %v836 = vld [vmem:[%s831 + $0x20] sm:$0xff]
    %v837 = vld [vmem:[%s831 + $0x28] sm:$0xff]
    %v838 = vld [vmem:[%s831 + $0x30] sm:$0xff]
    %v839 = vld [vmem:[%s831 + $0x38] sm:$0xff]
    %v840 = vld [vmem:[%s831 + $0x40] sm:$0xff]
    %v841 = vld [vmem:[%s831 + $0x48] sm:$0xff]
    %v842 = vld [vmem:[%s831 + $0x50] sm:$0xff]
    %v843 = vld [vmem:[%s831 + $0x58] sm:$0xff]
    %v844 = vld [vmem:[%s831 + $0x60] sm:$0xff]
    %v845 = vld [vmem:[%s831 + $0x68] sm:$0xff]
    %v846 = vld [vmem:[%s831 + $0x70] sm:$0xff]
    %v847 = vld [vmem:[%s831 + $0x78] sm:$0xff]
    %v848 = vld [vmem:[%s831 + $0x80] sm:$0xff]
    %v849 = vld [vmem:[%s831 + $0x88] sm:$0xff]
    %v850 = vld [vmem:[%s831 + $0x90] sm:$0xff]
    %v851 = vld [vmem:[%s831 + $0x98] sm:$0xff]
    %v852 = vld [vmem:[%s831 + $0xa0] sm:$0xff]
    %v853 = vld [vmem:[%s831 + $0xa8] sm:$0xff]
    %v854 = vld [vmem:[%s831 + $0xb0] sm:$0xff]
    %v855 = vld [vmem:[%s831 + $0xb8] sm:$0xff]
    %v856 = vld [vmem:[%s831 + $0xc0] sm:$0xff]
    %v857 = vld [vmem:[%s831 + $0xc8] sm:$0xff]
    %v858 = vld [vmem:[%s831 + $0xd0] sm:$0xff]
    %v859 = vld [vmem:[%s831 + $0xd8] sm:$0xff]
    %v860 = vld [vmem:[%s831 + $0xe0] sm:$0xff]
    %v861 = vld [vmem:[%s831 + $0xe8] sm:$0xff]
    %v862 = vld [vmem:[%s831 + $0xf0] sm:$0xff]
    %v863 = vld [vmem:[%s831 + $0xf8] sm:$0xff]
    %v864 = vld [vmem:[%s831 + $0x100] sm:$0xff]
    %v865 = vld [vmem:[%s831 + $0x108] sm:$0xff]
    %v866 = vld [vmem:[%s831 + $0x110] sm:$0xff]
    %v867 = vld [vmem:[%s831 + $0x118] sm:$0xff]
    %v868 = vld [vmem:[%s831 + $0x120] sm:$0xff]
    %v869 = vld [vmem:[%s831 + $0x128] sm:$0xff]
    %v870 = vld [vmem:[%s831 + $0x130] sm:$0xff]
    %v871 = vld [vmem:[%s831 + $0x138] sm:$0xff]
    %v872 = vld [vmem:[%s831 + $0x140] sm:$0xff]
    %v873 = vld [vmem:[%s831 + $0x148] sm:$0xff]
    %v874 = vld [vmem:[%s831 + $0x150] sm:$0xff]
    %v875 = vld [vmem:[%s831 + $0x158] sm:$0xff]
    %v876 = vld [vmem:[%s831 + $0x160] sm:$0xff]
    %v877 = vld [vmem:[%s831 + $0x168] sm:$0xff]
    %v878 = vld [vmem:[%s831 + $0x170] sm:$0xff]
    %v879 = vld [vmem:[%s831 + $0x178] sm:$0xff]
    %v880 = vld [vmem:[%s831 + $0x180] sm:$0xff]
    %v881 = vld [vmem:[%s831 + $0x188] sm:$0xff]
    %v882 = vld [vmem:[%s831 + $0x190] sm:$0xff]
    %v883 = vld [vmem:[%s831 + $0x198] sm:$0xff]
    %v884 = vld [vmem:[%s831 + $0x1a0] sm:$0xff]
    %v885 = vld [vmem:[%s831 + $0x1a8] sm:$0xff]
    %v886 = vld [vmem:[%s831 + $0x1b0] sm:$0xff]
    %v887 = vld [vmem:[%s831 + $0x1b8] sm:$0xff]
    %v888 = vld [vmem:[%s831 + $0x1c0] sm:$0xff]
    %v889 = vld [vmem:[%s831 + $0x1c8] sm:$0xff]
    %v890 = vld [vmem:[%s831 + $0x1d0] sm:$0xff]
    %v891 = vld [vmem:[%s831 + $0x1d8] sm:$0xff]
    %v892 = vld [vmem:[%s831 + $0x1e0] sm:$0xff]
    %v893 = vld [vmem:[%s831 + $0x1e8] sm:$0xff]
    %v894 = vld [vmem:[%s831 + $0x1f0] sm:$0xff]
    %v895 = vld [vmem:[%s831 + $0x1f8] sm:$0xff]
    %896 = vmatprep.subr.mxu0 %v833
    %897 = vmatpush1.msra.mxu0 %v832
    %898 = vmatprep.subr.mxu0 %v835
    %899 = vmatpush1.msra.mxu0 %v834
    %900 = vmatprep.subr.mxu0 %v837
    %901 = vmatpush1.msra.mxu0 %v836
    %902 = vmatprep.subr.mxu0 %v839
    %903 = vmatpush1.msra.mxu0 %v838
    %904 = vmatprep.subr.mxu0 %v841
    %905 = vmatpush1.msra.mxu0 %v840
    %906 = vmatprep.subr.mxu0 %v843
    %907 = vmatpush1.msra.mxu0 %v842
    %908 = vmatprep.subr.mxu0 %v845
    %909 = vmatpush1.msra.mxu0 %v844
    %910 = vmatprep.subr.mxu0 %v847
    %911 = vmatpush1.msra.mxu0 %v846
    %912 = vmatprep.subr.mxu0 %v849
    %913 = vmatpush1.msra.mxu0 %v848
    %914 = vmatprep.subr.mxu0 %v851
    %915 = vmatpush1.msra.mxu0 %v850
    %916 = vmatprep.subr.mxu0 %v853
    %917 = vmatpush1.msra.mxu0 %v852
    %918 = vmatprep.subr.mxu0 %v855
    %919 = vmatpush1.msra.mxu0 %v854
    %920 = vmatprep.subr.mxu0 %v857
    %921 = vmatpush1.msra.mxu0 %v856
    %922 = vmatprep.subr.mxu0 %v859
    %923 = vmatpush1.msra.mxu0 %v858
    %924 = vmatprep.subr.mxu0 %v861
    %925 = vmatpush1.msra.mxu0 %v860
    %926 = vmatprep.subr.mxu0 %v863
    %927 = vmatpush1.msra.mxu0 %v862
    %928 = vmatprep.subr.mxu0 %v865
    %929 = vmatpush1.msra.mxu0 %v864
    %930 = vmatprep.subr.mxu0 %v867
    %931 = vmatpush1.msra.mxu0 %v866
    %932 = vmatprep.subr.mxu0 %v869
    %933 = vmatpush1.msra.mxu0 %v868
    %934 = vmatprep.subr.mxu0 %v871
    %935 = vmatpush1.msra.mxu0 %v870
    %936 = vmatprep.subr.mxu0 %v873
    %937 = vmatpush1.msra.mxu0 %v872
    %938 = vmatprep.subr.mxu0 %v875
    %939 = vmatpush1.msra.mxu0 %v874
    %940 = vmatprep.subr.mxu0 %v877
    %941 = vmatpush1.msra.mxu0 %v876
    %942 = vmatprep.subr.mxu0 %v879
    %943 = vmatpush1.msra.mxu0 %v878
    %944 = vmatprep.subr.mxu0 %v881
    %945 = vmatpush1.msra.mxu0 %v880
    %946 = vmatprep.subr.mxu0 %v883
    %947 = vmatpush1.msra.mxu0 %v882
    %948 = vmatprep.subr.mxu0 %v885
    %949 = vmatpush1.msra.mxu0 %v884
    %950 = vmatprep.subr.mxu0 %v887
    %951 = vmatpush1.msra.mxu0 %v886
    %952 = vmatprep.subr.mxu0 %v889
    %953 = vmatpush1.msra.mxu0 %v888
    %954 = vmatprep.subr.mxu0 %v891
    %955 = vmatpush1.msra.mxu0 %v890
    %956 = vmatprep.subr.mxu0 %v893
    %957 = vmatpush1.msra.mxu0 %v892
    %958 = vmatprep.subr.mxu0 %v895
    %959 = vmatpush1.msra.mxu0 %v894
    %960 = vmatprep.mubr.f32.mxu0 %v629
    %961 = vmatmul.mubr.f32.gmra.mrb[0].mxu0 %v628
    %v962 = vpop.f32.mrb[0].mxu0
    %v963 = vadd.f32 0.0, %v962
    %v964 = vpop.f32.mrb[0].mxu0
    %v965 = vadd.f32 0.0, %v964
    %966 = vdwg.mxu0
    %967 = vmatprep.subr.mxu0 %v768
    %968 = vmatpush1.msra.mxu0 %v767
    %969 = vmatprep.subr.mxu0 %v770
    %970 = vmatpush1.msra.mxu0 %v769
    %971 = vmatprep.subr.mxu0 %v772
    %972 = vmatpush1.msra.mxu0 %v771
    %973 = vmatprep.subr.mxu0 %v774
    %974 = vmatpush1.msra.mxu0 %v773
    %975 = vmatprep.subr.mxu0 %v776
    %976 = vmatpush1.msra.mxu0 %v775
    %977 = vmatprep.subr.mxu0 %v778
    %978 = vmatpush1.msra.mxu0 %v777
    %979 = vmatprep.subr.mxu0 %v780
    %980 = vmatpush1.msra.mxu0 %v779
    %981 = vmatprep.subr.mxu0 %v782
    %982 = vmatpush1.msra.mxu0 %v781
    %983 = vmatprep.subr.mxu0 %v784
    %984 = vmatpush1.msra.mxu0 %v783
    %985 = vmatprep.subr.mxu0 %v786
    %986 = vmatpush1.msra.mxu0 %v785
    %987 = vmatprep.subr.mxu0 %v788
    %988 = vmatpush1.msra.mxu0 %v787
    %989 = vmatprep.subr.mxu0 %v790
    %990 = vmatpush1.msra.mxu0 %v789
    %991 = vmatprep.subr.mxu0 %v792
    %992 = vmatpush1.msra.mxu0 %v791
    %993 = vmatprep.subr.mxu0 %v794
    %994 = vmatpush1.msra.mxu0 %v793
    %995 = vmatprep.subr.mxu0 %v796
    %996 = vmatpush1.msra.mxu0 %v795
    %997 = vmatprep.subr.mxu0 %v798
    %998 = vmatpush1.msra.mxu0 %v797
    %999 = vmatprep.subr.mxu0 %v800
    %1000 = vmatpush1.msra.mxu0 %v799
    %1001 = vmatprep.subr.mxu0 %v802
    %1002 = vmatpush1.msra.mxu0 %v801
    %1003 = vmatprep.subr.mxu0 %v804
    %1004 = vmatpush1.msra.mxu0 %v803
    %1005 = vmatprep.subr.mxu0 %v806
    %1006 = vmatpush1.msra.mxu0 %v805
    %1007 = vmatprep.subr.mxu0 %v808
    %1008 = vmatpush1.msra.mxu0 %v807
    %1009 = vmatprep.subr.mxu0 %v810
    %1010 = vmatpush1.msra.mxu0 %v809
    %1011 = vmatprep.subr.mxu0 %v812
    %1012 = vmatpush1.msra.mxu0 %v811
    %1013 = vmatprep.subr.mxu0 %v814
    %1014 = vmatpush1.msra.mxu0 %v813
    %1015 = vmatprep.subr.mxu0 %v816
    %1016 = vmatpush1.msra.mxu0 %v815
    %1017 = vmatprep.subr.mxu0 %v818
    %1018 = vmatpush1.msra.mxu0 %v817
    %1019 = vmatprep.subr.mxu0 %v820
    %1020 = vmatpush1.msra.mxu0 %v819
    %1021 = vmatprep.subr.mxu0 %v822
    %1022 = vmatpush1.msra.mxu0 %v821
    %1023 = vmatprep.subr.mxu0 %v824
    %1024 = vmatpush1.msra.mxu0 %v823
    %1025 = vmatprep.subr.mxu0 %v826
    %1026 = vmatpush1.msra.mxu0 %v825
    %1027 = vmatprep.subr.mxu0 %v828
    %1028 = vmatpush1.msra.mxu0 %v827
    %1029 = vmatprep.subr.mxu0 %v830
    %1030 = vmatpush1.msra.mxu0 %v829
    %1031 = vmatprep.mubr.f32.mxu0 %v764
    %1032 = vmatmul.mubr.f32.gmra.mrb[0].mxu0 %v762
    %v1033 = vpop.f32.mrb[0].mxu0
    %v1034 = vadd.f32 %v963, %v1033
    %v1035 = vpop.f32.mrb[0].mxu0
    %v1036 = vadd.f32 %v965, %v1035
    %1037 = vdwg.mxu0
    %s1038 = scalar_lea.vmem [#allocation4], 4
    %v1039 = vld [vmem:[%s1038] sm:$0x3]
    %v1041 = vlaneseq
    %v1042 = vshrl.u32 %v1041, 7
    %v1043 = vsub.s32 0, %v1042
    %v1044 = vrot.slane %v1039, %v1043
    %v1045 = vlaneseq
    %v1046 = vshrl.u32 %v1045, 7
    %v1047 = vsub.s32 1, %v1046
    %v1048 = vrot.slane %v1039, %v1047
    %v1051 = vadd.f32 %v1034, %v1044
    %v1052 = vadd.f32 %v1036, %v1048
    %vm1053 = vcmp.le.f32.partialorder %v1051, 0.0
    %vm1054 = vcmp.le.f32.partialorder %v1052, 0.0
    %vm1055 = vcmp.lt.f32.partialorder %v1051, 1.0
    %vm1056 = vcmp.lt.f32.partialorder %v1052, 1.0
    %v1057 = vmul.f32 %v1051, 0.5
    %v1058 = vmul.f32 %v1052, 0.5
    %v1059 = vmul.f32 %v1057, %v1051
    %v1060 = vmul.f32 %v1058, %v1052
    %v1061 = vsub.f32 %v1051, 0.5
    %v1062 = vsub.f32 %v1052, 0.5
    %v1063 = vsel %vm1055, %v1059, %v1061
    %v1064 = vsel %vm1056, %v1060, %v1062
    %v1065 = vsel %vm1053, 0.0, %v1063
    %v1066 = vsel %vm1054, 0.0, %v1064
    %s1067 = scalar_lea.vmem [#allocation2], 4096
    %v1068 = vld [vmem:[%s1067] sm:$0xff]
    %v1069 = vld [vmem:[%s1067 + $0x8] sm:$0xff]
    %v1070 = vld [vmem:[%s1067 + $0x10] sm:$0xff]
    %v1071 = vld [vmem:[%s1067 + $0x18] sm:$0xff]
    %v1072 = vld [vmem:[%s1067 + $0x20] sm:$0xff]
    %v1073 = vld [vmem:[%s1067 + $0x28] sm:$0xff]
    %v1074 = vld [vmem:[%s1067 + $0x30] sm:$0xff]
    %v1075 = vld [vmem:[%s1067 + $0x38] sm:$0xff]
    %v1076 = vld [vmem:[%s1067 + $0x40] sm:$0xff]
    %v1077 = vld [vmem:[%s1067 + $0x48] sm:$0xff]
    %v1078 = vld [vmem:[%s1067 + $0x50] sm:$0xff]
    %v1079 = vld [vmem:[%s1067 + $0x58] sm:$0xff]
    %v1080 = vld [vmem:[%s1067 + $0x60] sm:$0xff]
    %v1081 = vld [vmem:[%s1067 + $0x68] sm:$0xff]
    %v1082 = vld [vmem:[%s1067 + $0x70] sm:$0xff]
    %v1083 = vld [vmem:[%s1067 + $0x78] sm:$0xff]
    %v1084 = vld [vmem:[%s1067 + $0x80] sm:$0xff]
    %v1085 = vld [vmem:[%s1067 + $0x88] sm:$0xff]
    %v1086 = vld [vmem:[%s1067 + $0x90] sm:$0xff]
    %v1087 = vld [vmem:[%s1067 + $0x98] sm:$0xff]
    %v1088 = vld [vmem:[%s1067 + $0xa0] sm:$0xff]
    %v1089 = vld [vmem:[%s1067 + $0xa8] sm:$0xff]
    %v1090 = vld [vmem:[%s1067 + $0xb0] sm:$0xff]
    %v1091 = vld [vmem:[%s1067 + $0xb8] sm:$0xff]
    %v1092 = vld [vmem:[%s1067 + $0xc0] sm:$0xff]
    %v1093 = vld [vmem:[%s1067 + $0xc8] sm:$0xff]
    %v1094 = vld [vmem:[%s1067 + $0xd0] sm:$0xff]
    %v1095 = vld [vmem:[%s1067 + $0xd8] sm:$0xff]
    %v1096 = vld [vmem:[%s1067 + $0xe0] sm:$0xff]
    %v1097 = vld [vmem:[%s1067 + $0xe8] sm:$0xff]
    %v1098 = vld [vmem:[%s1067 + $0xf0] sm:$0xff]
    %v1099 = vld [vmem:[%s1067 + $0xf8] sm:$0xff]
    %v1100 = vld [vmem:[%s1067 + $0x100] sm:$0xff]
    %v1101 = vld [vmem:[%s1067 + $0x108] sm:$0xff]
    %v1102 = vld [vmem:[%s1067 + $0x110] sm:$0xff]
    %v1103 = vld [vmem:[%s1067 + $0x118] sm:$0xff]
    %v1104 = vld [vmem:[%s1067 + $0x120] sm:$0xff]
    %v1105 = vld [vmem:[%s1067 + $0x128] sm:$0xff]
    %v1106 = vld [vmem:[%s1067 + $0x130] sm:$0xff]
    %v1107 = vld [vmem:[%s1067 + $0x138] sm:$0xff]
    %v1108 = vld [vmem:[%s1067 + $0x140] sm:$0xff]
    %v1109 = vld [vmem:[%s1067 + $0x148] sm:$0xff]
    %v1110 = vld [vmem:[%s1067 + $0x150] sm:$0xff]
    %v1111 = vld [vmem:[%s1067 + $0x158] sm:$0xff]
    %v1112 = vld [vmem:[%s1067 + $0x160] sm:$0xff]
    %v1113 = vld [vmem:[%s1067 + $0x168] sm:$0xff]
    %v1114 = vld [vmem:[%s1067 + $0x170] sm:$0xff]
    %v1115 = vld [vmem:[%s1067 + $0x178] sm:$0xff]
    %v1116 = vld [vmem:[%s1067 + $0x180] sm:$0xff]
    %v1117 = vld [vmem:[%s1067 + $0x188] sm:$0xff]
    %v1118 = vld [vmem:[%s1067 + $0x190] sm:$0xff]
    %v1119 = vld [vmem:[%s1067 + $0x198] sm:$0xff]
    %v1120 = vld [vmem:[%s1067 + $0x1a0] sm:$0xff]
    %v1121 = vld [vmem:[%s1067 + $0x1a8] sm:$0xff]
    %v1122 = vld [vmem:[%s1067 + $0x1b0] sm:$0xff]
    %v1123 = vld [vmem:[%s1067 + $0x1b8] sm:$0xff]
    %v1124 = vld [vmem:[%s1067 + $0x1c0] sm:$0xff]
    %v1125 = vld [vmem:[%s1067 + $0x1c8] sm:$0xff]
    %v1126 = vld [vmem:[%s1067 + $0x1d0] sm:$0xff]
    %v1127 = vld [vmem:[%s1067 + $0x1d8] sm:$0xff]
    %v1128 = vld [vmem:[%s1067 + $0x1e0] sm:$0xff]
    %v1129 = vld [vmem:[%s1067 + $0x1e8] sm:$0xff]
    %v1130 = vld [vmem:[%s1067 + $0x1f0] sm:$0xff]
    %v1131 = vld [vmem:[%s1067 + $0x1f8] sm:$0xff]
    %1132 = vmatprep.subr.mxu0 %v1069
    %1133 = vmatpush1.msra.mxu0 %v1068
    %1134 = vmatprep.subr.mxu0 %v1071
    %1135 = vmatpush1.msra.mxu0 %v1070
    %1136 = vmatprep.subr.mxu0 %v1073
    %1137 = vmatpush1.msra.mxu0 %v1072
    %1138 = vmatprep.subr.mxu0 %v1075
    %1139 = vmatpush1.msra.mxu0 %v1074
    %1140 = vmatprep.subr.mxu0 %v1077
    %1141 = vmatpush1.msra.mxu0 %v1076
    %1142 = vmatprep.subr.mxu0 %v1079
    %1143 = vmatpush1.msra.mxu0 %v1078
    %1144 = vmatprep.subr.mxu0 %v1081
    %1145 = vmatpush1.msra.mxu0 %v1080
    %1146 = vmatprep.subr.mxu0 %v1083
    %1147 = vmatpush1.msra.mxu0 %v1082
    %1148 = vmatprep.subr.mxu0 %v1085
    %1149 = vmatpush1.msra.mxu0 %v1084
    %1150 = vmatprep.subr.mxu0 %v1087
    %1151 = vmatpush1.msra.mxu0 %v1086
    %1152 = vmatprep.subr.mxu0 %v1089
    %1153 = vmatpush1.msra.mxu0 %v1088
    %1154 = vmatprep.subr.mxu0 %v1091
    %1155 = vmatpush1.msra.mxu0 %v1090
    %1156 = vmatprep.subr.mxu0 %v1093
    %1157 = vmatpush1.msra.mxu0 %v1092
    %1158 = vmatprep.subr.mxu0 %v1095
    %1159 = vmatpush1.msra.mxu0 %v1094
    %1160 = vmatprep.subr.mxu0 %v1097
    %1161 = vmatpush1.msra.mxu0 %v1096
    %1162 = vmatprep.subr.mxu0 %v1099
    %1163 = vmatpush1.msra.mxu0 %v1098
    %1164 = vmatprep.subr.mxu0 %v1101
    %1165 = vmatpush1.msra.mxu0 %v1100
    %1166 = vmatprep.subr.mxu0 %v1103
    %1167 = vmatpush1.msra.mxu0 %v1102
    %1168 = vmatprep.subr.mxu0 %v1105
    %1169 = vmatpush1.msra.mxu0 %v1104
    %1170 = vmatprep.subr.mxu0 %v1107
    %1171 = vmatpush1.msra.mxu0 %v1106
    %1172 = vmatprep.subr.mxu0 %v1109
    %1173 = vmatpush1.msra.mxu0 %v1108
    %1174 = vmatprep.subr.mxu0 %v1111
    %1175 = vmatpush1.msra.mxu0 %v1110
    %1176 = vmatprep.subr.mxu0 %v1113
    %1177 = vmatpush1.msra.mxu0 %v1112
    %1178 = vmatprep.subr.mxu0 %v1115
    %1179 = vmatpush1.msra.mxu0 %v1114
    %1180 = vmatprep.subr.mxu0 %v1117
    %1181 = vmatpush1.msra.mxu0 %v1116
    %1182 = vmatprep.subr.mxu0 %v1119
    %1183 = vmatpush1.msra.mxu0 %v1118
    %1184 = vmatprep.subr.mxu0 %v1121
    %1185 = vmatpush1.msra.mxu0 %v1120
    %1186 = vmatprep.subr.mxu0 %v1123
    %1187 = vmatpush1.msra.mxu0 %v1122
    %1188 = vmatprep.subr.mxu0 %v1125
    %1189 = vmatpush1.msra.mxu0 %v1124
    %1190 = vmatprep.subr.mxu0 %v1127
    %1191 = vmatpush1.msra.mxu0 %v1126
    %1192 = vmatprep.subr.mxu0 %v1129
    %1193 = vmatpush1.msra.mxu0 %v1128
    %1194 = vmatprep.subr.mxu0 %v1131
    %1195 = vmatpush1.msra.mxu0 %v1130
    %1196 = vmatprep.mubr.f32.mxu0 %v1066
    %1197 = vmatmul.mubr.f32.gmra.mrb[0].mxu0 %v1065
    %v1198 = vpop.f32.mrb[0].mxu0
    %v1199 = vadd.f32 0.0, %v1198
    %v1200 = vpop.f32.mrb[0].mxu0
    %v1201 = vadd.f32 0.0, %v1200
    %1202 = vdwg.mxu0
    %s1203 = scalar_lea.vmem [#allocation2], 4608
    %v1204 = vld [vmem:[%s1203] sm:$0xff]
    %v1205 = vld [vmem:[%s1203 + $0x8] sm:$0xff]
    %v1206 = vld [vmem:[%s1203 + $0x10] sm:$0xff]
    %v1207 = vld [vmem:[%s1203 + $0x18] sm:$0xff]
    %v1208 = vld [vmem:[%s1203 + $0x20] sm:$0xff]
    %v1209 = vld [vmem:[%s1203 + $0x28] sm:$0xff]
    %v1210 = vld [vmem:[%s1203 + $0x30] sm:$0xff]
    %v1211 = vld [vmem:[%s1203 + $0x38] sm:$0xff]
    %v1212 = vld [vmem:[%s1203 + $0x40] sm:$0xff]
    %v1213 = vld [vmem:[%s1203 + $0x48] sm:$0xff]
    %v1214 = vld [vmem:[%s1203 + $0x50] sm:$0xff]
    %v1215 = vld [vmem:[%s1203 + $0x58] sm:$0xff]
    %v1216 = vld [vmem:[%s1203 + $0x60] sm:$0xff]
    %v1217 = vld [vmem:[%s1203 + $0x68] sm:$0xff]
    %v1218 = vld [vmem:[%s1203 + $0x70] sm:$0xff]
    %v1219 = vld [vmem:[%s1203 + $0x78] sm:$0xff]
    %v1220 = vld [vmem:[%s1203 + $0x80] sm:$0xff]
    %v1221 = vld [vmem:[%s1203 + $0x88] sm:$0xff]
    %v1222 = vld [vmem:[%s1203 + $0x90] sm:$0xff]
    %v1223 = vld [vmem:[%s1203 + $0x98] sm:$0xff]
    %v1224 = vld [vmem:[%s1203 + $0xa0] sm:$0xff]
    %v1225 = vld [vmem:[%s1203 + $0xa8] sm:$0xff]
    %v1226 = vld [vmem:[%s1203 + $0xb0] sm:$0xff]
    %v1227 = vld [vmem:[%s1203 + $0xb8] sm:$0xff]
    %v1228 = vld [vmem:[%s1203 + $0xc0] sm:$0xff]
    %v1229 = vld [vmem:[%s1203 + $0xc8] sm:$0xff]
    %v1230 = vld [vmem:[%s1203 + $0xd0] sm:$0xff]
    %v1231 = vld [vmem:[%s1203 + $0xd8] sm:$0xff]
    %v1232 = vld [vmem:[%s1203 + $0xe0] sm:$0xff]
    %v1233 = vld [vmem:[%s1203 + $0xe8] sm:$0xff]
    %v1234 = vld [vmem:[%s1203 + $0xf0] sm:$0xff]
    %v1235 = vld [vmem:[%s1203 + $0xf8] sm:$0xff]
    %v1236 = vld [vmem:[%s1203 + $0x100] sm:$0xff]
    %v1237 = vld [vmem:[%s1203 + $0x108] sm:$0xff]
    %v1238 = vld [vmem:[%s1203 + $0x110] sm:$0xff]
    %v1239 = vld [vmem:[%s1203 + $0x118] sm:$0xff]
    %v1240 = vld [vmem:[%s1203 + $0x120] sm:$0xff]
    %v1241 = vld [vmem:[%s1203 + $0x128] sm:$0xff]
    %v1242 = vld [vmem:[%s1203 + $0x130] sm:$0xff]
    %v1243 = vld [vmem:[%s1203 + $0x138] sm:$0xff]
    %v1244 = vld [vmem:[%s1203 + $0x140] sm:$0xff]
    %v1245 = vld [vmem:[%s1203 + $0x148] sm:$0xff]
    %v1246 = vld [vmem:[%s1203 + $0x150] sm:$0xff]
    %v1247 = vld [vmem:[%s1203 + $0x158] sm:$0xff]
    %v1248 = vld [vmem:[%s1203 + $0x160] sm:$0xff]
    %v1249 = vld [vmem:[%s1203 + $0x168] sm:$0xff]
    %v1250 = vld [vmem:[%s1203 + $0x170] sm:$0xff]
    %v1251 = vld [vmem:[%s1203 + $0x178] sm:$0xff]
    %v1252 = vld [vmem:[%s1203 + $0x180] sm:$0xff]
    %v1253 = vld [vmem:[%s1203 + $0x188] sm:$0xff]
    %v1254 = vld [vmem:[%s1203 + $0x190] sm:$0xff]
    %v1255 = vld [vmem:[%s1203 + $0x198] sm:$0xff]
    %v1256 = vld [vmem:[%s1203 + $0x1a0] sm:$0xff]
    %v1257 = vld [vmem:[%s1203 + $0x1a8] sm:$0xff]
    %v1258 = vld [vmem:[%s1203 + $0x1b0] sm:$0xff]
    %v1259 = vld [vmem:[%s1203 + $0x1b8] sm:$0xff]
    %v1260 = vld [vmem:[%s1203 + $0x1c0] sm:$0xff]
    %v1261 = vld [vmem:[%s1203 + $0x1c8] sm:$0xff]
    %v1262 = vld [vmem:[%s1203 + $0x1d0] sm:$0xff]
    %v1263 = vld [vmem:[%s1203 + $0x1d8] sm:$0xff]
    %v1264 = vld [vmem:[%s1203 + $0x1e0] sm:$0xff]
    %v1265 = vld [vmem:[%s1203 + $0x1e8] sm:$0xff]
    %v1266 = vld [vmem:[%s1203 + $0x1f0] sm:$0xff]
    %v1267 = vld [vmem:[%s1203 + $0x1f8] sm:$0xff]
    %1268 = vmatprep.subr.mxu0 %v1205
    %1269 = vmatpush1.msra.mxu0 %v1204
    %1270 = vmatprep.subr.mxu0 %v1207
    %1271 = vmatpush1.msra.mxu0 %v1206
    %1272 = vmatprep.subr.mxu0 %v1209
    %1273 = vmatpush1.msra.mxu0 %v1208
    %1274 = vmatprep.subr.mxu0 %v1211
    %1275 = vmatpush1.msra.mxu0 %v1210
    %1276 = vmatprep.subr.mxu0 %v1213
    %1277 = vmatpush1.msra.mxu0 %v1212
    %1278 = vmatprep.subr.mxu0 %v1215
    %1279 = vmatpush1.msra.mxu0 %v1214
    %1280 = vmatprep.subr.mxu0 %v1217
    %1281 = vmatpush1.msra.mxu0 %v1216
    %1282 = vmatprep.subr.mxu0 %v1219
    %1283 = vmatpush1.msra.mxu0 %v1218
    %1284 = vmatprep.subr.mxu0 %v1221
    %1285 = vmatpush1.msra.mxu0 %v1220
    %1286 = vmatprep.subr.mxu0 %v1223
    %1287 = vmatpush1.msra.mxu0 %v1222
    %1288 = vmatprep.subr.mxu0 %v1225
    %1289 = vmatpush1.msra.mxu0 %v1224
    %1290 = vmatprep.subr.mxu0 %v1227
    %1291 = vmatpush1.msra.mxu0 %v1226
    %1292 = vmatprep.subr.mxu0 %v1229
    %1293 = vmatpush1.msra.mxu0 %v1228
    %1294 = vmatprep.subr.mxu0 %v1231
    %1295 = vmatpush1.msra.mxu0 %v1230
    %1296 = vmatprep.subr.mxu0 %v1233
    %1297 = vmatpush1.msra.mxu0 %v1232
    %1298 = vmatprep.subr.mxu0 %v1235
    %1299 = vmatpush1.msra.mxu0 %v1234
    %1300 = vmatprep.subr.mxu0 %v1237
    %1301 = vmatpush1.msra.mxu0 %v1236
    %1302 = vmatprep.subr.mxu0 %v1239
    %1303 = vmatpush1.msra.mxu0 %v1238
    %1304 = vmatprep.subr.mxu0 %v1241
    %1305 = vmatpush1.msra.mxu0 %v1240
    %1306 = vmatprep.subr.mxu0 %v1243
    %1307 = vmatpush1.msra.mxu0 %v1242
    %1308 = vmatprep.subr.mxu0 %v1245
    %1309 = vmatpush1.msra.mxu0 %v1244
    %1310 = vmatprep.subr.mxu0 %v1247
    %1311 = vmatpush1.msra.mxu0 %v1246
    %1312 = vmatprep.subr.mxu0 %v1249
    %1313 = vmatpush1.msra.mxu0 %v1248
    %1314 = vmatprep.subr.mxu0 %v1251
    %1315 = vmatpush1.msra.mxu0 %v1250
    %1316 = vmatprep.subr.mxu0 %v1253
    %1317 = vmatpush1.msra.mxu0 %v1252
    %1318 = vmatprep.subr.mxu0 %v1255
    %1319 = vmatpush1.msra.mxu0 %v1254
    %1320 = vmatprep.subr.mxu0 %v1257
    %1321 = vmatpush1.msra.mxu0 %v1256
    %1322 = vmatprep.subr.mxu0 %v1259
    %1323 = vmatpush1.msra.mxu0 %v1258
    %1324 = vmatprep.subr.mxu0 %v1261
    %1325 = vmatpush1.msra.mxu0 %v1260
    %1326 = vmatprep.subr.mxu0 %v1263
    %1327 = vmatpush1.msra.mxu0 %v1262
    %1328 = vmatprep.subr.mxu0 %v1265
    %1329 = vmatpush1.msra.mxu0 %v1264
    %1330 = vmatprep.subr.mxu0 %v1267
    %1331 = vmatpush1.msra.mxu0 %v1266
    %1332 = vmatprep.mubr.f32.mxu0 %v1066
    %1333 = vmatmul.mubr.f32.gmra.mrb[0].mxu0 %v1065
    %v1334 = vpop.f32.mrb[0].mxu0
    %v1335 = vadd.f32 0.0, %v1334
    %v1336 = vpop.f32.mrb[0].mxu0
    %v1337 = vadd.f32 0.0, %v1336
    %1338 = vdwg.mxu0
    %v1339 = vsub.f32 %v628, %v1335
    %v1340 = vsub.f32 %v629, %v1337
    %s1341 = scalar_lea.vmem [#allocation2], 2048
    %v1342 = vld [vmem:[%s1341] sm:$0xff]
    %v1343 = vld [vmem:[%s1341 + $0x8] sm:$0xff]
    %v1344 = vld [vmem:[%s1341 + $0x10] sm:$0xff]
    %v1345 = vld [vmem:[%s1341 + $0x18] sm:$0xff]
    %v1346 = vld [vmem:[%s1341 + $0x20] sm:$0xff]
    %v1347 = vld [vmem:[%s1341 + $0x28] sm:$0xff]
    %v1348 = vld [vmem:[%s1341 + $0x30] sm:$0xff]
    %v1349 = vld [vmem:[%s1341 + $0x38] sm:$0xff]
    %v1350 = vld [vmem:[%s1341 + $0x40] sm:$0xff]
    %v1351 = vld [vmem:[%s1341 + $0x48] sm:$0xff]
    %v1352 = vld [vmem:[%s1341 + $0x50] sm:$0xff]
    %v1353 = vld [vmem:[%s1341 + $0x58] sm:$0xff]
    %v1354 = vld [vmem:[%s1341 + $0x60] sm:$0xff]
    %v1355 = vld [vmem:[%s1341 + $0x68] sm:$0xff]
    %v1356 = vld [vmem:[%s1341 + $0x70] sm:$0xff]
    %v1357 = vld [vmem:[%s1341 + $0x78] sm:$0xff]
    %v1358 = vld [vmem:[%s1341 + $0x80] sm:$0xff]
    %v1359 = vld [vmem:[%s1341 + $0x88] sm:$0xff]
    %v1360 = vld [vmem:[%s1341 + $0x90] sm:$0xff]
    %v1361 = vld [vmem:[%s1341 + $0x98] sm:$0xff]
    %v1362 = vld [vmem:[%s1341 + $0xa0] sm:$0xff]
    %v1363 = vld [vmem:[%s1341 + $0xa8] sm:$0xff]
    %v1364 = vld [vmem:[%s1341 + $0xb0] sm:$0xff]
    %v1365 = vld [vmem:[%s1341 + $0xb8] sm:$0xff]
    %v1366 = vld [vmem:[%s1341 + $0xc0] sm:$0xff]
    %v1367 = vld [vmem:[%s1341 + $0xc8] sm:$0xff]
    %v1368 = vld [vmem:[%s1341 + $0xd0] sm:$0xff]
    %v1369 = vld [vmem:[%s1341 + $0xd8] sm:$0xff]
    %v1370 = vld [vmem:[%s1341 + $0xe0] sm:$0xff]
    %v1371 = vld [vmem:[%s1341 + $0xe8] sm:$0xff]
    %v1372 = vld [vmem:[%s1341 + $0xf0] sm:$0xff]
    %v1373 = vld [vmem:[%s1341 + $0xf8] sm:$0xff]
    %v1374 = vld [vmem:[%s1341 + $0x100] sm:$0xff]
    %v1375 = vld [vmem:[%s1341 + $0x108] sm:$0xff]
    %v1376 = vld [vmem:[%s1341 + $0x110] sm:$0xff]
    %v1377 = vld [vmem:[%s1341 + $0x118] sm:$0xff]
    %v1378 = vld [vmem:[%s1341 + $0x120] sm:$0xff]
    %v1379 = vld [vmem:[%s1341 + $0x128] sm:$0xff]
    %v1380 = vld [vmem:[%s1341 + $0x130] sm:$0xff]
    %v1381 = vld [vmem:[%s1341 + $0x138] sm:$0xff]
    %v1382 = vld [vmem:[%s1341 + $0x140] sm:$0xff]
    %v1383 = vld [vmem:[%s1341 + $0x148] sm:$0xff]
    %v1384 = vld [vmem:[%s1341 + $0x150] sm:$0xff]
    %v1385 = vld [vmem:[%s1341 + $0x158] sm:$0xff]
    %v1386 = vld [vmem:[%s1341 + $0x160] sm:$0xff]
    %v1387 = vld [vmem:[%s1341 + $0x168] sm:$0xff]
    %v1388 = vld [vmem:[%s1341 + $0x170] sm:$0xff]
    %v1389 = vld [vmem:[%s1341 + $0x178] sm:$0xff]
    %v1390 = vld [vmem:[%s1341 + $0x180] sm:$0xff]
    %v1391 = vld [vmem:[%s1341 + $0x188] sm:$0xff]
    %v1392 = vld [vmem:[%s1341 + $0x190] sm:$0xff]
    %v1393 = vld [vmem:[%s1341 + $0x198] sm:$0xff]
    %v1394 = vld [vmem:[%s1341 + $0x1a0] sm:$0xff]
    %v1395 = vld [vmem:[%s1341 + $0x1a8] sm:$0xff]
    %v1396 = vld [vmem:[%s1341 + $0x1b0] sm:$0xff]
    %v1397 = vld [vmem:[%s1341 + $0x1b8] sm:$0xff]
    %v1398 = vld [vmem:[%s1341 + $0x1c0] sm:$0xff]
    %v1399 = vld [vmem:[%s1341 + $0x1c8] sm:$0xff]
    %v1400 = vld [vmem:[%s1341 + $0x1d0] sm:$0xff]
    %v1401 = vld [vmem:[%s1341 + $0x1d8] sm:$0xff]
    %v1402 = vld [vmem:[%s1341 + $0x1e0] sm:$0xff]
    %v1403 = vld [vmem:[%s1341 + $0x1e8] sm:$0xff]
    %v1404 = vld [vmem:[%s1341 + $0x1f0] sm:$0xff]
    %v1405 = vld [vmem:[%s1341 + $0x1f8] sm:$0xff]
    %1406 = vmatprep.subr.mxu0 %v1343
    %1407 = vmatpush1.msra.mxu0 %v1342
    %1408 = vmatprep.subr.mxu0 %v1345
    %1409 = vmatpush1.msra.mxu0 %v1344
    %1410 = vmatprep.subr.mxu0 %v1347
    %1411 = vmatpush1.msra.mxu0 %v1346
    %1412 = vmatprep.subr.mxu0 %v1349
    %1413 = vmatpush1.msra.mxu0 %v1348
    %1414 = vmatprep.subr.mxu0 %v1351
    %1415 = vmatpush1.msra.mxu0 %v1350
    %1416 = vmatprep.subr.mxu0 %v1353
    %1417 = vmatpush1.msra.mxu0 %v1352
    %1418 = vmatprep.subr.mxu0 %v1355
    %1419 = vmatpush1.msra.mxu0 %v1354
    %1420 = vmatprep.subr.mxu0 %v1357
    %1421 = vmatpush1.msra.mxu0 %v1356
    %1422 = vmatprep.subr.mxu0 %v1359
    %1423 = vmatpush1.msra.mxu0 %v1358
    %1424 = vmatprep.subr.mxu0 %v1361
    %1425 = vmatpush1.msra.mxu0 %v1360
    %1426 = vmatprep.subr.mxu0 %v1363
    %1427 = vmatpush1.msra.mxu0 %v1362
    %1428 = vmatprep.subr.mxu0 %v1365
    %1429 = vmatpush1.msra.mxu0 %v1364
    %1430 = vmatprep.subr.mxu0 %v1367
    %1431 = vmatpush1.msra.mxu0 %v1366
    %1432 = vmatprep.subr.mxu0 %v1369
    %1433 = vmatpush1.msra.mxu0 %v1368
    %1434 = vmatprep.subr.mxu0 %v1371
    %1435 = vmatpush1.msra.mxu0 %v1370
    %1436 = vmatprep.subr.mxu0 %v1373
    %1437 = vmatpush1.msra.mxu0 %v1372
    %1438 = vmatprep.subr.mxu0 %v1375
    %1439 = vmatpush1.msra.mxu0 %v1374
    %1440 = vmatprep.subr.mxu0 %v1377
    %1441 = vmatpush1.msra.mxu0 %v1376
    %1442 = vmatprep.subr.mxu0 %v1379
    %1443 = vmatpush1.msra.mxu0 %v1378
    %1444 = vmatprep.subr.mxu0 %v1381
    %1445 = vmatpush1.msra.mxu0 %v1380
    %1446 = vmatprep.subr.mxu0 %v1383
    %1447 = vmatpush1.msra.mxu0 %v1382
    %1448 = vmatprep.subr.mxu0 %v1385
    %1449 = vmatpush1.msra.mxu0 %v1384
    %1450 = vmatprep.subr.mxu0 %v1387
    %1451 = vmatpush1.msra.mxu0 %v1386
    %1452 = vmatprep.subr.mxu0 %v1389
    %1453 = vmatpush1.msra.mxu0 %v1388
    %1454 = vmatprep.subr.mxu0 %v1391
    %1455 = vmatpush1.msra.mxu0 %v1390
    %1456 = vmatprep.subr.mxu0 %v1393
    %1457 = vmatpush1.msra.mxu0 %v1392
    %1458 = vmatprep.subr.mxu0 %v1395
    %1459 = vmatpush1.msra.mxu0 %v1394
    %1460 = vmatprep.subr.mxu0 %v1397
    %1461 = vmatpush1.msra.mxu0 %v1396
    %1462 = vmatprep.subr.mxu0 %v1399
    %1463 = vmatpush1.msra.mxu0 %v1398
    %1464 = vmatprep.subr.mxu0 %v1401
    %1465 = vmatpush1.msra.mxu0 %v1400
    %1466 = vmatprep.subr.mxu0 %v1403
    %1467 = vmatpush1.msra.mxu0 %v1402
    %1468 = vmatprep.subr.mxu0 %v1405
    %1469 = vmatpush1.msra.mxu0 %v1404
    %1470 = vmatprep.mubr.f32.mxu0 %v1340
    %1471 = vmatmul.mubr.f32.gmra.mrb[0].mxu0 %v1339
    %v1472 = vpop.f32.mrb[0].mxu0
    %v1473 = vadd.f32 0.0, %v1472
    %v1474 = vpop.f32.mrb[0].mxu0
    %v1475 = vadd.f32 0.0, %v1474
    %1476 = vdwg.mxu0
    %v1477 = vadd.f32 %v191, %v1473
    %v1478 = vadd.f32 %v192, %v1475
    %v1479 = vsub.f32 %v1199, %v762
    %v1480 = vsub.f32 %v1201, %v764
    %s1481 = scalar_lea.vmem [#allocation2], 5120
    %v1482 = vld [vmem:[%s1481] sm:$0xff]
    %v1483 = vld [vmem:[%s1481 + $0x8] sm:$0xff]
    %v1484 = vld [vmem:[%s1481 + $0x10] sm:$0xff]
    %v1485 = vld [vmem:[%s1481 + $0x18] sm:$0xff]
    %v1486 = vld [vmem:[%s1481 + $0x20] sm:$0xff]
    %v1487 = vld [vmem:[%s1481 + $0x28] sm:$0xff]
    %v1488 = vld [vmem:[%s1481 + $0x30] sm:$0xff]
    %v1489 = vld [vmem:[%s1481 + $0x38] sm:$0xff]
    %v1490 = vld [vmem:[%s1481 + $0x40] sm:$0xff]
    %v1491 = vld [vmem:[%s1481 + $0x48] sm:$0xff]
    %v1492 = vld [vmem:[%s1481 + $0x50] sm:$0xff]
    %v1493 = vld [vmem:[%s1481 + $0x58] sm:$0xff]
    %v1494 = vld [vmem:[%s1481 + $0x60] sm:$0xff]
    %v1495 = vld [vmem:[%s1481 + $0x68] sm:$0xff]
    %v1496 = vld [vmem:[%s1481 + $0x70] sm:$0xff]
    %v1497 = vld [vmem:[%s1481 + $0x78] sm:$0xff]
    %v1498 = vld [vmem:[%s1481 + $0x80] sm:$0xff]
    %v1499 = vld [vmem:[%s1481 + $0x88] sm:$0xff]
    %v1500 = vld [vmem:[%s1481 + $0x90] sm:$0xff]
    %v1501 = vld [vmem:[%s1481 + $0x98] sm:$0xff]
    %v1502 = vld [vmem:[%s1481 + $0xa0] sm:$0xff]
    %v1503 = vld [vmem:[%s1481 + $0xa8] sm:$0xff]
    %v1504 = vld [vmem:[%s1481 + $0xb0] sm:$0xff]
    %v1505 = vld [vmem:[%s1481 + $0xb8] sm:$0xff]
    %v1506 = vld [vmem:[%s1481 + $0xc0] sm:$0xff]
    %v1507 = vld [vmem:[%s1481 + $0xc8] sm:$0xff]
    %v1508 = vld [vmem:[%s1481 + $0xd0] sm:$0xff]
    %v1509 = vld [vmem:[%s1481 + $0xd8] sm:$0xff]
    %v1510 = vld [vmem:[%s1481 + $0xe0] sm:$0xff]
    %v1511 = vld [vmem:[%s1481 + $0xe8] sm:$0xff]
    %v1512 = vld [vmem:[%s1481 + $0xf0] sm:$0xff]
    %v1513 = vld [vmem:[%s1481 + $0xf8] sm:$0xff]
    %v1514 = vld [vmem:[%s1481 + $0x100] sm:$0xff]
    %v1515 = vld [vmem:[%s1481 + $0x108] sm:$0xff]
    %v1516 = vld [vmem:[%s1481 + $0x110] sm:$0xff]
    %v1517 = vld [vmem:[%s1481 + $0x118] sm:$0xff]
    %v1518 = vld [vmem:[%s1481 + $0x120] sm:$0xff]
    %v1519 = vld [vmem:[%s1481 + $0x128] sm:$0xff]
    %v1520 = vld [vmem:[%s1481 + $0x130] sm:$0xff]
    %v1521 = vld [vmem:[%s1481 + $0x138] sm:$0xff]
    %v1522 = vld [vmem:[%s1481 + $0x140] sm:$0xff]
    %v1523 = vld [vmem:[%s1481 + $0x148] sm:$0xff]
    %v1524 = vld [vmem:[%s1481 + $0x150] sm:$0xff]
    %v1525 = vld [vmem:[%s1481 + $0x158] sm:$0xff]
    %v1526 = vld [vmem:[%s1481 + $0x160] sm:$0xff]
    %v1527 = vld [vmem:[%s1481 + $0x168] sm:$0xff]
    %v1528 = vld [vmem:[%s1481 + $0x170] sm:$0xff]
    %v1529 = vld [vmem:[%s1481 + $0x178] sm:$0xff]
    %v1530 = vld [vmem:[%s1481 + $0x180] sm:$0xff]
    %v1531 = vld [vmem:[%s1481 + $0x188] sm:$0xff]
    %v1532 = vld [vmem:[%s1481 + $0x190] sm:$0xff]
    %v1533 = vld [vmem:[%s1481 + $0x198] sm:$0xff]
    %v1534 = vld [vmem:[%s1481 + $0x1a0] sm:$0xff]
    %v1535 = vld [vmem:[%s1481 + $0x1a8] sm:$0xff]
    %v1536 = vld [vmem:[%s1481 + $0x1b0] sm:$0xff]
    %v1537 = vld [vmem:[%s1481 + $0x1b8] sm:$0xff]
    %v1538 = vld [vmem:[%s1481 + $0x1c0] sm:$0xff]
    %v1539 = vld [vmem:[%s1481 + $0x1c8] sm:$0xff]
    %v1540 = vld [vmem:[%s1481 + $0x1d0] sm:$0xff]
    %v1541 = vld [vmem:[%s1481 + $0x1d8] sm:$0xff]
    %v1542 = vld [vmem:[%s1481 + $0x1e0] sm:$0xff]
    %v1543 = vld [vmem:[%s1481 + $0x1e8] sm:$0xff]
    %v1544 = vld [vmem:[%s1481 + $0x1f0] sm:$0xff]
    %v1545 = vld [vmem:[%s1481 + $0x1f8] sm:$0xff]
    %1546 = vmatprep.subr.mxu0 %v1483
    %1547 = vmatpush1.msra.mxu0 %v1482
    %1548 = vmatprep.subr.mxu0 %v1485
    %1549 = vmatpush1.msra.mxu0 %v1484
    %1550 = vmatprep.subr.mxu0 %v1487
    %1551 = vmatpush1.msra.mxu0 %v1486
    %1552 = vmatprep.subr.mxu0 %v1489
    %1553 = vmatpush1.msra.mxu0 %v1488
    %1554 = vmatprep.subr.mxu0 %v1491
    %1555 = vmatpush1.msra.mxu0 %v1490
    %1556 = vmatprep.subr.mxu0 %v1493
    %1557 = vmatpush1.msra.mxu0 %v1492
    %1558 = vmatprep.subr.mxu0 %v1495
    %1559 = vmatpush1.msra.mxu0 %v1494
    %1560 = vmatprep.subr.mxu0 %v1497
    %1561 = vmatpush1.msra.mxu0 %v1496
    %1562 = vmatprep.subr.mxu0 %v1499
    %1563 = vmatpush1.msra.mxu0 %v1498
    %1564 = vmatprep.subr.mxu0 %v1501
    %1565 = vmatpush1.msra.mxu0 %v1500
    %1566 = vmatprep.subr.mxu0 %v1503
    %1567 = vmatpush1.msra.mxu0 %v1502
    %1568 = vmatprep.subr.mxu0 %v1505
    %1569 = vmatpush1.msra.mxu0 %v1504
    %1570 = vmatprep.subr.mxu0 %v1507
    %1571 = vmatpush1.msra.mxu0 %v1506
    %1572 = vmatprep.subr.mxu0 %v1509
    %1573 = vmatpush1.msra.mxu0 %v1508
    %1574 = vmatprep.subr.mxu0 %v1511
    %1575 = vmatpush1.msra.mxu0 %v1510
    %1576 = vmatprep.subr.mxu0 %v1513
    %1577 = vmatpush1.msra.mxu0 %v1512
    %1578 = vmatprep.subr.mxu0 %v1515
    %1579 = vmatpush1.msra.mxu0 %v1514
    %1580 = vmatprep.subr.mxu0 %v1517
    %1581 = vmatpush1.msra.mxu0 %v1516
    %1582 = vmatprep.subr.mxu0 %v1519
    %1583 = vmatpush1.msra.mxu0 %v1518
    %1584 = vmatprep.subr.mxu0 %v1521
    %1585 = vmatpush1.msra.mxu0 %v1520
    %1586 = vmatprep.subr.mxu0 %v1523
    %1587 = vmatpush1.msra.mxu0 %v1522
    %1588 = vmatprep.subr.mxu0 %v1525
    %1589 = vmatpush1.msra.mxu0 %v1524
    %1590 = vmatprep.subr.mxu0 %v1527
    %1591 = vmatpush1.msra.mxu0 %v1526
    %1592 = vmatprep.subr.mxu0 %v1529
    %1593 = vmatpush1.msra.mxu0 %v1528
    %1594 = vmatprep.subr.mxu0 %v1531
    %1595 = vmatpush1.msra.mxu0 %v1530
    %1596 = vmatprep.subr.mxu0 %v1533
    %1597 = vmatpush1.msra.mxu0 %v1532
    %1598 = vmatprep.subr.mxu0 %v1535
    %1599 = vmatpush1.msra.mxu0 %v1534
    %1600 = vmatprep.subr.mxu0 %v1537
    %1601 = vmatpush1.msra.mxu0 %v1536
    %1602 = vmatprep.subr.mxu0 %v1539
    %1603 = vmatpush1.msra.mxu0 %v1538
    %1604 = vmatprep.subr.mxu0 %v1541
    %1605 = vmatpush1.msra.mxu0 %v1540
    %1606 = vmatprep.subr.mxu0 %v1543
    %1607 = vmatpush1.msra.mxu0 %v1542
    %1608 = vmatprep.subr.mxu0 %v1545
    %1609 = vmatpush1.msra.mxu0 %v1544
    %1610 = vmatprep.mubr.f32.mxu0 %v1480
    %1611 = vmatmul.mubr.f32.gmra.mrb[0].mxu0 %v1479
    %v1612 = vpop.f32.mrb[0].mxu0
    %v1613 = vadd.f32 0.0, %v1612
    %v1614 = vpop.f32.mrb[0].mxu0
    %v1615 = vadd.f32 0.0, %v1614
    %1616 = vdwg.mxu0
    %v1617 = vadd.f32 %v1477, %v1613
    %v1618 = vadd.f32 %v1478, %v1615
    %s1619 = scalar_lea.vmem [#allocation4], 6
    %v1620 = vld [vmem:[%s1619] sm:$0x3]
    %v1622 = vlaneseq
    %v1623 = vshrl.u32 %v1622, 7
    %v1624 = vsub.s32 0, %v1623
    %v1625 = vrot.slane %v1620, %v1624
    %v1626 = vlaneseq
    %v1627 = vshrl.u32 %v1626, 7
    %v1628 = vsub.s32 1, %v1627
    %v1629 = vrot.slane %v1620, %v1628
    %v1632 = vadd.f32 %v1617, %v1625
    %v1633 = vadd.f32 %v1618, %v1629
    %s1634 = scalar_lea.vmem [#allocation2], 5632
    %v1635 = vld [vmem:[%s1634] sm:$0xff]
    %v1636 = vld [vmem:[%s1634 + $0x8] sm:$0xff]
    %v1637 = vld [vmem:[%s1634 + $0x10] sm:$0xff]
    %v1638 = vld [vmem:[%s1634 + $0x18] sm:$0xff]
    %v1639 = vld [vmem:[%s1634 + $0x20] sm:$0xff]
    %v1640 = vld [vmem:[%s1634 + $0x28] sm:$0xff]
    %v1641 = vld [vmem:[%s1634 + $0x30] sm:$0xff]
    %v1642 = vld [vmem:[%s1634 + $0x38] sm:$0xff]
    %v1643 = vld [vmem:[%s1634 + $0x40] sm:$0xff]
    %v1644 = vld [vmem:[%s1634 + $0x48] sm:$0xff]
    %v1645 = vld [vmem:[%s1634 + $0x50] sm:$0xff]
    %v1646 = vld [vmem:[%s1634 + $0x58] sm:$0xff]
    %v1647 = vld [vmem:[%s1634 + $0x60] sm:$0xff]
    %v1648 = vld [vmem:[%s1634 + $0x68] sm:$0xff]
    %v1649 = vld [vmem:[%s1634 + $0x70] sm:$0xff]
    %v1650 = vld [vmem:[%s1634 + $0x78] sm:$0xff]
    %v1651 = vld [vmem:[%s1634 + $0x80] sm:$0xff]
    %v1652 = vld [vmem:[%s1634 + $0x88] sm:$0xff]
    %v1653 = vld [vmem:[%s1634 + $0x90] sm:$0xff]
    %v1654 = vld [vmem:[%s1634 + $0x98] sm:$0xff]
    %v1655 = vld [vmem:[%s1634 + $0xa0] sm:$0xff]
    %v1656 = vld [vmem:[%s1634 + $0xa8] sm:$0xff]
    %v1657 = vld [vmem:[%s1634 + $0xb0] sm:$0xff]
    %v1658 = vld [vmem:[%s1634 + $0xb8] sm:$0xff]
    %v1659 = vld [vmem:[%s1634 + $0xc0] sm:$0xff]
    %v1660 = vld [vmem:[%s1634 + $0xc8] sm:$0xff]
    %v1661 = vld [vmem:[%s1634 + $0xd0] sm:$0xff]
    %v1662 = vld [vmem:[%s1634 + $0xd8] sm:$0xff]
    %v1663 = vld [vmem:[%s1634 + $0xe0] sm:$0xff]
    %v1664 = vld [vmem:[%s1634 + $0xe8] sm:$0xff]
    %v1665 = vld [vmem:[%s1634 + $0xf0] sm:$0xff]
    %v1666 = vld [vmem:[%s1634 + $0xf8] sm:$0xff]
    %v1667 = vld [vmem:[%s1634 + $0x100] sm:$0xff]
    %v1668 = vld [vmem:[%s1634 + $0x108] sm:$0xff]
    %v1669 = vld [vmem:[%s1634 + $0x110] sm:$0xff]
    %v1670 = vld [vmem:[%s1634 + $0x118] sm:$0xff]
    %v1671 = vld [vmem:[%s1634 + $0x120] sm:$0xff]
    %v1672 = vld [vmem:[%s1634 + $0x128] sm:$0xff]
    %v1673 = vld [vmem:[%s1634 + $0x130] sm:$0xff]
    %v1674 = vld [vmem:[%s1634 + $0x138] sm:$0xff]
    %v1675 = vld [vmem:[%s1634 + $0x140] sm:$0xff]
    %v1676 = vld [vmem:[%s1634 + $0x148] sm:$0xff]
    %v1677 = vld [vmem:[%s1634 + $0x150] sm:$0xff]
    %v1678 = vld [vmem:[%s1634 + $0x158] sm:$0xff]
    %v1679 = vld [vmem:[%s1634 + $0x160] sm:$0xff]
    %v1680 = vld [vmem:[%s1634 + $0x168] sm:$0xff]
    %v1681 = vld [vmem:[%s1634 + $0x170] sm:$0xff]
    %v1682 = vld [vmem:[%s1634 + $0x178] sm:$0xff]
    %v1683 = vld [vmem:[%s1634 + $0x180] sm:$0xff]
    %v1684 = vld [vmem:[%s1634 + $0x188] sm:$0xff]
    %v1685 = vld [vmem:[%s1634 + $0x190] sm:$0xff]
    %v1686 = vld [vmem:[%s1634 + $0x198] sm:$0xff]
    %v1687 = vld [vmem:[%s1634 + $0x1a0] sm:$0xff]
    %v1688 = vld [vmem:[%s1634 + $0x1a8] sm:$0xff]
    %v1689 = vld [vmem:[%s1634 + $0x1b0] sm:$0xff]
    %v1690 = vld [vmem:[%s1634 + $0x1b8] sm:$0xff]
    %v1691 = vld [vmem:[%s1634 + $0x1c0] sm:$0xff]
    %v1692 = vld [vmem:[%s1634 + $0x1c8] sm:$0xff]
    %v1693 = vld [vmem:[%s1634 + $0x1d0] sm:$0xff]
    %v1694 = vld [vmem:[%s1634 + $0x1d8] sm:$0xff]
    %v1695 = vld [vmem:[%s1634 + $0x1e0] sm:$0xff]
    %v1696 = vld [vmem:[%s1634 + $0x1e8] sm:$0xff]
    %v1697 = vld [vmem:[%s1634 + $0x1f0] sm:$0xff]
    %v1698 = vld [vmem:[%s1634 + $0x1f8] sm:$0xff]
    %s1699 = scalar_lea.vmem [#allocation4], 8
    %v1700 = vld [vmem:[%s1699] sm:$0x3]
    %v1702 = vlaneseq
    %v1703 = vshrl.u32 %v1702, 7
    %v1704 = vsub.s32 0, %v1703
    %v1705 = vrot.slane %v1700, %v1704
    %v1706 = vlaneseq
    %v1707 = vshrl.u32 %v1706, 7
    %v1708 = vsub.s32 1, %v1707
    %v1709 = vrot.slane %v1700, %v1708
    %1712 = vmatprep.subr.mxu0 %v1636
    %1713 = vmatpush1.msra.mxu0 %v1635
    %1714 = vmatprep.subr.mxu0 %v1638
    %1715 = vmatpush1.msra.mxu0 %v1637
    %1716 = vmatprep.subr.mxu0 %v1640
    %1717 = vmatpush1.msra.mxu0 %v1639
    %1718 = vmatprep.subr.mxu0 %v1642
    %1719 = vmatpush1.msra.mxu0 %v1641
    %1720 = vmatprep.subr.mxu0 %v1644
    %1721 = vmatpush1.msra.mxu0 %v1643
    %1722 = vmatprep.subr.mxu0 %v1646
    %1723 = vmatpush1.msra.mxu0 %v1645
    %1724 = vmatprep.subr.mxu0 %v1648
    %1725 = vmatpush1.msra.mxu0 %v1647
    %1726 = vmatprep.subr.mxu0 %v1650
    %1727 = vmatpush1.msra.mxu0 %v1649
    %1728 = vmatprep.subr.mxu0 %v1652
    %1729 = vmatpush1.msra.mxu0 %v1651
    %1730 = vmatprep.subr.mxu0 %v1654
    %1731 = vmatpush1.msra.mxu0 %v1653
    %1732 = vmatprep.subr.mxu0 %v1656
    %1733 = vmatpush1.msra.mxu0 %v1655
    %1734 = vmatprep.subr.mxu0 %v1658
    %1735 = vmatpush1.msra.mxu0 %v1657
    %1736 = vmatprep.subr.mxu0 %v1660
    %1737 = vmatpush1.msra.mxu0 %v1659
    %1738 = vmatprep.subr.mxu0 %v1662
    %1739 = vmatpush1.msra.mxu0 %v1661
    %1740 = vmatprep.subr.mxu0 %v1664
    %1741 = vmatpush1.msra.mxu0 %v1663
    %1742 = vmatprep.subr.mxu0 %v1666
    %1743 = vmatpush1.msra.mxu0 %v1665
    %1744 = vmatprep.subr.mxu0 %v1668
    %1745 = vmatpush1.msra.mxu0 %v1667
    %1746 = vmatprep.subr.mxu0 %v1670
    %1747 = vmatpush1.msra.mxu0 %v1669
    %1748 = vmatprep.subr.mxu0 %v1672
    %1749 = vmatpush1.msra.mxu0 %v1671
    %1750 = vmatprep.subr.mxu0 %v1674
    %1751 = vmatpush1.msra.mxu0 %v1673
    %1752 = vmatprep.subr.mxu0 %v1676
    %1753 = vmatpush1.msra.mxu0 %v1675
    %1754 = vmatprep.subr.mxu0 %v1678
    %1755 = vmatpush1.msra.mxu0 %v1677
    %1756 = vmatprep.subr.mxu0 %v1680
    %1757 = vmatpush1.msra.mxu0 %v1679
    %1758 = vmatprep.subr.mxu0 %v1682
    %1759 = vmatpush1.msra.mxu0 %v1681
    %1760 = vmatprep.subr.mxu0 %v1684
    %1761 = vmatpush1.msra.mxu0 %v1683
    %1762 = vmatprep.subr.mxu0 %v1686
    %1763 = vmatpush1.msra.mxu0 %v1685
    %1764 = vmatprep.subr.mxu0 %v1688
    %1765 = vmatpush1.msra.mxu0 %v1687
    %1766 = vmatprep.subr.mxu0 %v1690
    %1767 = vmatpush1.msra.mxu0 %v1689
    %1768 = vmatprep.subr.mxu0 %v1692
    %1769 = vmatpush1.msra.mxu0 %v1691
    %1770 = vmatprep.subr.mxu0 %v1694
    %1771 = vmatpush1.msra.mxu0 %v1693
    %1772 = vmatprep.subr.mxu0 %v1696
    %1773 = vmatpush1.msra.mxu0 %v1695
    %1774 = vmatprep.subr.mxu0 %v1698
    %1775 = vmatpush1.msra.mxu0 %v1697
    %1776 = vmatprep.mubr.f32.mxu0 %v1633
    %1777 = vmatmul.mubr.f32.gmra.mrb[0].mxu0 %v1632
    %v1778 = vpop.f32.mrb[0].mxu0
    %v1779 = vadd.f32 %v1705, %v1778
    %v1780 = vpop.f32.mrb[0].mxu0
    %v1781 = vadd.f32 %v1709, %v1780
    %1782 = vdwg.mxu0
    %v1783 = vmul.f32 %v1779, 1.7392527
    %v1784 = vmul.f32 %v1781, 1.7392527
    %s1785 = scalar_lea.vmem [#allocation2], 6144
    %v1786 = vld [vmem:[%s1785] sm:$0xff]
    %v1787 = vld [vmem:[%s1785 + $0x8] sm:$0xff]
    %v1788 = vld [vmem:[%s1785 + $0x10] sm:$0xff]
    %v1789 = vld [vmem:[%s1785 + $0x18] sm:$0xff]
    %v1790 = vld [vmem:[%s1785 + $0x20] sm:$0xff]
    %v1791 = vld [vmem:[%s1785 + $0x28] sm:$0xff]
    %v1792 = vld [vmem:[%s1785 + $0x30] sm:$0xff]
    %v1793 = vld [vmem:[%s1785 + $0x38] sm:$0xff]
    %v1794 = vld [vmem:[%s1785 + $0x40] sm:$0xff]
    %v1795 = vld [vmem:[%s1785 + $0x48] sm:$0xff]
    %v1796 = vld [vmem:[%s1785 + $0x50] sm:$0xff]
    %v1797 = vld [vmem:[%s1785 + $0x58] sm:$0xff]
    %v1798 = vld [vmem:[%s1785 + $0x60] sm:$0xff]
    %v1799 = vld [vmem:[%s1785 + $0x68] sm:$0xff]
    %v1800 = vld [vmem:[%s1785 + $0x70] sm:$0xff]
    %v1801 = vld [vmem:[%s1785 + $0x78] sm:$0xff]
    %v1802 = vld [vmem:[%s1785 + $0x80] sm:$0xff]
    %v1803 = vld [vmem:[%s1785 + $0x88] sm:$0xff]
    %v1804 = vld [vmem:[%s1785 + $0x90] sm:$0xff]
    %v1805 = vld [vmem:[%s1785 + $0x98] sm:$0xff]
    %v1806 = vld [vmem:[%s1785 + $0xa0] sm:$0xff]
    %v1807 = vld [vmem:[%s1785 + $0xa8] sm:$0xff]
    %v1808 = vld [vmem:[%s1785 + $0xb0] sm:$0xff]
    %v1809 = vld [vmem:[%s1785 + $0xb8] sm:$0xff]
    %v1810 = vld [vmem:[%s1785 + $0xc0] sm:$0xff]
    %v1811 = vld [vmem:[%s1785 + $0xc8] sm:$0xff]
    %v1812 = vld [vmem:[%s1785 + $0xd0] sm:$0xff]
    %v1813 = vld [vmem:[%s1785 + $0xd8] sm:$0xff]
    %v1814 = vld [vmem:[%s1785 + $0xe0] sm:$0xff]
    %v1815 = vld [vmem:[%s1785 + $0xe8] sm:$0xff]
    %v1816 = vld [vmem:[%s1785 + $0xf0] sm:$0xff]
    %v1817 = vld [vmem:[%s1785 + $0xf8] sm:$0xff]
    %v1818 = vld [vmem:[%s1785 + $0x100] sm:$0xff]
    %v1819 = vld [vmem:[%s1785 + $0x108] sm:$0xff]
    %v1820 = vld [vmem:[%s1785 + $0x110] sm:$0xff]
    %v1821 = vld [vmem:[%s1785 + $0x118] sm:$0xff]
    %v1822 = vld [vmem:[%s1785 + $0x120] sm:$0xff]
    %v1823 = vld [vmem:[%s1785 + $0x128] sm:$0xff]
    %v1824 = vld [vmem:[%s1785 + $0x130] sm:$0xff]
    %v1825 = vld [vmem:[%s1785 + $0x138] sm:$0xff]
    %v1826 = vld [vmem:[%s1785 + $0x140] sm:$0xff]
    %v1827 = vld [vmem:[%s1785 + $0x148] sm:$0xff]
    %v1828 = vld [vmem:[%s1785 + $0x150] sm:$0xff]
    %v1829 = vld [vmem:[%s1785 + $0x158] sm:$0xff]
    %v1830 = vld [vmem:[%s1785 + $0x160] sm:$0xff]
    %v1831 = vld [vmem:[%s1785 + $0x168] sm:$0xff]
    %v1832 = vld [vmem:[%s1785 + $0x170] sm:$0xff]
    %v1833 = vld [vmem:[%s1785 + $0x178] sm:$0xff]
    %v1834 = vld [vmem:[%s1785 + $0x180] sm:$0xff]
    %v1835 = vld [vmem:[%s1785 + $0x188] sm:$0xff]
    %v1836 = vld [vmem:[%s1785 + $0x190] sm:$0xff]
    %v1837 = vld [vmem:[%s1785 + $0x198] sm:$0xff]
    %v1838 = vld [vmem:[%s1785 + $0x1a0] sm:$0xff]
    %v1839 = vld [vmem:[%s1785 + $0x1a8] sm:$0xff]
    %v1840 = vld [vmem:[%s1785 + $0x1b0] sm:$0xff]
    %v1841 = vld [vmem:[%s1785 + $0x1b8] sm:$0xff]
    %v1842 = vld [vmem:[%s1785 + $0x1c0] sm:$0xff]
    %v1843 = vld [vmem:[%s1785 + $0x1c8] sm:$0xff]
    %v1844 = vld [vmem:[%s1785 + $0x1d0] sm:$0xff]
    %v1845 = vld [vmem:[%s1785 + $0x1d8] sm:$0xff]
    %v1846 = vld [vmem:[%s1785 + $0x1e0] sm:$0xff]
    %v1847 = vld [vmem:[%s1785 + $0x1e8] sm:$0xff]
    %v1848 = vld [vmem:[%s1785 + $0x1f0] sm:$0xff]
    %v1849 = vld [vmem:[%s1785 + $0x1f8] sm:$0xff]
    %1850 = vmatprep.subr.mxu0 %v1787
    %1851 = vmatpush1.msra.mxu0 %v1786
    %1852 = vmatprep.subr.mxu0 %v1789
    %1853 = vmatpush1.msra.mxu0 %v1788
    %1854 = vmatprep.subr.mxu0 %v1791
    %1855 = vmatpush1.msra.mxu0 %v1790
    %1856 = vmatprep.subr.mxu0 %v1793
    %1857 = vmatpush1.msra.mxu0 %v1792
    %1858 = vmatprep.subr.mxu0 %v1795
    %1859 = vmatpush1.msra.mxu0 %v1794
    %1860 = vmatprep.subr.mxu0 %v1797
    %1861 = vmatpush1.msra.mxu0 %v1796
    %1862 = vmatprep.subr.mxu0 %v1799
    %1863 = vmatpush1.msra.mxu0 %v1798
    %1864 = vmatprep.subr.mxu0 %v1801
    %1865 = vmatpush1.msra.mxu0 %v1800
    %1866 = vmatprep.subr.mxu0 %v1803
    %1867 = vmatpush1.msra.mxu0 %v1802
    %1868 = vmatprep.subr.mxu0 %v1805
    %1869 = vmatpush1.msra.mxu0 %v1804
    %1870 = vmatprep.subr.mxu0 %v1807
    %1871 = vmatpush1.msra.mxu0 %v1806
    %1872 = vmatprep.subr.mxu0 %v1809
    %1873 = vmatpush1.msra.mxu0 %v1808
    %1874 = vmatprep.subr.mxu0 %v1811
    %1875 = vmatpush1.msra.mxu0 %v1810
    %1876 = vmatprep.subr.mxu0 %v1813
    %1877 = vmatpush1.msra.mxu0 %v1812
    %1878 = vmatprep.subr.mxu0 %v1815
    %1879 = vmatpush1.msra.mxu0 %v1814
    %1880 = vmatprep.subr.mxu0 %v1817
    %1881 = vmatpush1.msra.mxu0 %v1816
    %1882 = vmatprep.subr.mxu0 %v1819
    %1883 = vmatpush1.msra.mxu0 %v1818
    %1884 = vmatprep.subr.mxu0 %v1821
    %1885 = vmatpush1.msra.mxu0 %v1820
    %1886 = vmatprep.subr.mxu0 %v1823
    %1887 = vmatpush1.msra.mxu0 %v1822
    %1888 = vmatprep.subr.mxu0 %v1825
    %1889 = vmatpush1.msra.mxu0 %v1824
    %1890 = vmatprep.subr.mxu0 %v1827
    %1891 = vmatpush1.msra.mxu0 %v1826
    %1892 = vmatprep.subr.mxu0 %v1829
    %1893 = vmatpush1.msra.mxu0 %v1828
    %1894 = vmatprep.subr.mxu0 %v1831
    %1895 = vmatpush1.msra.mxu0 %v1830
    %1896 = vmatprep.subr.mxu0 %v1833
    %1897 = vmatpush1.msra.mxu0 %v1832
    %1898 = vmatprep.subr.mxu0 %v1835
    %1899 = vmatpush1.msra.mxu0 %v1834
    %1900 = vmatprep.subr.mxu0 %v1837
    %1901 = vmatpush1.msra.mxu0 %v1836
    %1902 = vmatprep.subr.mxu0 %v1839
    %1903 = vmatpush1.msra.mxu0 %v1838
    %1904 = vmatprep.subr.mxu0 %v1841
    %1905 = vmatpush1.msra.mxu0 %v1840
    %1906 = vmatprep.subr.mxu0 %v1843
    %1907 = vmatpush1.msra.mxu0 %v1842
    %1908 = vmatprep.subr.mxu0 %v1845
    %1909 = vmatpush1.msra.mxu0 %v1844
    %1910 = vmatprep.subr.mxu0 %v1847
    %1911 = vmatpush1.msra.mxu0 %v1846
    %1912 = vmatprep.subr.mxu0 %v1849
    %1913 = vmatpush1.msra.mxu0 %v1848
    %1914 = vmatprep.mubr.f32.mxu0 %v1781
    %1915 = vmatmul.mubr.f32.gmra.mrb[0].mxu0 %v1779
    %v1916 = vpop.f32.mrb[0].mxu0
    %v1917 = vadd.f32 0.0, %v1916
    %v1918 = vpop.f32.mrb[0].mxu0
    %v1919 = vadd.f32 0.0, %v1918
    %1920 = vdwg.mxu0
    %s1921 = scalar_lea.vmem [#allocation2], 6656
    %v1922 = vld [vmem:[%s1921] sm:$0xff]
    %v1923 = vld [vmem:[%s1921 + $0x8] sm:$0xff]
    %v1924 = vld [vmem:[%s1921 + $0x10] sm:$0xff]
    %v1925 = vld [vmem:[%s1921 + $0x18] sm:$0xff]
    %v1926 = vld [vmem:[%s1921 + $0x20] sm:$0xff]
    %v1927 = vld [vmem:[%s1921 + $0x28] sm:$0xff]
    %v1928 = vld [vmem:[%s1921 + $0x30] sm:$0xff]
    %v1929 = vld [vmem:[%s1921 + $0x38] sm:$0xff]
    %v1930 = vld [vmem:[%s1921 + $0x40] sm:$0xff]
    %v1931 = vld [vmem:[%s1921 + $0x48] sm:$0xff]
    %v1932 = vld [vmem:[%s1921 + $0x50] sm:$0xff]
    %v1933 = vld [vmem:[%s1921 + $0x58] sm:$0xff]
    %v1934 = vld [vmem:[%s1921 + $0x60] sm:$0xff]
    %v1935 = vld [vmem:[%s1921 + $0x68] sm:$0xff]
    %v1936 = vld [vmem:[%s1921 + $0x70] sm:$0xff]
    %v1937 = vld [vmem:[%s1921 + $0x78] sm:$0xff]
    %v1938 = vld [vmem:[%s1921 + $0x80] sm:$0xff]
    %v1939 = vld [vmem:[%s1921 + $0x88] sm:$0xff]
    %v1940 = vld [vmem:[%s1921 + $0x90] sm:$0xff]
    %v1941 = vld [vmem:[%s1921 + $0x98] sm:$0xff]
    %v1942 = vld [vmem:[%s1921 + $0xa0] sm:$0xff]
    %v1943 = vld [vmem:[%s1921 + $0xa8] sm:$0xff]
    %v1944 = vld [vmem:[%s1921 + $0xb0] sm:$0xff]
    %v1945 = vld [vmem:[%s1921 + $0xb8] sm:$0xff]
    %v1946 = vld [vmem:[%s1921 + $0xc0] sm:$0xff]
    %v1947 = vld [vmem:[%s1921 + $0xc8] sm:$0xff]
    %v1948 = vld [vmem:[%s1921 + $0xd0] sm:$0xff]
    %v1949 = vld [vmem:[%s1921 + $0xd8] sm:$0xff]
    %v1950 = vld [vmem:[%s1921 + $0xe0] sm:$0xff]
    %v1951 = vld [vmem:[%s1921 + $0xe8] sm:$0xff]
    %v1952 = vld [vmem:[%s1921 + $0xf0] sm:$0xff]
    %v1953 = vld [vmem:[%s1921 + $0xf8] sm:$0xff]
    %v1954 = vld [vmem:[%s1921 + $0x100] sm:$0xff]
    %v1955 = vld [vmem:[%s1921 + $0x108] sm:$0xff]
    %v1956 = vld [vmem:[%s1921 + $0x110] sm:$0xff]
    %v1957 = vld [vmem:[%s1921 + $0x118] sm:$0xff]
    %v1958 = vld [vmem:[%s1921 + $0x120] sm:$0xff]
    %v1959 = vld [vmem:[%s1921 + $0x128] sm:$0xff]
    %v1960 = vld [vmem:[%s1921 + $0x130] sm:$0xff]
    %v1961 = vld [vmem:[%s1921 + $0x138] sm:$0xff]
    %v1962 = vld [vmem:[%s1921 + $0x140] sm:$0xff]
    %v1963 = vld [vmem:[%s1921 + $0x148] sm:$0xff]
    %v1964 = vld [vmem:[%s1921 + $0x150] sm:$0xff]
    %v1965 = vld [vmem:[%s1921 + $0x158] sm:$0xff]
    %v1966 = vld [vmem:[%s1921 + $0x160] sm:$0xff]
    %v1967 = vld [vmem:[%s1921 + $0x168] sm:$0xff]
    %v1968 = vld [vmem:[%s1921 + $0x170] sm:$0xff]
    %v1969 = vld [vmem:[%s1921 + $0x178] sm:$0xff]
    %v1970 = vld [vmem:[%s1921 + $0x180] sm:$0xff]
    %v1971 = vld [vmem:[%s1921 + $0x188] sm:$0xff]
    %v1972 = vld [vmem:[%s1921 + $0x190] sm:$0xff]
    %v1973 = vld [vmem:[%s1921 + $0x198] sm:$0xff]
    %v1974 = vld [vmem:[%s1921 + $0x1a0] sm:$0xff]
    %v1975 = vld [vmem:[%s1921 + $0x1a8] sm:$0xff]
    %v1976 = vld [vmem:[%s1921 + $0x1b0] sm:$0xff]
    %v1977 = vld [vmem:[%s1921 + $0x1b8] sm:$0xff]
    %v1978 = vld [vmem:[%s1921 + $0x1c0] sm:$0xff]
    %v1979 = vld [vmem:[%s1921 + $0x1c8] sm:$0xff]
    %v1980 = vld [vmem:[%s1921 + $0x1d0] sm:$0xff]
    %v1981 = vld [vmem:[%s1921 + $0x1d8] sm:$0xff]
    %v1982 = vld [vmem:[%s1921 + $0x1e0] sm:$0xff]
    %v1983 = vld [vmem:[%s1921 + $0x1e8] sm:$0xff]
    %v1984 = vld [vmem:[%s1921 + $0x1f0] sm:$0xff]
    %v1985 = vld [vmem:[%s1921 + $0x1f8] sm:$0xff]
    %s1986 = scalar_lea.vmem [#allocation4], 10
    %v1987 = vld [vmem:[%s1986] sm:$0x3]
    %v1989 = vlaneseq
    %v1990 = vshrl.u32 %v1989, 7
    %v1991 = vsub.s32 0, %v1990
    %v1992 = vrot.slane %v1987, %v1991
    %v1993 = vlaneseq
    %v1994 = vshrl.u32 %v1993, 7
    %v1995 = vsub.s32 1, %v1994
    %v1996 = vrot.slane %v1987, %v1995
    %1999 = vmatprep.subr.mxu0 %v1923
    %2000 = vmatpush1.msra.mxu0 %v1922
    %2001 = vmatprep.subr.mxu0 %v1925
    %2002 = vmatpush1.msra.mxu0 %v1924
    %2003 = vmatprep.subr.mxu0 %v1927
    %2004 = vmatpush1.msra.mxu0 %v1926
    %2005 = vmatprep.subr.mxu0 %v1929
    %2006 = vmatpush1.msra.mxu0 %v1928
    %2007 = vmatprep.subr.mxu0 %v1931
    %2008 = vmatpush1.msra.mxu0 %v1930
    %2009 = vmatprep.subr.mxu0 %v1933
    %2010 = vmatpush1.msra.mxu0 %v1932
    %2011 = vmatprep.subr.mxu0 %v1935
    %2012 = vmatpush1.msra.mxu0 %v1934
    %2013 = vmatprep.subr.mxu0 %v1937
    %2014 = vmatpush1.msra.mxu0 %v1936
    %2015 = vmatprep.subr.mxu0 %v1939
    %2016 = vmatpush1.msra.mxu0 %v1938
    %2017 = vmatprep.subr.mxu0 %v1941
    %2018 = vmatpush1.msra.mxu0 %v1940
    %2019 = vmatprep.subr.mxu0 %v1943
    %2020 = vmatpush1.msra.mxu0 %v1942
    %2021 = vmatprep.subr.mxu0 %v1945
    %2022 = vmatpush1.msra.mxu0 %v1944
    %2023 = vmatprep.subr.mxu0 %v1947
    %2024 = vmatpush1.msra.mxu0 %v1946
    %2025 = vmatprep.subr.mxu0 %v1949
    %2026 = vmatpush1.msra.mxu0 %v1948
    %2027 = vmatprep.subr.mxu0 %v1951
    %2028 = vmatpush1.msra.mxu0 %v1950
    %2029 = vmatprep.subr.mxu0 %v1953
    %2030 = vmatpush1.msra.mxu0 %v1952
    %2031 = vmatprep.subr.mxu0 %v1955
    %2032 = vmatpush1.msra.mxu0 %v1954
    %2033 = vmatprep.subr.mxu0 %v1957
    %2034 = vmatpush1.msra.mxu0 %v1956
    %2035 = vmatprep.subr.mxu0 %v1959
    %2036 = vmatpush1.msra.mxu0 %v1958
    %2037 = vmatprep.subr.mxu0 %v1961
    %2038 = vmatpush1.msra.mxu0 %v1960
    %2039 = vmatprep.subr.mxu0 %v1963
    %2040 = vmatpush1.msra.mxu0 %v1962
    %2041 = vmatprep.subr.mxu0 %v1965
    %2042 = vmatpush1.msra.mxu0 %v1964
    %2043 = vmatprep.subr.mxu0 %v1967
    %2044 = vmatpush1.msra.mxu0 %v1966
    %2045 = vmatprep.subr.mxu0 %v1969
    %2046 = vmatpush1.msra.mxu0 %v1968
    %2047 = vmatprep.subr.mxu0 %v1971
    %2048 = vmatpush1.msra.mxu0 %v1970
    %2049 = vmatprep.subr.mxu0 %v1973
    %2050 = vmatpush1.msra.mxu0 %v1972
    %2051 = vmatprep.subr.mxu0 %v1975
    %2052 = vmatpush1.msra.mxu0 %v1974
    %2053 = vmatprep.subr.mxu0 %v1977
    %2054 = vmatpush1.msra.mxu0 %v1976
    %2055 = vmatprep.subr.mxu0 %v1979
    %2056 = vmatpush1.msra.mxu0 %v1978
    %2057 = vmatprep.subr.mxu0 %v1981
    %2058 = vmatpush1.msra.mxu0 %v1980
    %2059 = vmatprep.subr.mxu0 %v1983
    %2060 = vmatpush1.msra.mxu0 %v1982
    %2061 = vmatprep.subr.mxu0 %v1985
    %2062 = vmatpush1.msra.mxu0 %v1984
    %2063 = vmatprep.mubr.f32.mxu0 %v1919
    %2064 = vmatmul.mubr.f32.gmra.mrb[0].mxu0 %v1917
    %v2065 = vpop.f32.mrb[0].mxu0
    %v2066 = vadd.f32 %v1992, %v2065
    %v2067 = vpop.f32.mrb[0].mxu0
    %v2068 = vadd.f32 %v1996, %v2067
    %2069 = vdwg.mxu0
    %vm2070 = vcmp.le.f32.partialorder %v2066, 0.0
    %vm2071 = vcmp.le.f32.partialorder %v2068, 0.0
    %vm2072 = vcmp.lt.f32.partialorder %v2066, 1.0
    %vm2073 = vcmp.lt.f32.partialorder %v2068, 1.0
    %v2074 = vmul.f32 %v2066, 0.5
    %v2075 = vmul.f32 %v2068, 0.5
    %v2076 = vmul.f32 %v2074, %v2066
    %v2077 = vmul.f32 %v2075, %v2068
    %v2078 = vsub.f32 %v2066, 0.5
    %v2079 = vsub.f32 %v2068, 0.5
    %v2080 = vsel %vm2072, %v2076, %v2078
    %v2081 = vsel %vm2073, %v2077, %v2079
    %v2082 = vsel %vm2070, 0.0, %v2080
    %v2083 = vsel %vm2071, 0.0, %v2081
    %s2084 = scalar_lea.vmem [#allocation2], 7168
    %v2085 = vld [vmem:[%s2084] sm:$0xff]
    %v2086 = vld [vmem:[%s2084 + $0x8] sm:$0xff]
    %v2087 = vld [vmem:[%s2084 + $0x10] sm:$0xff]
    %v2088 = vld [vmem:[%s2084 + $0x18] sm:$0xff]
    %v2089 = vld [vmem:[%s2084 + $0x20] sm:$0xff]
    %v2090 = vld [vmem:[%s2084 + $0x28] sm:$0xff]
    %v2091 = vld [vmem:[%s2084 + $0x30] sm:$0xff]
    %v2092 = vld [vmem:[%s2084 + $0x38] sm:$0xff]
    %v2093 = vld [vmem:[%s2084 + $0x40] sm:$0xff]
    %v2094 = vld [vmem:[%s2084 + $0x48] sm:$0xff]
    %v2095 = vld [vmem:[%s2084 + $0x50] sm:$0xff]
    %v2096 = vld [vmem:[%s2084 + $0x58] sm:$0xff]
    %v2097 = vld [vmem:[%s2084 + $0x60] sm:$0xff]
    %v2098 = vld [vmem:[%s2084 + $0x68] sm:$0xff]
    %v2099 = vld [vmem:[%s2084 + $0x70] sm:$0xff]
    %v2100 = vld [vmem:[%s2084 + $0x78] sm:$0xff]
    %v2101 = vld [vmem:[%s2084 + $0x80] sm:$0xff]
    %v2102 = vld [vmem:[%s2084 + $0x88] sm:$0xff]
    %v2103 = vld [vmem:[%s2084 + $0x90] sm:$0xff]
    %v2104 = vld [vmem:[%s2084 + $0x98] sm:$0xff]
    %v2105 = vld [vmem:[%s2084 + $0xa0] sm:$0xff]
    %v2106 = vld [vmem:[%s2084 + $0xa8] sm:$0xff]
    %v2107 = vld [vmem:[%s2084 + $0xb0] sm:$0xff]
    %v2108 = vld [vmem:[%s2084 + $0xb8] sm:$0xff]
    %v2109 = vld [vmem:[%s2084 + $0xc0] sm:$0xff]
    %v2110 = vld [vmem:[%s2084 + $0xc8] sm:$0xff]
    %v2111 = vld [vmem:[%s2084 + $0xd0] sm:$0xff]
    %v2112 = vld [vmem:[%s2084 + $0xd8] sm:$0xff]
    %v2113 = vld [vmem:[%s2084 + $0xe0] sm:$0xff]
    %v2114 = vld [vmem:[%s2084 + $0xe8] sm:$0xff]
    %v2115 = vld [vmem:[%s2084 + $0xf0] sm:$0xff]
    %v2116 = vld [vmem:[%s2084 + $0xf8] sm:$0xff]
    %v2117 = vld [vmem:[%s2084 + $0x100] sm:$0xff]
    %v2118 = vld [vmem:[%s2084 + $0x108] sm:$0xff]
    %v2119 = vld [vmem:[%s2084 + $0x110] sm:$0xff]
    %v2120 = vld [vmem:[%s2084 + $0x118] sm:$0xff]
    %v2121 = vld [vmem:[%s2084 + $0x120] sm:$0xff]
    %v2122 = vld [vmem:[%s2084 + $0x128] sm:$0xff]
    %v2123 = vld [vmem:[%s2084 + $0x130] sm:$0xff]
    %v2124 = vld [vmem:[%s2084 + $0x138] sm:$0xff]
    %v2125 = vld [vmem:[%s2084 + $0x140] sm:$0xff]
    %v2126 = vld [vmem:[%s2084 + $0x148] sm:$0xff]
    %v2127 = vld [vmem:[%s2084 + $0x150] sm:$0xff]
    %v2128 = vld [vmem:[%s2084 + $0x158] sm:$0xff]
    %v2129 = vld [vmem:[%s2084 + $0x160] sm:$0xff]
    %v2130 = vld [vmem:[%s2084 + $0x168] sm:$0xff]
    %v2131 = vld [vmem:[%s2084 + $0x170] sm:$0xff]
    %v2132 = vld [vmem:[%s2084 + $0x178] sm:$0xff]
    %v2133 = vld [vmem:[%s2084 + $0x180] sm:$0xff]
    %v2134 = vld [vmem:[%s2084 + $0x188] sm:$0xff]
    %v2135 = vld [vmem:[%s2084 + $0x190] sm:$0xff]
    %v2136 = vld [vmem:[%s2084 + $0x198] sm:$0xff]
    %v2137 = vld [vmem:[%s2084 + $0x1a0] sm:$0xff]
    %v2138 = vld [vmem:[%s2084 + $0x1a8] sm:$0xff]
    %v2139 = vld [vmem:[%s2084 + $0x1b0] sm:$0xff]
    %v2140 = vld [vmem:[%s2084 + $0x1b8] sm:$0xff]
    %v2141 = vld [vmem:[%s2084 + $0x1c0] sm:$0xff]
    %v2142 = vld [vmem:[%s2084 + $0x1c8] sm:$0xff]
    %v2143 = vld [vmem:[%s2084 + $0x1d0] sm:$0xff]
    %v2144 = vld [vmem:[%s2084 + $0x1d8] sm:$0xff]
    %v2145 = vld [vmem:[%s2084 + $0x1e0] sm:$0xff]
    %v2146 = vld [vmem:[%s2084 + $0x1e8] sm:$0xff]
    %v2147 = vld [vmem:[%s2084 + $0x1f0] sm:$0xff]
    %v2148 = vld [vmem:[%s2084 + $0x1f8] sm:$0xff]
    %2149 = vmatprep.subr.mxu0 %v2086
    %2150 = vmatpush1.msra.mxu0 %v2085
    %2151 = vmatprep.subr.mxu0 %v2088
    %2152 = vmatpush1.msra.mxu0 %v2087
    %2153 = vmatprep.subr.mxu0 %v2090
    %2154 = vmatpush1.msra.mxu0 %v2089
    %2155 = vmatprep.subr.mxu0 %v2092
    %2156 = vmatpush1.msra.mxu0 %v2091
    %2157 = vmatprep.subr.mxu0 %v2094
    %2158 = vmatpush1.msra.mxu0 %v2093
    %2159 = vmatprep.subr.mxu0 %v2096
    %2160 = vmatpush1.msra.mxu0 %v2095
    %2161 = vmatprep.subr.mxu0 %v2098
    %2162 = vmatpush1.msra.mxu0 %v2097
    %2163 = vmatprep.subr.mxu0 %v2100
    %2164 = vmatpush1.msra.mxu0 %v2099
    %2165 = vmatprep.subr.mxu0 %v2102
    %2166 = vmatpush1.msra.mxu0 %v2101
    %2167 = vmatprep.subr.mxu0 %v2104
    %2168 = vmatpush1.msra.mxu0 %v2103
    %2169 = vmatprep.subr.mxu0 %v2106
    %2170 = vmatpush1.msra.mxu0 %v2105
    %2171 = vmatprep.subr.mxu0 %v2108
    %2172 = vmatpush1.msra.mxu0 %v2107
    %2173 = vmatprep.subr.mxu0 %v2110
    %2174 = vmatpush1.msra.mxu0 %v2109
    %2175 = vmatprep.subr.mxu0 %v2112
    %2176 = vmatpush1.msra.mxu0 %v2111
    %2177 = vmatprep.subr.mxu0 %v2114
    %2178 = vmatpush1.msra.mxu0 %v2113
    %2179 = vmatprep.subr.mxu0 %v2116
    %2180 = vmatpush1.msra.mxu0 %v2115
    %2181 = vmatprep.subr.mxu0 %v2118
    %2182 = vmatpush1.msra.mxu0 %v2117
    %2183 = vmatprep.subr.mxu0 %v2120
    %2184 = vmatpush1.msra.mxu0 %v2119
    %2185 = vmatprep.subr.mxu0 %v2122
    %2186 = vmatpush1.msra.mxu0 %v2121
    %2187 = vmatprep.subr.mxu0 %v2124
    %2188 = vmatpush1.msra.mxu0 %v2123
    %2189 = vmatprep.subr.mxu0 %v2126
    %2190 = vmatpush1.msra.mxu0 %v2125
    %2191 = vmatprep.subr.mxu0 %v2128
    %2192 = vmatpush1.msra.mxu0 %v2127
    %2193 = vmatprep.subr.mxu0 %v2130
    %2194 = vmatpush1.msra.mxu0 %v2129
    %2195 = vmatprep.subr.mxu0 %v2132
    %2196 = vmatpush1.msra.mxu0 %v2131
    %2197 = vmatprep.subr.mxu0 %v2134
    %2198 = vmatpush1.msra.mxu0 %v2133
    %2199 = vmatprep.subr.mxu0 %v2136
    %2200 = vmatpush1.msra.mxu0 %v2135
    %2201 = vmatprep.subr.mxu0 %v2138
    %2202 = vmatpush1.msra.mxu0 %v2137
    %2203 = vmatprep.subr.mxu0 %v2140
    %2204 = vmatpush1.msra.mxu0 %v2139
    %2205 = vmatprep.subr.mxu0 %v2142
    %2206 = vmatpush1.msra.mxu0 %v2141
    %2207 = vmatprep.subr.mxu0 %v2144
    %2208 = vmatpush1.msra.mxu0 %v2143
    %2209 = vmatprep.subr.mxu0 %v2146
    %2210 = vmatpush1.msra.mxu0 %v2145
    %2211 = vmatprep.subr.mxu0 %v2148
    %2212 = vmatpush1.msra.mxu0 %v2147
    %2213 = vmatprep.mubr.f32.mxu0 %v2083
    %2214 = vmatmul.mubr.f32.gmra.mrb[0].mxu0 %v2082
    %v2215 = vpop.f32.mrb[0].mxu0
    %v2216 = vadd.f32 0.0, %v2215
    %v2217 = vpop.f32.mrb[0].mxu0
    %v2218 = vadd.f32 0.0, %v2217
    %2219 = vdwg.mxu0
    %v2220 = vsub.f32 %v2216, %v1917
    %v2221 = vsub.f32 %v2218, %v1919
    %s2222 = scalar_lea.vmem [#allocation2], 8192
    %v2223 = vld [vmem:[%s2222] sm:$0xff]
    %v2224 = vld [vmem:[%s2222 + $0x8] sm:$0xff]
    %v2225 = vld [vmem:[%s2222 + $0x10] sm:$0xff]
    %v2226 = vld [vmem:[%s2222 + $0x18] sm:$0xff]
    %v2227 = vld [vmem:[%s2222 + $0x20] sm:$0xff]
    %v2228 = vld [vmem:[%s2222 + $0x28] sm:$0xff]
    %v2229 = vld [vmem:[%s2222 + $0x30] sm:$0xff]
    %v2230 = vld [vmem:[%s2222 + $0x38] sm:$0xff]
    %v2231 = vld [vmem:[%s2222 + $0x40] sm:$0xff]
    %v2232 = vld [vmem:[%s2222 + $0x48] sm:$0xff]
    %v2233 = vld [vmem:[%s2222 + $0x50] sm:$0xff]
    %v2234 = vld [vmem:[%s2222 + $0x58] sm:$0xff]
    %v2235 = vld [vmem:[%s2222 + $0x60] sm:$0xff]
    %v2236 = vld [vmem:[%s2222 + $0x68] sm:$0xff]
    %v2237 = vld [vmem:[%s2222 + $0x70] sm:$0xff]
    %v2238 = vld [vmem:[%s2222 + $0x78] sm:$0xff]
    %v2239 = vld [vmem:[%s2222 + $0x80] sm:$0xff]
    %v2240 = vld [vmem:[%s2222 + $0x88] sm:$0xff]
    %v2241 = vld [vmem:[%s2222 + $0x90] sm:$0xff]
    %v2242 = vld [vmem:[%s2222 + $0x98] sm:$0xff]
    %v2243 = vld [vmem:[%s2222 + $0xa0] sm:$0xff]
    %v2244 = vld [vmem:[%s2222 + $0xa8] sm:$0xff]
    %v2245 = vld [vmem:[%s2222 + $0xb0] sm:$0xff]
    %v2246 = vld [vmem:[%s2222 + $0xb8] sm:$0xff]
    %v2247 = vld [vmem:[%s2222 + $0xc0] sm:$0xff]
    %v2248 = vld [vmem:[%s2222 + $0xc8] sm:$0xff]
    %v2249 = vld [vmem:[%s2222 + $0xd0] sm:$0xff]
    %v2250 = vld [vmem:[%s2222 + $0xd8] sm:$0xff]
    %v2251 = vld [vmem:[%s2222 + $0xe0] sm:$0xff]
    %v2252 = vld [vmem:[%s2222 + $0xe8] sm:$0xff]
    %v2253 = vld [vmem:[%s2222 + $0xf0] sm:$0xff]
    %v2254 = vld [vmem:[%s2222 + $0xf8] sm:$0xff]
    %v2255 = vld [vmem:[%s2222 + $0x100] sm:$0xff]
    %v2256 = vld [vmem:[%s2222 + $0x108] sm:$0xff]
    %v2257 = vld [vmem:[%s2222 + $0x110] sm:$0xff]
    %v2258 = vld [vmem:[%s2222 + $0x118] sm:$0xff]
    %v2259 = vld [vmem:[%s2222 + $0x120] sm:$0xff]
    %v2260 = vld [vmem:[%s2222 + $0x128] sm:$0xff]
    %v2261 = vld [vmem:[%s2222 + $0x130] sm:$0xff]
    %v2262 = vld [vmem:[%s2222 + $0x138] sm:$0xff]
    %v2263 = vld [vmem:[%s2222 + $0x140] sm:$0xff]
    %v2264 = vld [vmem:[%s2222 + $0x148] sm:$0xff]
    %v2265 = vld [vmem:[%s2222 + $0x150] sm:$0xff]
    %v2266 = vld [vmem:[%s2222 + $0x158] sm:$0xff]
    %v2267 = vld [vmem:[%s2222 + $0x160] sm:$0xff]
    %v2268 = vld [vmem:[%s2222 + $0x168] sm:$0xff]
    %v2269 = vld [vmem:[%s2222 + $0x170] sm:$0xff]
    %v2270 = vld [vmem:[%s2222 + $0x178] sm:$0xff]
    %v2271 = vld [vmem:[%s2222 + $0x180] sm:$0xff]
    %v2272 = vld [vmem:[%s2222 + $0x188] sm:$0xff]
    %v2273 = vld [vmem:[%s2222 + $0x190] sm:$0xff]
    %v2274 = vld [vmem:[%s2222 + $0x198] sm:$0xff]
    %v2275 = vld [vmem:[%s2222 + $0x1a0] sm:$0xff]
    %v2276 = vld [vmem:[%s2222 + $0x1a8] sm:$0xff]
    %v2277 = vld [vmem:[%s2222 + $0x1b0] sm:$0xff]
    %v2278 = vld [vmem:[%s2222 + $0x1b8] sm:$0xff]
    %v2279 = vld [vmem:[%s2222 + $0x1c0] sm:$0xff]
    %v2280 = vld [vmem:[%s2222 + $0x1c8] sm:$0xff]
    %v2281 = vld [vmem:[%s2222 + $0x1d0] sm:$0xff]
    %v2282 = vld [vmem:[%s2222 + $0x1d8] sm:$0xff]
    %v2283 = vld [vmem:[%s2222 + $0x1e0] sm:$0xff]
    %v2284 = vld [vmem:[%s2222 + $0x1e8] sm:$0xff]
    %v2285 = vld [vmem:[%s2222 + $0x1f0] sm:$0xff]
    %v2286 = vld [vmem:[%s2222 + $0x1f8] sm:$0xff]
    %2287 = vmatprep.subr.mxu0 %v2224
    %2288 = vmatpush1.msra.mxu0 %v2223
    %2289 = vmatprep.subr.mxu0 %v2226
    %2290 = vmatpush1.msra.mxu0 %v2225
    %2291 = vmatprep.subr.mxu0 %v2228
    %2292 = vmatpush1.msra.mxu0 %v2227
    %2293 = vmatprep.subr.mxu0 %v2230
    %2294 = vmatpush1.msra.mxu0 %v2229
    %2295 = vmatprep.subr.mxu0 %v2232
    %2296 = vmatpush1.msra.mxu0 %v2231
    %2297 = vmatprep.subr.mxu0 %v2234
    %2298 = vmatpush1.msra.mxu0 %v2233
    %2299 = vmatprep.subr.mxu0 %v2236
    %2300 = vmatpush1.msra.mxu0 %v2235
    %2301 = vmatprep.subr.mxu0 %v2238
    %2302 = vmatpush1.msra.mxu0 %v2237
    %2303 = vmatprep.subr.mxu0 %v2240
    %2304 = vmatpush1.msra.mxu0 %v2239
    %2305 = vmatprep.subr.mxu0 %v2242
    %2306 = vmatpush1.msra.mxu0 %v2241
    %2307 = vmatprep.subr.mxu0 %v2244
    %2308 = vmatpush1.msra.mxu0 %v2243
    %2309 = vmatprep.subr.mxu0 %v2246
    %2310 = vmatpush1.msra.mxu0 %v2245
    %2311 = vmatprep.subr.mxu0 %v2248
    %2312 = vmatpush1.msra.mxu0 %v2247
    %2313 = vmatprep.subr.mxu0 %v2250
    %2314 = vmatpush1.msra.mxu0 %v2249
    %2315 = vmatprep.subr.mxu0 %v2252
    %2316 = vmatpush1.msra.mxu0 %v2251
    %2317 = vmatprep.subr.mxu0 %v2254
    %2318 = vmatpush1.msra.mxu0 %v2253
    %2319 = vmatprep.subr.mxu0 %v2256
    %2320 = vmatpush1.msra.mxu0 %v2255
    %2321 = vmatprep.subr.mxu0 %v2258
    %2322 = vmatpush1.msra.mxu0 %v2257
    %2323 = vmatprep.subr.mxu0 %v2260
    %2324 = vmatpush1.msra.mxu0 %v2259
    %2325 = vmatprep.subr.mxu0 %v2262
    %2326 = vmatpush1.msra.mxu0 %v2261
    %2327 = vmatprep.subr.mxu0 %v2264
    %2328 = vmatpush1.msra.mxu0 %v2263
    %2329 = vmatprep.subr.mxu0 %v2266
    %2330 = vmatpush1.msra.mxu0 %v2265
    %2331 = vmatprep.subr.mxu0 %v2268
    %2332 = vmatpush1.msra.mxu0 %v2267
    %2333 = vmatprep.subr.mxu0 %v2270
    %2334 = vmatpush1.msra.mxu0 %v2269
    %2335 = vmatprep.subr.mxu0 %v2272
    %2336 = vmatpush1.msra.mxu0 %v2271
    %2337 = vmatprep.subr.mxu0 %v2274
    %2338 = vmatpush1.msra.mxu0 %v2273
    %2339 = vmatprep.subr.mxu0 %v2276
    %2340 = vmatpush1.msra.mxu0 %v2275
    %2341 = vmatprep.subr.mxu0 %v2278
    %2342 = vmatpush1.msra.mxu0 %v2277
    %2343 = vmatprep.subr.mxu0 %v2280
    %2344 = vmatpush1.msra.mxu0 %v2279
    %2345 = vmatprep.subr.mxu0 %v2282
    %2346 = vmatpush1.msra.mxu0 %v2281
    %2347 = vmatprep.subr.mxu0 %v2284
    %2348 = vmatpush1.msra.mxu0 %v2283
    %2349 = vmatprep.subr.mxu0 %v2286
    %2350 = vmatpush1.msra.mxu0 %v2285
    %2351 = vmatprep.mubr.f32.mxu0 %v1781
    %2352 = vmatmul.mubr.f32.gmra.mrb[0].mxu0 %v1779
    %v2353 = vpop.f32.mrb[0].mxu0
    %v2354 = vadd.f32 0.0, %v2353
    %v2355 = vpop.f32.mrb[0].mxu0
    %v2356 = vadd.f32 0.0, %v2355
    %2357 = vdwg.mxu0
    %s2358 = scalar_lea.vmem [#allocation2], 8704
    %v2359 = vld [vmem:[%s2358] sm:$0xff]
    %v2360 = vld [vmem:[%s2358 + $0x8] sm:$0xff]
    %v2361 = vld [vmem:[%s2358 + $0x10] sm:$0xff]
    %v2362 = vld [vmem:[%s2358 + $0x18] sm:$0xff]
    %v2363 = vld [vmem:[%s2358 + $0x20] sm:$0xff]
    %v2364 = vld [vmem:[%s2358 + $0x28] sm:$0xff]
    %v2365 = vld [vmem:[%s2358 + $0x30] sm:$0xff]
    %v2366 = vld [vmem:[%s2358 + $0x38] sm:$0xff]
    %v2367 = vld [vmem:[%s2358 + $0x40] sm:$0xff]
    %v2368 = vld [vmem:[%s2358 + $0x48] sm:$0xff]
    %v2369 = vld [vmem:[%s2358 + $0x50] sm:$0xff]
    %v2370 = vld [vmem:[%s2358 + $0x58] sm:$0xff]
    %v2371 = vld [vmem:[%s2358 + $0x60] sm:$0xff]
    %v2372 = vld [vmem:[%s2358 + $0x68] sm:$0xff]
    %v2373 = vld [vmem:[%s2358 + $0x70] sm:$0xff]
    %v2374 = vld [vmem:[%s2358 + $0x78] sm:$0xff]
    %v2375 = vld [vmem:[%s2358 + $0x80] sm:$0xff]
    %v2376 = vld [vmem:[%s2358 + $0x88] sm:$0xff]
    %v2377 = vld [vmem:[%s2358 + $0x90] sm:$0xff]
    %v2378 = vld [vmem:[%s2358 + $0x98] sm:$0xff]
    %v2379 = vld [vmem:[%s2358 + $0xa0] sm:$0xff]
    %v2380 = vld [vmem:[%s2358 + $0xa8] sm:$0xff]
    %v2381 = vld [vmem:[%s2358 + $0xb0] sm:$0xff]
    %v2382 = vld [vmem:[%s2358 + $0xb8] sm:$0xff]
    %v2383 = vld [vmem:[%s2358 + $0xc0] sm:$0xff]
    %v2384 = vld [vmem:[%s2358 + $0xc8] sm:$0xff]
    %v2385 = vld [vmem:[%s2358 + $0xd0] sm:$0xff]
    %v2386 = vld [vmem:[%s2358 + $0xd8] sm:$0xff]
    %v2387 = vld [vmem:[%s2358 + $0xe0] sm:$0xff]
    %v2388 = vld [vmem:[%s2358 + $0xe8] sm:$0xff]
    %v2389 = vld [vmem:[%s2358 + $0xf0] sm:$0xff]
    %v2390 = vld [vmem:[%s2358 + $0xf8] sm:$0xff]
    %v2391 = vld [vmem:[%s2358 + $0x100] sm:$0xff]
    %v2392 = vld [vmem:[%s2358 + $0x108] sm:$0xff]
    %v2393 = vld [vmem:[%s2358 + $0x110] sm:$0xff]
    %v2394 = vld [vmem:[%s2358 + $0x118] sm:$0xff]
    %v2395 = vld [vmem:[%s2358 + $0x120] sm:$0xff]
    %v2396 = vld [vmem:[%s2358 + $0x128] sm:$0xff]
    %v2397 = vld [vmem:[%s2358 + $0x130] sm:$0xff]
    %v2398 = vld [vmem:[%s2358 + $0x138] sm:$0xff]
    %v2399 = vld [vmem:[%s2358 + $0x140] sm:$0xff]
    %v2400 = vld [vmem:[%s2358 + $0x148] sm:$0xff]
    %v2401 = vld [vmem:[%s2358 + $0x150] sm:$0xff]
    %v2402 = vld [vmem:[%s2358 + $0x158] sm:$0xff]
    %v2403 = vld [vmem:[%s2358 + $0x160] sm:$0xff]
    %v2404 = vld [vmem:[%s2358 + $0x168] sm:$0xff]
    %v2405 = vld [vmem:[%s2358 + $0x170] sm:$0xff]
    %v2406 = vld [vmem:[%s2358 + $0x178] sm:$0xff]
    %v2407 = vld [vmem:[%s2358 + $0x180] sm:$0xff]
    %v2408 = vld [vmem:[%s2358 + $0x188] sm:$0xff]
    %v2409 = vld [vmem:[%s2358 + $0x190] sm:$0xff]
    %v2410 = vld [vmem:[%s2358 + $0x198] sm:$0xff]
    %v2411 = vld [vmem:[%s2358 + $0x1a0] sm:$0xff]
    %v2412 = vld [vmem:[%s2358 + $0x1a8] sm:$0xff]
    %v2413 = vld [vmem:[%s2358 + $0x1b0] sm:$0xff]
    %v2414 = vld [vmem:[%s2358 + $0x1b8] sm:$0xff]
    %v2415 = vld [vmem:[%s2358 + $0x1c0] sm:$0xff]
    %v2416 = vld [vmem:[%s2358 + $0x1c8] sm:$0xff]
    %v2417 = vld [vmem:[%s2358 + $0x1d0] sm:$0xff]
    %v2418 = vld [vmem:[%s2358 + $0x1d8] sm:$0xff]
    %v2419 = vld [vmem:[%s2358 + $0x1e0] sm:$0xff]
    %v2420 = vld [vmem:[%s2358 + $0x1e8] sm:$0xff]
    %v2421 = vld [vmem:[%s2358 + $0x1f0] sm:$0xff]
    %v2422 = vld [vmem:[%s2358 + $0x1f8] sm:$0xff]
    %s2423 = scalar_lea.vmem [#allocation2], 9216
    %v2424 = vld [vmem:[%s2423] sm:$0xff]
    %v2425 = vld [vmem:[%s2423 + $0x8] sm:$0xff]
    %v2426 = vld [vmem:[%s2423 + $0x10] sm:$0xff]
    %v2427 = vld [vmem:[%s2423 + $0x18] sm:$0xff]
    %v2428 = vld [vmem:[%s2423 + $0x20] sm:$0xff]
    %v2429 = vld [vmem:[%s2423 + $0x28] sm:$0xff]
    %v2430 = vld [vmem:[%s2423 + $0x30] sm:$0xff]
    %v2431 = vld [vmem:[%s2423 + $0x38] sm:$0xff]
    %v2432 = vld [vmem:[%s2423 + $0x40] sm:$0xff]
    %v2433 = vld [vmem:[%s2423 + $0x48] sm:$0xff]
    %v2434 = vld [vmem:[%s2423 + $0x50] sm:$0xff]
    %v2435 = vld [vmem:[%s2423 + $0x58] sm:$0xff]
    %v2436 = vld [vmem:[%s2423 + $0x60] sm:$0xff]
    %v2437 = vld [vmem:[%s2423 + $0x68] sm:$0xff]
    %v2438 = vld [vmem:[%s2423 + $0x70] sm:$0xff]
    %v2439 = vld [vmem:[%s2423 + $0x78] sm:$0xff]
    %v2440 = vld [vmem:[%s2423 + $0x80] sm:$0xff]
    %v2441 = vld [vmem:[%s2423 + $0x88] sm:$0xff]
    %v2442 = vld [vmem:[%s2423 + $0x90] sm:$0xff]
    %v2443 = vld [vmem:[%s2423 + $0x98] sm:$0xff]
    %v2444 = vld [vmem:[%s2423 + $0xa0] sm:$0xff]
    %v2445 = vld [vmem:[%s2423 + $0xa8] sm:$0xff]
    %v2446 = vld [vmem:[%s2423 + $0xb0] sm:$0xff]
    %v2447 = vld [vmem:[%s2423 + $0xb8] sm:$0xff]
    %v2448 = vld [vmem:[%s2423 + $0xc0] sm:$0xff]
    %v2449 = vld [vmem:[%s2423 + $0xc8] sm:$0xff]
    %v2450 = vld [vmem:[%s2423 + $0xd0] sm:$0xff]
    %v2451 = vld [vmem:[%s2423 + $0xd8] sm:$0xff]
    %v2452 = vld [vmem:[%s2423 + $0xe0] sm:$0xff]
    %v2453 = vld [vmem:[%s2423 + $0xe8] sm:$0xff]
    %v2454 = vld [vmem:[%s2423 + $0xf0] sm:$0xff]
    %v2455 = vld [vmem:[%s2423 + $0xf8] sm:$0xff]
    %v2456 = vld [vmem:[%s2423 + $0x100] sm:$0xff]
    %v2457 = vld [vmem:[%s2423 + $0x108] sm:$0xff]
    %v2458 = vld [vmem:[%s2423 + $0x110] sm:$0xff]
    %v2459 = vld [vmem:[%s2423 + $0x118] sm:$0xff]
    %v2460 = vld [vmem:[%s2423 + $0x120] sm:$0xff]
    %v2461 = vld [vmem:[%s2423 + $0x128] sm:$0xff]
    %v2462 = vld [vmem:[%s2423 + $0x130] sm:$0xff]
    %v2463 = vld [vmem:[%s2423 + $0x138] sm:$0xff]
    %v2464 = vld [vmem:[%s2423 + $0x140] sm:$0xff]
    %v2465 = vld [vmem:[%s2423 + $0x148] sm:$0xff]
    %v2466 = vld [vmem:[%s2423 + $0x150] sm:$0xff]
    %v2467 = vld [vmem:[%s2423 + $0x158] sm:$0xff]
    %v2468 = vld [vmem:[%s2423 + $0x160] sm:$0xff]
    %v2469 = vld [vmem:[%s2423 + $0x168] sm:$0xff]
    %v2470 = vld [vmem:[%s2423 + $0x170] sm:$0xff]
    %v2471 = vld [vmem:[%s2423 + $0x178] sm:$0xff]
    %v2472 = vld [vmem:[%s2423 + $0x180] sm:$0xff]
    %v2473 = vld [vmem:[%s2423 + $0x188] sm:$0xff]
    %v2474 = vld [vmem:[%s2423 + $0x190] sm:$0xff]
    %v2475 = vld [vmem:[%s2423 + $0x198] sm:$0xff]
    %v2476 = vld [vmem:[%s2423 + $0x1a0] sm:$0xff]
    %v2477 = vld [vmem:[%s2423 + $0x1a8] sm:$0xff]
    %v2478 = vld [vmem:[%s2423 + $0x1b0] sm:$0xff]
    %v2479 = vld [vmem:[%s2423 + $0x1b8] sm:$0xff]
    %v2480 = vld [vmem:[%s2423 + $0x1c0] sm:$0xff]
    %v2481 = vld [vmem:[%s2423 + $0x1c8] sm:$0xff]
    %v2482 = vld [vmem:[%s2423 + $0x1d0] sm:$0xff]
    %v2483 = vld [vmem:[%s2423 + $0x1d8] sm:$0xff]
    %v2484 = vld [vmem:[%s2423 + $0x1e0] sm:$0xff]
    %v2485 = vld [vmem:[%s2423 + $0x1e8] sm:$0xff]
    %v2486 = vld [vmem:[%s2423 + $0x1f0] sm:$0xff]
    %v2487 = vld [vmem:[%s2423 + $0x1f8] sm:$0xff]
    %2488 = vmatprep.subr.mxu0 %v2425
    %2489 = vmatpush1.msra.mxu0 %v2424
    %2490 = vmatprep.subr.mxu0 %v2427
    %2491 = vmatpush1.msra.mxu0 %v2426
    %2492 = vmatprep.subr.mxu0 %v2429
    %2493 = vmatpush1.msra.mxu0 %v2428
    %2494 = vmatprep.subr.mxu0 %v2431
    %2495 = vmatpush1.msra.mxu0 %v2430
    %2496 = vmatprep.subr.mxu0 %v2433
    %2497 = vmatpush1.msra.mxu0 %v2432
    %2498 = vmatprep.subr.mxu0 %v2435
    %2499 = vmatpush1.msra.mxu0 %v2434
    %2500 = vmatprep.subr.mxu0 %v2437
    %2501 = vmatpush1.msra.mxu0 %v2436
    %2502 = vmatprep.subr.mxu0 %v2439
    %2503 = vmatpush1.msra.mxu0 %v2438
    %2504 = vmatprep.subr.mxu0 %v2441
    %2505 = vmatpush1.msra.mxu0 %v2440
    %2506 = vmatprep.subr.mxu0 %v2443
    %2507 = vmatpush1.msra.mxu0 %v2442
    %2508 = vmatprep.subr.mxu0 %v2445
    %2509 = vmatpush1.msra.mxu0 %v2444
    %2510 = vmatprep.subr.mxu0 %v2447
    %2511 = vmatpush1.msra.mxu0 %v2446
    %2512 = vmatprep.subr.mxu0 %v2449
    %2513 = vmatpush1.msra.mxu0 %v2448
    %2514 = vmatprep.subr.mxu0 %v2451
    %2515 = vmatpush1.msra.mxu0 %v2450
    %2516 = vmatprep.subr.mxu0 %v2453
    %2517 = vmatpush1.msra.mxu0 %v2452
    %2518 = vmatprep.subr.mxu0 %v2455
    %2519 = vmatpush1.msra.mxu0 %v2454
    %2520 = vmatprep.subr.mxu0 %v2457
    %2521 = vmatpush1.msra.mxu0 %v2456
    %2522 = vmatprep.subr.mxu0 %v2459
    %2523 = vmatpush1.msra.mxu0 %v2458
    %2524 = vmatprep.subr.mxu0 %v2461
    %2525 = vmatpush1.msra.mxu0 %v2460
    %2526 = vmatprep.subr.mxu0 %v2463
    %2527 = vmatpush1.msra.mxu0 %v2462
    %2528 = vmatprep.subr.mxu0 %v2465
    %2529 = vmatpush1.msra.mxu0 %v2464
    %2530 = vmatprep.subr.mxu0 %v2467
    %2531 = vmatpush1.msra.mxu0 %v2466
    %2532 = vmatprep.subr.mxu0 %v2469
    %2533 = vmatpush1.msra.mxu0 %v2468
    %2534 = vmatprep.subr.mxu0 %v2471
    %2535 = vmatpush1.msra.mxu0 %v2470
    %2536 = vmatprep.subr.mxu0 %v2473
    %2537 = vmatpush1.msra.mxu0 %v2472
    %2538 = vmatprep.subr.mxu0 %v2475
    %2539 = vmatpush1.msra.mxu0 %v2474
    %2540 = vmatprep.subr.mxu0 %v2477
    %2541 = vmatpush1.msra.mxu0 %v2476
    %2542 = vmatprep.subr.mxu0 %v2479
    %2543 = vmatpush1.msra.mxu0 %v2478
    %2544 = vmatprep.subr.mxu0 %v2481
    %2545 = vmatpush1.msra.mxu0 %v2480
    %2546 = vmatprep.subr.mxu0 %v2483
    %2547 = vmatpush1.msra.mxu0 %v2482
    %2548 = vmatprep.subr.mxu0 %v2485
    %2549 = vmatpush1.msra.mxu0 %v2484
    %2550 = vmatprep.subr.mxu0 %v2487
    %2551 = vmatpush1.msra.mxu0 %v2486
    %2552 = vmatprep.mubr.f32.mxu0 %v2221
    %2553 = vmatmul.mubr.f32.gmra.mrb[0].mxu0 %v2220
    %v2554 = vpop.f32.mrb[0].mxu0
    %v2555 = vadd.f32 0.0, %v2554
    %v2556 = vpop.f32.mrb[0].mxu0
    %v2557 = vadd.f32 0.0, %v2556
    %2558 = vdwg.mxu0
    %2559 = vmatprep.subr.mxu0 %v2360
    %2560 = vmatpush1.msra.mxu0 %v2359
    %2561 = vmatprep.subr.mxu0 %v2362
    %2562 = vmatpush1.msra.mxu0 %v2361
    %2563 = vmatprep.subr.mxu0 %v2364
    %2564 = vmatpush1.msra.mxu0 %v2363
    %2565 = vmatprep.subr.mxu0 %v2366
    %2566 = vmatpush1.msra.mxu0 %v2365
    %2567 = vmatprep.subr.mxu0 %v2368
    %2568 = vmatpush1.msra.mxu0 %v2367
    %2569 = vmatprep.subr.mxu0 %v2370
    %2570 = vmatpush1.msra.mxu0 %v2369
    %2571 = vmatprep.subr.mxu0 %v2372
    %2572 = vmatpush1.msra.mxu0 %v2371
    %2573 = vmatprep.subr.mxu0 %v2374
    %2574 = vmatpush1.msra.mxu0 %v2373
    %2575 = vmatprep.subr.mxu0 %v2376
    %2576 = vmatpush1.msra.mxu0 %v2375
    %2577 = vmatprep.subr.mxu0 %v2378
    %2578 = vmatpush1.msra.mxu0 %v2377
    %2579 = vmatprep.subr.mxu0 %v2380
    %2580 = vmatpush1.msra.mxu0 %v2379
    %2581 = vmatprep.subr.mxu0 %v2382
    %2582 = vmatpush1.msra.mxu0 %v2381
    %2583 = vmatprep.subr.mxu0 %v2384
    %2584 = vmatpush1.msra.mxu0 %v2383
    %2585 = vmatprep.subr.mxu0 %v2386
    %2586 = vmatpush1.msra.mxu0 %v2385
    %2587 = vmatprep.subr.mxu0 %v2388
    %2588 = vmatpush1.msra.mxu0 %v2387
    %2589 = vmatprep.subr.mxu0 %v2390
    %2590 = vmatpush1.msra.mxu0 %v2389
    %2591 = vmatprep.subr.mxu0 %v2392
    %2592 = vmatpush1.msra.mxu0 %v2391
    %2593 = vmatprep.subr.mxu0 %v2394
    %2594 = vmatpush1.msra.mxu0 %v2393
    %2595 = vmatprep.subr.mxu0 %v2396
    %2596 = vmatpush1.msra.mxu0 %v2395
    %2597 = vmatprep.subr.mxu0 %v2398
    %2598 = vmatpush1.msra.mxu0 %v2397
    %2599 = vmatprep.subr.mxu0 %v2400
    %2600 = vmatpush1.msra.mxu0 %v2399
    %2601 = vmatprep.subr.mxu0 %v2402
    %2602 = vmatpush1.msra.mxu0 %v2401
    %2603 = vmatprep.subr.mxu0 %v2404
    %2604 = vmatpush1.msra.mxu0 %v2403
    %2605 = vmatprep.subr.mxu0 %v2406
    %2606 = vmatpush1.msra.mxu0 %v2405
    %2607 = vmatprep.subr.mxu0 %v2408
    %2608 = vmatpush1.msra.mxu0 %v2407
    %2609 = vmatprep.subr.mxu0 %v2410
    %2610 = vmatpush1.msra.mxu0 %v2409
    %2611 = vmatprep.subr.mxu0 %v2412
    %2612 = vmatpush1.msra.mxu0 %v2411
    %2613 = vmatprep.subr.mxu0 %v2414
    %2614 = vmatpush1.msra.mxu0 %v2413
    %2615 = vmatprep.subr.mxu0 %v2416
    %2616 = vmatpush1.msra.mxu0 %v2415
    %2617 = vmatprep.subr.mxu0 %v2418
    %2618 = vmatpush1.msra.mxu0 %v2417
    %2619 = vmatprep.subr.mxu0 %v2420
    %2620 = vmatpush1.msra.mxu0 %v2419
    %2621 = vmatprep.subr.mxu0 %v2422
    %2622 = vmatpush1.msra.mxu0 %v2421
    %2623 = vmatprep.mubr.f32.mxu0 %v2356
    %2624 = vmatmul.mubr.f32.gmra.mrb[0].mxu0 %v2354
    %v2625 = vpop.f32.mrb[0].mxu0
    %v2626 = vadd.f32 %v2555, %v2625
    %v2627 = vpop.f32.mrb[0].mxu0
    %v2628 = vadd.f32 %v2557, %v2627
    %2629 = vdwg.mxu0
    %s2630 = scalar_lea.vmem [#allocation4], 12
    %v2631 = vld [vmem:[%s2630] sm:$0x3]
    %v2633 = vlaneseq
    %v2634 = vshrl.u32 %v2633, 7
    %v2635 = vsub.s32 0, %v2634
    %v2636 = vrot.slane %v2631, %v2635
    %v2637 = vlaneseq
    %v2638 = vshrl.u32 %v2637, 7
    %v2639 = vsub.s32 1, %v2638
    %v2640 = vrot.slane %v2631, %v2639
    %v2643 = vadd.f32 %v2626, %v2636
    %v2644 = vadd.f32 %v2628, %v2640
    %vm2645 = vcmp.le.f32.partialorder %v2643, 0.0
    %vm2646 = vcmp.le.f32.partialorder %v2644, 0.0
    %vm2647 = vcmp.lt.f32.partialorder %v2643, 1.0
    %vm2648 = vcmp.lt.f32.partialorder %v2644, 1.0
    %v2649 = vmul.f32 %v2643, 0.5
    %v2650 = vmul.f32 %v2644, 0.5
    %v2651 = vmul.f32 %v2649, %v2643
    %v2652 = vmul.f32 %v2650, %v2644
    %v2653 = vsub.f32 %v2643, 0.5
    %v2654 = vsub.f32 %v2644, 0.5
    %v2655 = vsel %vm2647, %v2651, %v2653
    %v2656 = vsel %vm2648, %v2652, %v2654
    %v2657 = vsel %vm2645, 0.0, %v2655
    %v2658 = vsel %vm2646, 0.0, %v2656
    %s2659 = scalar_lea.vmem [#allocation2], 9728
    %v2660 = vld [vmem:[%s2659] sm:$0xff]
    %v2661 = vld [vmem:[%s2659 + $0x8] sm:$0xff]
    %v2662 = vld [vmem:[%s2659 + $0x10] sm:$0xff]
    %v2663 = vld [vmem:[%s2659 + $0x18] sm:$0xff]
    %v2664 = vld [vmem:[%s2659 + $0x20] sm:$0xff]
    %v2665 = vld [vmem:[%s2659 + $0x28] sm:$0xff]
    %v2666 = vld [vmem:[%s2659 + $0x30] sm:$0xff]
    %v2667 = vld [vmem:[%s2659 + $0x38] sm:$0xff]
    %v2668 = vld [vmem:[%s2659 + $0x40] sm:$0xff]
    %v2669 = vld [vmem:[%s2659 + $0x48] sm:$0xff]
    %v2670 = vld [vmem:[%s2659 + $0x50] sm:$0xff]
    %v2671 = vld [vmem:[%s2659 + $0x58] sm:$0xff]
    %v2672 = vld [vmem:[%s2659 + $0x60] sm:$0xff]
    %v2673 = vld [vmem:[%s2659 + $0x68] sm:$0xff]
    %v2674 = vld [vmem:[%s2659 + $0x70] sm:$0xff]
    %v2675 = vld [vmem:[%s2659 + $0x78] sm:$0xff]
    %v2676 = vld [vmem:[%s2659 + $0x80] sm:$0xff]
    %v2677 = vld [vmem:[%s2659 + $0x88] sm:$0xff]
    %v2678 = vld [vmem:[%s2659 + $0x90] sm:$0xff]
    %v2679 = vld [vmem:[%s2659 + $0x98] sm:$0xff]
    %v2680 = vld [vmem:[%s2659 + $0xa0] sm:$0xff]
    %v2681 = vld [vmem:[%s2659 + $0xa8] sm:$0xff]
    %v2682 = vld [vmem:[%s2659 + $0xb0] sm:$0xff]
    %v2683 = vld [vmem:[%s2659 + $0xb8] sm:$0xff]
    %v2684 = vld [vmem:[%s2659 + $0xc0] sm:$0xff]
    %v2685 = vld [vmem:[%s2659 + $0xc8] sm:$0xff]
    %v2686 = vld [vmem:[%s2659 + $0xd0] sm:$0xff]
    %v2687 = vld [vmem:[%s2659 + $0xd8] sm:$0xff]
    %v2688 = vld [vmem:[%s2659 + $0xe0] sm:$0xff]
    %v2689 = vld [vmem:[%s2659 + $0xe8] sm:$0xff]
    %v2690 = vld [vmem:[%s2659 + $0xf0] sm:$0xff]
    %v2691 = vld [vmem:[%s2659 + $0xf8] sm:$0xff]
    %v2692 = vld [vmem:[%s2659 + $0x100] sm:$0xff]
    %v2693 = vld [vmem:[%s2659 + $0x108] sm:$0xff]
    %v2694 = vld [vmem:[%s2659 + $0x110] sm:$0xff]
    %v2695 = vld [vmem:[%s2659 + $0x118] sm:$0xff]
    %v2696 = vld [vmem:[%s2659 + $0x120] sm:$0xff]
    %v2697 = vld [vmem:[%s2659 + $0x128] sm:$0xff]
    %v2698 = vld [vmem:[%s2659 + $0x130] sm:$0xff]
    %v2699 = vld [vmem:[%s2659 + $0x138] sm:$0xff]
    %v2700 = vld [vmem:[%s2659 + $0x140] sm:$0xff]
    %v2701 = vld [vmem:[%s2659 + $0x148] sm:$0xff]
    %v2702 = vld [vmem:[%s2659 + $0x150] sm:$0xff]
    %v2703 = vld [vmem:[%s2659 + $0x158] sm:$0xff]
    %v2704 = vld [vmem:[%s2659 + $0x160] sm:$0xff]
    %v2705 = vld [vmem:[%s2659 + $0x168] sm:$0xff]
    %v2706 = vld [vmem:[%s2659 + $0x170] sm:$0xff]
    %v2707 = vld [vmem:[%s2659 + $0x178] sm:$0xff]
    %v2708 = vld [vmem:[%s2659 + $0x180] sm:$0xff]
    %v2709 = vld [vmem:[%s2659 + $0x188] sm:$0xff]
    %v2710 = vld [vmem:[%s2659 + $0x190] sm:$0xff]
    %v2711 = vld [vmem:[%s2659 + $0x198] sm:$0xff]
    %v2712 = vld [vmem:[%s2659 + $0x1a0] sm:$0xff]
    %v2713 = vld [vmem:[%s2659 + $0x1a8] sm:$0xff]
    %v2714 = vld [vmem:[%s2659 + $0x1b0] sm:$0xff]
    %v2715 = vld [vmem:[%s2659 + $0x1b8] sm:$0xff]
    %v2716 = vld [vmem:[%s2659 + $0x1c0] sm:$0xff]
    %v2717 = vld [vmem:[%s2659 + $0x1c8] sm:$0xff]
    %v2718 = vld [vmem:[%s2659 + $0x1d0] sm:$0xff]
    %v2719 = vld [vmem:[%s2659 + $0x1d8] sm:$0xff]
    %v2720 = vld [vmem:[%s2659 + $0x1e0] sm:$0xff]
    %v2721 = vld [vmem:[%s2659 + $0x1e8] sm:$0xff]
    %v2722 = vld [vmem:[%s2659 + $0x1f0] sm:$0xff]
    %v2723 = vld [vmem:[%s2659 + $0x1f8] sm:$0xff]
    %2724 = vmatprep.subr.mxu0 %v2661
    %2725 = vmatpush1.msra.mxu0 %v2660
    %2726 = vmatprep.subr.mxu0 %v2663
    %2727 = vmatpush1.msra.mxu0 %v2662
    %2728 = vmatprep.subr.mxu0 %v2665
    %2729 = vmatpush1.msra.mxu0 %v2664
    %2730 = vmatprep.subr.mxu0 %v2667
    %2731 = vmatpush1.msra.mxu0 %v2666
    %2732 = vmatprep.subr.mxu0 %v2669
    %2733 = vmatpush1.msra.mxu0 %v2668
    %2734 = vmatprep.subr.mxu0 %v2671
    %2735 = vmatpush1.msra.mxu0 %v2670
    %2736 = vmatprep.subr.mxu0 %v2673
    %2737 = vmatpush1.msra.mxu0 %v2672
    %2738 = vmatprep.subr.mxu0 %v2675
    %2739 = vmatpush1.msra.mxu0 %v2674
    %2740 = vmatprep.subr.mxu0 %v2677
    %2741 = vmatpush1.msra.mxu0 %v2676
    %2742 = vmatprep.subr.mxu0 %v2679
    %2743 = vmatpush1.msra.mxu0 %v2678
    %2744 = vmatprep.subr.mxu0 %v2681
    %2745 = vmatpush1.msra.mxu0 %v2680
    %2746 = vmatprep.subr.mxu0 %v2683
    %2747 = vmatpush1.msra.mxu0 %v2682
    %2748 = vmatprep.subr.mxu0 %v2685
    %2749 = vmatpush1.msra.mxu0 %v2684
    %2750 = vmatprep.subr.mxu0 %v2687
    %2751 = vmatpush1.msra.mxu0 %v2686
    %2752 = vmatprep.subr.mxu0 %v2689
    %2753 = vmatpush1.msra.mxu0 %v2688
    %2754 = vmatprep.subr.mxu0 %v2691
    %2755 = vmatpush1.msra.mxu0 %v2690
    %2756 = vmatprep.subr.mxu0 %v2693
    %2757 = vmatpush1.msra.mxu0 %v2692
    %2758 = vmatprep.subr.mxu0 %v2695
    %2759 = vmatpush1.msra.mxu0 %v2694
    %2760 = vmatprep.subr.mxu0 %v2697
    %2761 = vmatpush1.msra.mxu0 %v2696
    %2762 = vmatprep.subr.mxu0 %v2699
    %2763 = vmatpush1.msra.mxu0 %v2698
    %2764 = vmatprep.subr.mxu0 %v2701
    %2765 = vmatpush1.msra.mxu0 %v2700
    %2766 = vmatprep.subr.mxu0 %v2703
    %2767 = vmatpush1.msra.mxu0 %v2702
    %2768 = vmatprep.subr.mxu0 %v2705
    %2769 = vmatpush1.msra.mxu0 %v2704
    %2770 = vmatprep.subr.mxu0 %v2707
    %2771 = vmatpush1.msra.mxu0 %v2706
    %2772 = vmatprep.subr.mxu0 %v2709
    %2773 = vmatpush1.msra.mxu0 %v2708
    %2774 = vmatprep.subr.mxu0 %v2711
    %2775 = vmatpush1.msra.mxu0 %v2710
    %2776 = vmatprep.subr.mxu0 %v2713
    %2777 = vmatpush1.msra.mxu0 %v2712
    %2778 = vmatprep.subr.mxu0 %v2715
    %2779 = vmatpush1.msra.mxu0 %v2714
    %2780 = vmatprep.subr.mxu0 %v2717
    %2781 = vmatpush1.msra.mxu0 %v2716
    %2782 = vmatprep.subr.mxu0 %v2719
    %2783 = vmatpush1.msra.mxu0 %v2718
    %2784 = vmatprep.subr.mxu0 %v2721
    %2785 = vmatpush1.msra.mxu0 %v2720
    %2786 = vmatprep.subr.mxu0 %v2723
    %2787 = vmatpush1.msra.mxu0 %v2722
    %2788 = vmatprep.mubr.f32.mxu0 %v2658
    %2789 = vmatmul.mubr.f32.gmra.mrb[0].mxu0 %v2657
    %v2790 = vpop.f32.mrb[0].mxu0
    %v2791 = vadd.f32 0.0, %v2790
    %v2792 = vpop.f32.mrb[0].mxu0
    %v2793 = vadd.f32 0.0, %v2792
    %2794 = vdwg.mxu0
    %s2795 = scalar_lea.vmem [#allocation2], 10240
    %v2796 = vld [vmem:[%s2795] sm:$0xff]
    %v2797 = vld [vmem:[%s2795 + $0x8] sm:$0xff]
    %v2798 = vld [vmem:[%s2795 + $0x10] sm:$0xff]
    %v2799 = vld [vmem:[%s2795 + $0x18] sm:$0xff]
    %v2800 = vld [vmem:[%s2795 + $0x20] sm:$0xff]
    %v2801 = vld [vmem:[%s2795 + $0x28] sm:$0xff]
    %v2802 = vld [vmem:[%s2795 + $0x30] sm:$0xff]
    %v2803 = vld [vmem:[%s2795 + $0x38] sm:$0xff]
    %v2804 = vld [vmem:[%s2795 + $0x40] sm:$0xff]
    %v2805 = vld [vmem:[%s2795 + $0x48] sm:$0xff]
    %v2806 = vld [vmem:[%s2795 + $0x50] sm:$0xff]
    %v2807 = vld [vmem:[%s2795 + $0x58] sm:$0xff]
    %v2808 = vld [vmem:[%s2795 + $0x60] sm:$0xff]
    %v2809 = vld [vmem:[%s2795 + $0x68] sm:$0xff]
    %v2810 = vld [vmem:[%s2795 + $0x70] sm:$0xff]
    %v2811 = vld [vmem:[%s2795 + $0x78] sm:$0xff]
    %v2812 = vld [vmem:[%s2795 + $0x80] sm:$0xff]
    %v2813 = vld [vmem:[%s2795 + $0x88] sm:$0xff]
    %v2814 = vld [vmem:[%s2795 + $0x90] sm:$0xff]
    %v2815 = vld [vmem:[%s2795 + $0x98] sm:$0xff]
    %v2816 = vld [vmem:[%s2795 + $0xa0] sm:$0xff]
    %v2817 = vld [vmem:[%s2795 + $0xa8] sm:$0xff]
    %v2818 = vld [vmem:[%s2795 + $0xb0] sm:$0xff]
    %v2819 = vld [vmem:[%s2795 + $0xb8] sm:$0xff]
    %v2820 = vld [vmem:[%s2795 + $0xc0] sm:$0xff]
    %v2821 = vld [vmem:[%s2795 + $0xc8] sm:$0xff]
    %v2822 = vld [vmem:[%s2795 + $0xd0] sm:$0xff]
    %v2823 = vld [vmem:[%s2795 + $0xd8] sm:$0xff]
    %v2824 = vld [vmem:[%s2795 + $0xe0] sm:$0xff]
    %v2825 = vld [vmem:[%s2795 + $0xe8] sm:$0xff]
    %v2826 = vld [vmem:[%s2795 + $0xf0] sm:$0xff]
    %v2827 = vld [vmem:[%s2795 + $0xf8] sm:$0xff]
    %v2828 = vld [vmem:[%s2795 + $0x100] sm:$0xff]
    %v2829 = vld [vmem:[%s2795 + $0x108] sm:$0xff]
    %v2830 = vld [vmem:[%s2795 + $0x110] sm:$0xff]
    %v2831 = vld [vmem:[%s2795 + $0x118] sm:$0xff]
    %v2832 = vld [vmem:[%s2795 + $0x120] sm:$0xff]
    %v2833 = vld [vmem:[%s2795 + $0x128] sm:$0xff]
    %v2834 = vld [vmem:[%s2795 + $0x130] sm:$0xff]
    %v2835 = vld [vmem:[%s2795 + $0x138] sm:$0xff]
    %v2836 = vld [vmem:[%s2795 + $0x140] sm:$0xff]
    %v2837 = vld [vmem:[%s2795 + $0x148] sm:$0xff]
    %v2838 = vld [vmem:[%s2795 + $0x150] sm:$0xff]
    %v2839 = vld [vmem:[%s2795 + $0x158] sm:$0xff]
    %v2840 = vld [vmem:[%s2795 + $0x160] sm:$0xff]
    %v2841 = vld [vmem:[%s2795 + $0x168] sm:$0xff]
    %v2842 = vld [vmem:[%s2795 + $0x170] sm:$0xff]
    %v2843 = vld [vmem:[%s2795 + $0x178] sm:$0xff]
    %v2844 = vld [vmem:[%s2795 + $0x180] sm:$0xff]
    %v2845 = vld [vmem:[%s2795 + $0x188] sm:$0xff]
    %v2846 = vld [vmem:[%s2795 + $0x190] sm:$0xff]
    %v2847 = vld [vmem:[%s2795 + $0x198] sm:$0xff]
    %v2848 = vld [vmem:[%s2795 + $0x1a0] sm:$0xff]
    %v2849 = vld [vmem:[%s2795 + $0x1a8] sm:$0xff]
    %v2850 = vld [vmem:[%s2795 + $0x1b0] sm:$0xff]
    %v2851 = vld [vmem:[%s2795 + $0x1b8] sm:$0xff]
    %v2852 = vld [vmem:[%s2795 + $0x1c0] sm:$0xff]
    %v2853 = vld [vmem:[%s2795 + $0x1c8] sm:$0xff]
    %v2854 = vld [vmem:[%s2795 + $0x1d0] sm:$0xff]
    %v2855 = vld [vmem:[%s2795 + $0x1d8] sm:$0xff]
    %v2856 = vld [vmem:[%s2795 + $0x1e0] sm:$0xff]
    %v2857 = vld [vmem:[%s2795 + $0x1e8] sm:$0xff]
    %v2858 = vld [vmem:[%s2795 + $0x1f0] sm:$0xff]
    %v2859 = vld [vmem:[%s2795 + $0x1f8] sm:$0xff]
    %2860 = vmatprep.subr.mxu0 %v2797
    %2861 = vmatpush1.msra.mxu0 %v2796
    %2862 = vmatprep.subr.mxu0 %v2799
    %2863 = vmatpush1.msra.mxu0 %v2798
    %2864 = vmatprep.subr.mxu0 %v2801
    %2865 = vmatpush1.msra.mxu0 %v2800
    %2866 = vmatprep.subr.mxu0 %v2803
    %2867 = vmatpush1.msra.mxu0 %v2802
    %2868 = vmatprep.subr.mxu0 %v2805
    %2869 = vmatpush1.msra.mxu0 %v2804
    %2870 = vmatprep.subr.mxu0 %v2807
    %2871 = vmatpush1.msra.mxu0 %v2806
    %2872 = vmatprep.subr.mxu0 %v2809
    %2873 = vmatpush1.msra.mxu0 %v2808
    %2874 = vmatprep.subr.mxu0 %v2811
    %2875 = vmatpush1.msra.mxu0 %v2810
    %2876 = vmatprep.subr.mxu0 %v2813
    %2877 = vmatpush1.msra.mxu0 %v2812
    %2878 = vmatprep.subr.mxu0 %v2815
    %2879 = vmatpush1.msra.mxu0 %v2814
    %2880 = vmatprep.subr.mxu0 %v2817
    %2881 = vmatpush1.msra.mxu0 %v2816
    %2882 = vmatprep.subr.mxu0 %v2819
    %2883 = vmatpush1.msra.mxu0 %v2818
    %2884 = vmatprep.subr.mxu0 %v2821
    %2885 = vmatpush1.msra.mxu0 %v2820
    %2886 = vmatprep.subr.mxu0 %v2823
    %2887 = vmatpush1.msra.mxu0 %v2822
    %2888 = vmatprep.subr.mxu0 %v2825
    %2889 = vmatpush1.msra.mxu0 %v2824
    %2890 = vmatprep.subr.mxu0 %v2827
    %2891 = vmatpush1.msra.mxu0 %v2826
    %2892 = vmatprep.subr.mxu0 %v2829
    %2893 = vmatpush1.msra.mxu0 %v2828
    %2894 = vmatprep.subr.mxu0 %v2831
    %2895 = vmatpush1.msra.mxu0 %v2830
    %2896 = vmatprep.subr.mxu0 %v2833
    %2897 = vmatpush1.msra.mxu0 %v2832
    %2898 = vmatprep.subr.mxu0 %v2835
    %2899 = vmatpush1.msra.mxu0 %v2834
    %2900 = vmatprep.subr.mxu0 %v2837
    %2901 = vmatpush1.msra.mxu0 %v2836
    %2902 = vmatprep.subr.mxu0 %v2839
    %2903 = vmatpush1.msra.mxu0 %v2838
    %2904 = vmatprep.subr.mxu0 %v2841
    %2905 = vmatpush1.msra.mxu0 %v2840
    %2906 = vmatprep.subr.mxu0 %v2843
    %2907 = vmatpush1.msra.mxu0 %v2842
    %2908 = vmatprep.subr.mxu0 %v2845
    %2909 = vmatpush1.msra.mxu0 %v2844
    %2910 = vmatprep.subr.mxu0 %v2847
    %2911 = vmatpush1.msra.mxu0 %v2846
    %2912 = vmatprep.subr.mxu0 %v2849
    %2913 = vmatpush1.msra.mxu0 %v2848
    %2914 = vmatprep.subr.mxu0 %v2851
    %2915 = vmatpush1.msra.mxu0 %v2850
    %2916 = vmatprep.subr.mxu0 %v2853
    %2917 = vmatpush1.msra.mxu0 %v2852
    %2918 = vmatprep.subr.mxu0 %v2855
    %2919 = vmatpush1.msra.mxu0 %v2854
    %2920 = vmatprep.subr.mxu0 %v2857
    %2921 = vmatpush1.msra.mxu0 %v2856
    %2922 = vmatprep.subr.mxu0 %v2859
    %2923 = vmatpush1.msra.mxu0 %v2858
    %2924 = vmatprep.mubr.f32.mxu0 %v2658
    %2925 = vmatmul.mubr.f32.gmra.mrb[0].mxu0 %v2657
    %v2926 = vpop.f32.mrb[0].mxu0
    %v2927 = vadd.f32 0.0, %v2926
    %v2928 = vpop.f32.mrb[0].mxu0
    %v2929 = vadd.f32 0.0, %v2928
    %2930 = vdwg.mxu0
    %v2931 = vsub.f32 %v2220, %v2927
    %v2932 = vsub.f32 %v2221, %v2929
    %s2933 = scalar_lea.vmem [#allocation2], 7680
    %v2934 = vld [vmem:[%s2933] sm:$0xff]
    %v2935 = vld [vmem:[%s2933 + $0x8] sm:$0xff]
    %v2936 = vld [vmem:[%s2933 + $0x10] sm:$0xff]
    %v2937 = vld [vmem:[%s2933 + $0x18] sm:$0xff]
    %v2938 = vld [vmem:[%s2933 + $0x20] sm:$0xff]
    %v2939 = vld [vmem:[%s2933 + $0x28] sm:$0xff]
    %v2940 = vld [vmem:[%s2933 + $0x30] sm:$0xff]
    %v2941 = vld [vmem:[%s2933 + $0x38] sm:$0xff]
    %v2942 = vld [vmem:[%s2933 + $0x40] sm:$0xff]
    %v2943 = vld [vmem:[%s2933 + $0x48] sm:$0xff]
    %v2944 = vld [vmem:[%s2933 + $0x50] sm:$0xff]
    %v2945 = vld [vmem:[%s2933 + $0x58] sm:$0xff]
    %v2946 = vld [vmem:[%s2933 + $0x60] sm:$0xff]
    %v2947 = vld [vmem:[%s2933 + $0x68] sm:$0xff]
    %v2948 = vld [vmem:[%s2933 + $0x70] sm:$0xff]
    %v2949 = vld [vmem:[%s2933 + $0x78] sm:$0xff]
    %v2950 = vld [vmem:[%s2933 + $0x80] sm:$0xff]
    %v2951 = vld [vmem:[%s2933 + $0x88] sm:$0xff]
    %v2952 = vld [vmem:[%s2933 + $0x90] sm:$0xff]
    %v2953 = vld [vmem:[%s2933 + $0x98] sm:$0xff]
    %v2954 = vld [vmem:[%s2933 + $0xa0] sm:$0xff]
    %v2955 = vld [vmem:[%s2933 + $0xa8] sm:$0xff]
    %v2956 = vld [vmem:[%s2933 + $0xb0] sm:$0xff]
    %v2957 = vld [vmem:[%s2933 + $0xb8] sm:$0xff]
    %v2958 = vld [vmem:[%s2933 + $0xc0] sm:$0xff]
    %v2959 = vld [vmem:[%s2933 + $0xc8] sm:$0xff]
    %v2960 = vld [vmem:[%s2933 + $0xd0] sm:$0xff]
    %v2961 = vld [vmem:[%s2933 + $0xd8] sm:$0xff]
    %v2962 = vld [vmem:[%s2933 + $0xe0] sm:$0xff]
    %v2963 = vld [vmem:[%s2933 + $0xe8] sm:$0xff]
    %v2964 = vld [vmem:[%s2933 + $0xf0] sm:$0xff]
    %v2965 = vld [vmem:[%s2933 + $0xf8] sm:$0xff]
    %v2966 = vld [vmem:[%s2933 + $0x100] sm:$0xff]
    %v2967 = vld [vmem:[%s2933 + $0x108] sm:$0xff]
    %v2968 = vld [vmem:[%s2933 + $0x110] sm:$0xff]
    %v2969 = vld [vmem:[%s2933 + $0x118] sm:$0xff]
    %v2970 = vld [vmem:[%s2933 + $0x120] sm:$0xff]
    %v2971 = vld [vmem:[%s2933 + $0x128] sm:$0xff]
    %v2972 = vld [vmem:[%s2933 + $0x130] sm:$0xff]
    %v2973 = vld [vmem:[%s2933 + $0x138] sm:$0xff]
    %v2974 = vld [vmem:[%s2933 + $0x140] sm:$0xff]
    %v2975 = vld [vmem:[%s2933 + $0x148] sm:$0xff]
    %v2976 = vld [vmem:[%s2933 + $0x150] sm:$0xff]
    %v2977 = vld [vmem:[%s2933 + $0x158] sm:$0xff]
    %v2978 = vld [vmem:[%s2933 + $0x160] sm:$0xff]
    %v2979 = vld [vmem:[%s2933 + $0x168] sm:$0xff]
    %v2980 = vld [vmem:[%s2933 + $0x170] sm:$0xff]
    %v2981 = vld [vmem:[%s2933 + $0x178] sm:$0xff]
    %v2982 = vld [vmem:[%s2933 + $0x180] sm:$0xff]
    %v2983 = vld [vmem:[%s2933 + $0x188] sm:$0xff]
    %v2984 = vld [vmem:[%s2933 + $0x190] sm:$0xff]
    %v2985 = vld [vmem:[%s2933 + $0x198] sm:$0xff]
    %v2986 = vld [vmem:[%s2933 + $0x1a0] sm:$0xff]
    %v2987 = vld [vmem:[%s2933 + $0x1a8] sm:$0xff]
    %v2988 = vld [vmem:[%s2933 + $0x1b0] sm:$0xff]
    %v2989 = vld [vmem:[%s2933 + $0x1b8] sm:$0xff]
    %v2990 = vld [vmem:[%s2933 + $0x1c0] sm:$0xff]
    %v2991 = vld [vmem:[%s2933 + $0x1c8] sm:$0xff]
    %v2992 = vld [vmem:[%s2933 + $0x1d0] sm:$0xff]
    %v2993 = vld [vmem:[%s2933 + $0x1d8] sm:$0xff]
    %v2994 = vld [vmem:[%s2933 + $0x1e0] sm:$0xff]
    %v2995 = vld [vmem:[%s2933 + $0x1e8] sm:$0xff]
    %v2996 = vld [vmem:[%s2933 + $0x1f0] sm:$0xff]
    %v2997 = vld [vmem:[%s2933 + $0x1f8] sm:$0xff]
    %2998 = vmatprep.subr.mxu0 %v2935
    %2999 = vmatpush1.msra.mxu0 %v2934
    %3000 = vmatprep.subr.mxu0 %v2937
    %3001 = vmatpush1.msra.mxu0 %v2936
    %3002 = vmatprep.subr.mxu0 %v2939
    %3003 = vmatpush1.msra.mxu0 %v2938
    %3004 = vmatprep.subr.mxu0 %v2941
    %3005 = vmatpush1.msra.mxu0 %v2940
    %3006 = vmatprep.subr.mxu0 %v2943
    %3007 = vmatpush1.msra.mxu0 %v2942
    %3008 = vmatprep.subr.mxu0 %v2945
    %3009 = vmatpush1.msra.mxu0 %v2944
    %3010 = vmatprep.subr.mxu0 %v2947
    %3011 = vmatpush1.msra.mxu0 %v2946
    %3012 = vmatprep.subr.mxu0 %v2949
    %3013 = vmatpush1.msra.mxu0 %v2948
    %3014 = vmatprep.subr.mxu0 %v2951
    %3015 = vmatpush1.msra.mxu0 %v2950
    %3016 = vmatprep.subr.mxu0 %v2953
    %3017 = vmatpush1.msra.mxu0 %v2952
    %3018 = vmatprep.subr.mxu0 %v2955
    %3019 = vmatpush1.msra.mxu0 %v2954
    %3020 = vmatprep.subr.mxu0 %v2957
    %3021 = vmatpush1.msra.mxu0 %v2956
    %3022 = vmatprep.subr.mxu0 %v2959
    %3023 = vmatpush1.msra.mxu0 %v2958
    %3024 = vmatprep.subr.mxu0 %v2961
    %3025 = vmatpush1.msra.mxu0 %v2960
    %3026 = vmatprep.subr.mxu0 %v2963
    %3027 = vmatpush1.msra.mxu0 %v2962
    %3028 = vmatprep.subr.mxu0 %v2965
    %3029 = vmatpush1.msra.mxu0 %v2964
    %3030 = vmatprep.subr.mxu0 %v2967
    %3031 = vmatpush1.msra.mxu0 %v2966
    %3032 = vmatprep.subr.mxu0 %v2969
    %3033 = vmatpush1.msra.mxu0 %v2968
    %3034 = vmatprep.subr.mxu0 %v2971
    %3035 = vmatpush1.msra.mxu0 %v2970
    %3036 = vmatprep.subr.mxu0 %v2973
    %3037 = vmatpush1.msra.mxu0 %v2972
    %3038 = vmatprep.subr.mxu0 %v2975
    %3039 = vmatpush1.msra.mxu0 %v2974
    %3040 = vmatprep.subr.mxu0 %v2977
    %3041 = vmatpush1.msra.mxu0 %v2976
    %3042 = vmatprep.subr.mxu0 %v2979
    %3043 = vmatpush1.msra.mxu0 %v2978
    %3044 = vmatprep.subr.mxu0 %v2981
    %3045 = vmatpush1.msra.mxu0 %v2980
    %3046 = vmatprep.subr.mxu0 %v2983
    %3047 = vmatpush1.msra.mxu0 %v2982
    %3048 = vmatprep.subr.mxu0 %v2985
    %3049 = vmatpush1.msra.mxu0 %v2984
    %3050 = vmatprep.subr.mxu0 %v2987
    %3051 = vmatpush1.msra.mxu0 %v2986
    %3052 = vmatprep.subr.mxu0 %v2989
    %3053 = vmatpush1.msra.mxu0 %v2988
    %3054 = vmatprep.subr.mxu0 %v2991
    %3055 = vmatpush1.msra.mxu0 %v2990
    %3056 = vmatprep.subr.mxu0 %v2993
    %3057 = vmatpush1.msra.mxu0 %v2992
    %3058 = vmatprep.subr.mxu0 %v2995
    %3059 = vmatpush1.msra.mxu0 %v2994
    %3060 = vmatprep.subr.mxu0 %v2997
    %3061 = vmatpush1.msra.mxu0 %v2996
    %3062 = vmatprep.mubr.f32.mxu0 %v2932
    %3063 = vmatmul.mubr.f32.gmra.mrb[0].mxu0 %v2931
    %v3064 = vpop.f32.mrb[0].mxu0
    %v3065 = vadd.f32 0.0, %v3064
    %v3066 = vpop.f32.mrb[0].mxu0
    %v3067 = vadd.f32 0.0, %v3066
    %3068 = vdwg.mxu0
    %v3069 = vadd.f32 %v1783, %v3065
    %v3070 = vadd.f32 %v1784, %v3067
    %v3071 = vsub.f32 %v2791, %v2354
    %v3072 = vsub.f32 %v2793, %v2356
    %s3073 = scalar_lea.vmem [#allocation2], 10752
    %v3074 = vld [vmem:[%s3073] sm:$0xff]
    %v3075 = vld [vmem:[%s3073 + $0x8] sm:$0xff]
    %v3076 = vld [vmem:[%s3073 + $0x10] sm:$0xff]
    %v3077 = vld [vmem:[%s3073 + $0x18] sm:$0xff]
    %v3078 = vld [vmem:[%s3073 + $0x20] sm:$0xff]
    %v3079 = vld [vmem:[%s3073 + $0x28] sm:$0xff]
    %v3080 = vld [vmem:[%s3073 + $0x30] sm:$0xff]
    %v3081 = vld [vmem:[%s3073 + $0x38] sm:$0xff]
    %v3082 = vld [vmem:[%s3073 + $0x40] sm:$0xff]
    %v3083 = vld [vmem:[%s3073 + $0x48] sm:$0xff]
    %v3084 = vld [vmem:[%s3073 + $0x50] sm:$0xff]
    %v3085 = vld [vmem:[%s3073 + $0x58] sm:$0xff]
    %v3086 = vld [vmem:[%s3073 + $0x60] sm:$0xff]
    %v3087 = vld [vmem:[%s3073 + $0x68] sm:$0xff]
    %v3088 = vld [vmem:[%s3073 + $0x70] sm:$0xff]
    %v3089 = vld [vmem:[%s3073 + $0x78] sm:$0xff]
    %v3090 = vld [vmem:[%s3073 + $0x80] sm:$0xff]
    %v3091 = vld [vmem:[%s3073 + $0x88] sm:$0xff]
    %v3092 = vld [vmem:[%s3073 + $0x90] sm:$0xff]
    %v3093 = vld [vmem:[%s3073 + $0x98] sm:$0xff]
    %v3094 = vld [vmem:[%s3073 + $0xa0] sm:$0xff]
    %v3095 = vld [vmem:[%s3073 + $0xa8] sm:$0xff]
    %v3096 = vld [vmem:[%s3073 + $0xb0] sm:$0xff]
    %v3097 = vld [vmem:[%s3073 + $0xb8] sm:$0xff]
    %v3098 = vld [vmem:[%s3073 + $0xc0] sm:$0xff]
    %v3099 = vld [vmem:[%s3073 + $0xc8] sm:$0xff]
    %v3100 = vld [vmem:[%s3073 + $0xd0] sm:$0xff]
    %v3101 = vld [vmem:[%s3073 + $0xd8] sm:$0xff]
    %v3102 = vld [vmem:[%s3073 + $0xe0] sm:$0xff]
    %v3103 = vld [vmem:[%s3073 + $0xe8] sm:$0xff]
    %v3104 = vld [vmem:[%s3073 + $0xf0] sm:$0xff]
    %v3105 = vld [vmem:[%s3073 + $0xf8] sm:$0xff]
    %v3106 = vld [vmem:[%s3073 + $0x100] sm:$0xff]
    %v3107 = vld [vmem:[%s3073 + $0x108] sm:$0xff]
    %v3108 = vld [vmem:[%s3073 + $0x110] sm:$0xff]
    %v3109 = vld [vmem:[%s3073 + $0x118] sm:$0xff]
    %v3110 = vld [vmem:[%s3073 + $0x120] sm:$0xff]
    %v3111 = vld [vmem:[%s3073 + $0x128] sm:$0xff]
    %v3112 = vld [vmem:[%s3073 + $0x130] sm:$0xff]
    %v3113 = vld [vmem:[%s3073 + $0x138] sm:$0xff]
    %v3114 = vld [vmem:[%s3073 + $0x140] sm:$0xff]
    %v3115 = vld [vmem:[%s3073 + $0x148] sm:$0xff]
    %v3116 = vld [vmem:[%s3073 + $0x150] sm:$0xff]
    %v3117 = vld [vmem:[%s3073 + $0x158] sm:$0xff]
    %v3118 = vld [vmem:[%s3073 + $0x160] sm:$0xff]
    %v3119 = vld [vmem:[%s3073 + $0x168] sm:$0xff]
    %v3120 = vld [vmem:[%s3073 + $0x170] sm:$0xff]
    %v3121 = vld [vmem:[%s3073 + $0x178] sm:$0xff]
    %v3122 = vld [vmem:[%s3073 + $0x180] sm:$0xff]
    %v3123 = vld [vmem:[%s3073 + $0x188] sm:$0xff]
    %v3124 = vld [vmem:[%s3073 + $0x190] sm:$0xff]
    %v3125 = vld [vmem:[%s3073 + $0x198] sm:$0xff]
    %v3126 = vld [vmem:[%s3073 + $0x1a0] sm:$0xff]
    %v3127 = vld [vmem:[%s3073 + $0x1a8] sm:$0xff]
    %v3128 = vld [vmem:[%s3073 + $0x1b0] sm:$0xff]
    %v3129 = vld [vmem:[%s3073 + $0x1b8] sm:$0xff]
    %v3130 = vld [vmem:[%s3073 + $0x1c0] sm:$0xff]
    %v3131 = vld [vmem:[%s3073 + $0x1c8] sm:$0xff]
    %v3132 = vld [vmem:[%s3073 + $0x1d0] sm:$0xff]
    %v3133 = vld [vmem:[%s3073 + $0x1d8] sm:$0xff]
    %v3134 = vld [vmem:[%s3073 + $0x1e0] sm:$0xff]
    %v3135 = vld [vmem:[%s3073 + $0x1e8] sm:$0xff]
    %v3136 = vld [vmem:[%s3073 + $0x1f0] sm:$0xff]
    %v3137 = vld [vmem:[%s3073 + $0x1f8] sm:$0xff]
    %3138 = vmatprep.subr.mxu0 %v3075
    %3139 = vmatpush1.msra.mxu0 %v3074
    %3140 = vmatprep.subr.mxu0 %v3077
    %3141 = vmatpush1.msra.mxu0 %v3076
    %3142 = vmatprep.subr.mxu0 %v3079
    %3143 = vmatpush1.msra.mxu0 %v3078
    %3144 = vmatprep.subr.mxu0 %v3081
    %3145 = vmatpush1.msra.mxu0 %v3080
    %3146 = vmatprep.subr.mxu0 %v3083
    %3147 = vmatpush1.msra.mxu0 %v3082
    %3148 = vmatprep.subr.mxu0 %v3085
    %3149 = vmatpush1.msra.mxu0 %v3084
    %3150 = vmatprep.subr.mxu0 %v3087
    %3151 = vmatpush1.msra.mxu0 %v3086
    %3152 = vmatprep.subr.mxu0 %v3089
    %3153 = vmatpush1.msra.mxu0 %v3088
    %3154 = vmatprep.subr.mxu0 %v3091
    %3155 = vmatpush1.msra.mxu0 %v3090
    %3156 = vmatprep.subr.mxu0 %v3093
    %3157 = vmatpush1.msra.mxu0 %v3092
    %3158 = vmatprep.subr.mxu0 %v3095
    %3159 = vmatpush1.msra.mxu0 %v3094
    %3160 = vmatprep.subr.mxu0 %v3097
    %3161 = vmatpush1.msra.mxu0 %v3096
    %3162 = vmatprep.subr.mxu0 %v3099
    %3163 = vmatpush1.msra.mxu0 %v3098
    %3164 = vmatprep.subr.mxu0 %v3101
    %3165 = vmatpush1.msra.mxu0 %v3100
    %3166 = vmatprep.subr.mxu0 %v3103
    %3167 = vmatpush1.msra.mxu0 %v3102
    %3168 = vmatprep.subr.mxu0 %v3105
    %3169 = vmatpush1.msra.mxu0 %v3104
    %3170 = vmatprep.subr.mxu0 %v3107
    %3171 = vmatpush1.msra.mxu0 %v3106
    %3172 = vmatprep.subr.mxu0 %v3109
    %3173 = vmatpush1.msra.mxu0 %v3108
    %3174 = vmatprep.subr.mxu0 %v3111
    %3175 = vmatpush1.msra.mxu0 %v3110
    %3176 = vmatprep.subr.mxu0 %v3113
    %3177 = vmatpush1.msra.mxu0 %v3112
    %3178 = vmatprep.subr.mxu0 %v3115
    %3179 = vmatpush1.msra.mxu0 %v3114
    %3180 = vmatprep.subr.mxu0 %v3117
    %3181 = vmatpush1.msra.mxu0 %v3116
    %3182 = vmatprep.subr.mxu0 %v3119
    %3183 = vmatpush1.msra.mxu0 %v3118
    %3184 = vmatprep.subr.mxu0 %v3121
    %3185 = vmatpush1.msra.mxu0 %v3120
    %3186 = vmatprep.subr.mxu0 %v3123
    %3187 = vmatpush1.msra.mxu0 %v3122
    %3188 = vmatprep.subr.mxu0 %v3125
    %3189 = vmatpush1.msra.mxu0 %v3124
    %3190 = vmatprep.subr.mxu0 %v3127
    %3191 = vmatpush1.msra.mxu0 %v3126
    %3192 = vmatprep.subr.mxu0 %v3129
    %3193 = vmatpush1.msra.mxu0 %v3128
    %3194 = vmatprep.subr.mxu0 %v3131
    %3195 = vmatpush1.msra.mxu0 %v3130
    %3196 = vmatprep.subr.mxu0 %v3133
    %3197 = vmatpush1.msra.mxu0 %v3132
    %3198 = vmatprep.subr.mxu0 %v3135
    %3199 = vmatpush1.msra.mxu0 %v3134
    %3200 = vmatprep.subr.mxu0 %v3137
    %3201 = vmatpush1.msra.mxu0 %v3136
    %3202 = vmatprep.mubr.f32.mxu0 %v3072
    %3203 = vmatmul.mubr.f32.gmra.mrb[0].mxu0 %v3071
    %v3204 = vpop.f32.mrb[0].mxu0
    %v3205 = vadd.f32 0.0, %v3204
    %v3206 = vpop.f32.mrb[0].mxu0
    %v3207 = vadd.f32 0.0, %v3206
    %3208 = vdwg.mxu0
    %v3209 = vadd.f32 %v3069, %v3205
    %v3210 = vadd.f32 %v3070, %v3207
    %s3211 = scalar_lea.vmem [#allocation4], 14
    %v3212 = vld [vmem:[%s3211] sm:$0x3]
    %v3214 = vlaneseq
    %v3215 = vshrl.u32 %v3214, 7
    %v3216 = vsub.s32 0, %v3215
    %v3217 = vrot.slane %v3212, %v3216
    %v3218 = vlaneseq
    %v3219 = vshrl.u32 %v3218, 7
    %v3220 = vsub.s32 1, %v3219
    %v3221 = vrot.slane %v3212, %v3220
    %v3224 = vadd.f32 %v3209, %v3217
    %v3225 = vadd.f32 %v3210, %v3221
    %s3226 = scalar_lea.vmem [#allocation2], 11264
    %v3227 = vld [vmem:[%s3226] sm:$0xff]
    %v3228 = vld [vmem:[%s3226 + $0x8] sm:$0xff]
    %v3229 = vld [vmem:[%s3226 + $0x10] sm:$0xff]
    %v3230 = vld [vmem:[%s3226 + $0x18] sm:$0xff]
    %v3231 = vld [vmem:[%s3226 + $0x20] sm:$0xff]
    %v3232 = vld [vmem:[%s3226 + $0x28] sm:$0xff]
    %v3233 = vld [vmem:[%s3226 + $0x30] sm:$0xff]
    %v3234 = vld [vmem:[%s3226 + $0x38] sm:$0xff]
    %v3235 = vld [vmem:[%s3226 + $0x40] sm:$0xff]
    %v3236 = vld [vmem:[%s3226 + $0x48] sm:$0xff]
    %v3237 = vld [vmem:[%s3226 + $0x50] sm:$0xff]
    %v3238 = vld [vmem:[%s3226 + $0x58] sm:$0xff]
    %v3239 = vld [vmem:[%s3226 + $0x60] sm:$0xff]
    %v3240 = vld [vmem:[%s3226 + $0x68] sm:$0xff]
    %v3241 = vld [vmem:[%s3226 + $0x70] sm:$0xff]
    %v3242 = vld [vmem:[%s3226 + $0x78] sm:$0xff]
    %v3243 = vld [vmem:[%s3226 + $0x80] sm:$0xff]
    %v3244 = vld [vmem:[%s3226 + $0x88] sm:$0xff]
    %v3245 = vld [vmem:[%s3226 + $0x90] sm:$0xff]
    %v3246 = vld [vmem:[%s3226 + $0x98] sm:$0xff]
    %v3247 = vld [vmem:[%s3226 + $0xa0] sm:$0xff]
    %v3248 = vld [vmem:[%s3226 + $0xa8] sm:$0xff]
    %v3249 = vld [vmem:[%s3226 + $0xb0] sm:$0xff]
    %v3250 = vld [vmem:[%s3226 + $0xb8] sm:$0xff]
    %v3251 = vld [vmem:[%s3226 + $0xc0] sm:$0xff]
    %v3252 = vld [vmem:[%s3226 + $0xc8] sm:$0xff]
    %v3253 = vld [vmem:[%s3226 + $0xd0] sm:$0xff]
    %v3254 = vld [vmem:[%s3226 + $0xd8] sm:$0xff]
    %v3255 = vld [vmem:[%s3226 + $0xe0] sm:$0xff]
    %v3256 = vld [vmem:[%s3226 + $0xe8] sm:$0xff]
    %v3257 = vld [vmem:[%s3226 + $0xf0] sm:$0xff]
    %v3258 = vld [vmem:[%s3226 + $0xf8] sm:$0xff]
    %v3259 = vld [vmem:[%s3226 + $0x100] sm:$0xff]
    %v3260 = vld [vmem:[%s3226 + $0x108] sm:$0xff]
    %v3261 = vld [vmem:[%s3226 + $0x110] sm:$0xff]
    %v3262 = vld [vmem:[%s3226 + $0x118] sm:$0xff]
    %v3263 = vld [vmem:[%s3226 + $0x120] sm:$0xff]
    %v3264 = vld [vmem:[%s3226 + $0x128] sm:$0xff]
    %v3265 = vld [vmem:[%s3226 + $0x130] sm:$0xff]
    %v3266 = vld [vmem:[%s3226 + $0x138] sm:$0xff]
    %v3267 = vld [vmem:[%s3226 + $0x140] sm:$0xff]
    %v3268 = vld [vmem:[%s3226 + $0x148] sm:$0xff]
    %v3269 = vld [vmem:[%s3226 + $0x150] sm:$0xff]
    %v3270 = vld [vmem:[%s3226 + $0x158] sm:$0xff]
    %v3271 = vld [vmem:[%s3226 + $0x160] sm:$0xff]
    %v3272 = vld [vmem:[%s3226 + $0x168] sm:$0xff]
    %v3273 = vld [vmem:[%s3226 + $0x170] sm:$0xff]
    %v3274 = vld [vmem:[%s3226 + $0x178] sm:$0xff]
    %v3275 = vld [vmem:[%s3226 + $0x180] sm:$0xff]
    %v3276 = vld [vmem:[%s3226 + $0x188] sm:$0xff]
    %v3277 = vld [vmem:[%s3226 + $0x190] sm:$0xff]
    %v3278 = vld [vmem:[%s3226 + $0x198] sm:$0xff]
    %v3279 = vld [vmem:[%s3226 + $0x1a0] sm:$0xff]
    %v3280 = vld [vmem:[%s3226 + $0x1a8] sm:$0xff]
    %v3281 = vld [vmem:[%s3226 + $0x1b0] sm:$0xff]
    %v3282 = vld [vmem:[%s3226 + $0x1b8] sm:$0xff]
    %v3283 = vld [vmem:[%s3226 + $0x1c0] sm:$0xff]
    %v3284 = vld [vmem:[%s3226 + $0x1c8] sm:$0xff]
    %v3285 = vld [vmem:[%s3226 + $0x1d0] sm:$0xff]
    %v3286 = vld [vmem:[%s3226 + $0x1d8] sm:$0xff]
    %v3287 = vld [vmem:[%s3226 + $0x1e0] sm:$0xff]
    %v3288 = vld [vmem:[%s3226 + $0x1e8] sm:$0xff]
    %v3289 = vld [vmem:[%s3226 + $0x1f0] sm:$0xff]
    %v3290 = vld [vmem:[%s3226 + $0x1f8] sm:$0xff]
    %s3291 = scalar_lea.vmem [#allocation4], 16
    %v3292 = vld [vmem:[%s3291] sm:$0x3]
    %v3294 = vlaneseq
    %v3295 = vshrl.u32 %v3294, 7
    %v3296 = vsub.s32 0, %v3295
    %v3297 = vrot.slane %v3292, %v3296
    %v3298 = vlaneseq
    %v3299 = vshrl.u32 %v3298, 7
    %v3300 = vsub.s32 1, %v3299
    %v3301 = vrot.slane %v3292, %v3300
    %3304 = vmatprep.subr.mxu0 %v3228
    %3305 = vmatpush1.msra.mxu0 %v3227
    %3306 = vmatprep.subr.mxu0 %v3230
    %3307 = vmatpush1.msra.mxu0 %v3229
    %3308 = vmatprep.subr.mxu0 %v3232
    %3309 = vmatpush1.msra.mxu0 %v3231
    %3310 = vmatprep.subr.mxu0 %v3234
    %3311 = vmatpush1.msra.mxu0 %v3233
    %3312 = vmatprep.subr.mxu0 %v3236
    %3313 = vmatpush1.msra.mxu0 %v3235
    %3314 = vmatprep.subr.mxu0 %v3238
    %3315 = vmatpush1.msra.mxu0 %v3237
    %3316 = vmatprep.subr.mxu0 %v3240
    %3317 = vmatpush1.msra.mxu0 %v3239
    %3318 = vmatprep.subr.mxu0 %v3242
    %3319 = vmatpush1.msra.mxu0 %v3241
    %3320 = vmatprep.subr.mxu0 %v3244
    %3321 = vmatpush1.msra.mxu0 %v3243
    %3322 = vmatprep.subr.mxu0 %v3246
    %3323 = vmatpush1.msra.mxu0 %v3245
    %3324 = vmatprep.subr.mxu0 %v3248
    %3325 = vmatpush1.msra.mxu0 %v3247
    %3326 = vmatprep.subr.mxu0 %v3250
    %3327 = vmatpush1.msra.mxu0 %v3249
    %3328 = vmatprep.subr.mxu0 %v3252
    %3329 = vmatpush1.msra.mxu0 %v3251
    %3330 = vmatprep.subr.mxu0 %v3254
    %3331 = vmatpush1.msra.mxu0 %v3253
    %3332 = vmatprep.subr.mxu0 %v3256
    %3333 = vmatpush1.msra.mxu0 %v3255
    %3334 = vmatprep.subr.mxu0 %v3258
    %3335 = vmatpush1.msra.mxu0 %v3257
    %3336 = vmatprep.subr.mxu0 %v3260
    %3337 = vmatpush1.msra.mxu0 %v3259
    %3338 = vmatprep.subr.mxu0 %v3262
    %3339 = vmatpush1.msra.mxu0 %v3261
    %3340 = vmatprep.subr.mxu0 %v3264
    %3341 = vmatpush1.msra.mxu0 %v3263
    %3342 = vmatprep.subr.mxu0 %v3266
    %3343 = vmatpush1.msra.mxu0 %v3265
    %3344 = vmatprep.subr.mxu0 %v3268
    %3345 = vmatpush1.msra.mxu0 %v3267
    %3346 = vmatprep.subr.mxu0 %v3270
    %3347 = vmatpush1.msra.mxu0 %v3269
    %3348 = vmatprep.subr.mxu0 %v3272
    %3349 = vmatpush1.msra.mxu0 %v3271
    %3350 = vmatprep.subr.mxu0 %v3274
    %3351 = vmatpush1.msra.mxu0 %v3273
    %3352 = vmatprep.subr.mxu0 %v3276
    %3353 = vmatpush1.msra.mxu0 %v3275
    %3354 = vmatprep.subr.mxu0 %v3278
    %3355 = vmatpush1.msra.mxu0 %v3277
    %3356 = vmatprep.subr.mxu0 %v3280
    %3357 = vmatpush1.msra.mxu0 %v3279
    %3358 = vmatprep.subr.mxu0 %v3282
    %3359 = vmatpush1.msra.mxu0 %v3281
    %3360 = vmatprep.subr.mxu0 %v3284
    %3361 = vmatpush1.msra.mxu0 %v3283
    %3362 = vmatprep.subr.mxu0 %v3286
    %3363 = vmatpush1.msra.mxu0 %v3285
    %3364 = vmatprep.subr.mxu0 %v3288
    %3365 = vmatpush1.msra.mxu0 %v3287
    %3366 = vmatprep.subr.mxu0 %v3290
    %3367 = vmatpush1.msra.mxu0 %v3289
    %3368 = vmatprep.mubr.f32.mxu0 %v3225
    %3369 = vmatmul.mubr.f32.gmra.mrb[0].mxu0 %v3224
    %v3370 = vpop.f32.mrb[0].mxu0
    %v3371 = vadd.f32 %v3297, %v3370
    %v3372 = vpop.f32.mrb[0].mxu0
    %v3373 = vadd.f32 %v3301, %v3372
    %3374 = vdwg.mxu0
    %3375 = vst [vmem:[%s3] sm:$0xff] %v3371
    %3376 = vst [vmem:[%s3 + $0x8] sm:$0xff] %v3373
    // Predicated region
    $region22: #{apply.1} parent=1 // pred_check
      _
    $region23: #{apply.1} parent=1 // pred_check_branch
      %3378 = sbr.rel (0) target = $region25
    $region24: #{apply.1} parent=1 // pred_region
      _
    $region25: #{apply.1} parent=1 // pred_fallthru
      _
    // Predicated region
    $region26: #{apply.1} parent=1 // pred_check
      _
    $region27: #{apply.1} parent=1 // pred_check_branch
      %3380 = sbr.rel (0) target = $region29
    $region28: #{apply.1} parent=1 // pred_region
      _
    $region29: #{apply.1} parent=1 // pred_fallthru
      _
    %3381 = vsyncpa [#allocation3], 1
    %3382 = vsyncpa [#allocation5], 1

</llo_original>
